<compile_context>
chip_gen: v7x
topology: tpu7x:2x2x1
jax: 0.10.0
libtpu: 0.0.40
codegen_flags: <defaults>
</compile_context>

<pallas_src>
import math

import jax
import jax.numpy as jnp
from jax.experimental import pallas as pl
from jax.experimental.pallas import tpu as pltpu


# VGG-style feature config: conv3x3(+ReLU) widths, 'M' = maxpool2x2.  With an
# 8x8 input this ends at 1x1x512 => 512 flattened features, matching the
# classifier Linear(512, 10, bias=False) of the PyTorch module.
CFG = [128, "M", 256, "M", 512, "M"]
IN_CHANNELS = 3
NUM_CLASSES = 10
SPATIAL = 8
ACT_DTYPE = jnp.bfloat16          # MXU operand dtype; accumulation stays f32

# Static per-stage geometry (flat row-major layouts used inside the kernel).
H1, W1 = 8, 8                      # stage-1 conv output (im2col GEMM, K=27)
H2, W2 = 4, 4                      # stage-2 conv spatial size (after pool1)
H3, W3 = 2, 2                      # stage-3 conv spatial size (after pool2)
W2P = W2 + 2                       # padded row stride of the stage-2 buffer
W3P = W3 + 2                       # padded row stride of the stage-3 buffer
# The shifted-slab conv reads flat slices that (for the discarded garbage
# columns of the last row) run 2 rows past the (H+2)x(W+2) halo region, so the
# padded VMEM buffers get 2 extra zero rows.
PAD2_ROWS = (H2 + 2) * W2P + 2     # 38
PAD3_ROWS = (H3 + 2) * W3P + 2     # 18
C1, C2, C3 = 128, 256, 512


def _resident_spec(shape, index_map):
    """BlockSpec for a grid-invariant input (constant index_map).

    A second pipeline buffer for these refs is pure VMEM waste, so request a
    single buffer; fall back gracefully if this JAX build's BlockSpec does not
    accept pipeline_mode.
    """
    try:
        return pl.BlockSpec(shape, index_map, pipeline_mode=pl.Buffered(1))
    except (TypeError, ValueError):
        return pl.BlockSpec(shape, index_map)


def _pool2x2_pixels(y, h, w, row_stride):
    """2x2 / stride-2 max pool over a flat conv output (all in f32 registers).

    `y` has shape (h * row_stride, C), row-major with row stride
    `row_stride` >= w; only the first `w` columns of each row are valid.
    Yields ((ho, wo), (1, C) value) pooled pixels.
    """
    for ho in range(h // 2):
        r0 = y[(2 * ho) * row_stride:(2 * ho) * row_stride + w, :]
        r1 = y[(2 * ho + 1) * row_stride:(2 * ho + 1) * row_stride + w, :]
        rmax = jnp.maximum(r0, r1)                                   # (w, C)
        for wo in range(w // 2):
            yield (ho, wo), jnp.maximum(rmax[2 * wo:2 * wo + 1, :],
                                        rmax[2 * wo + 1:2 * wo + 2, :])


# ---------------------------------------------------------------------------
# The fused kernel: one grid step == the full VGG forward of one image.
# ---------------------------------------------------------------------------
def _vgg_fused_kernel(x1_ref, w1_ref, w2_ref, w3_ref, fc_ref, o_ref,
                      pad2_ref, pad3_ref):
    # ---- Stage 1: conv1 (3 -> 128) as a single K=27 GEMM + fused ReLU. ----
    # x1_ref[0]: (64, 27) bf16 im2col of this image; all 64 output pixels are
    # folded into the matmul M dimension (one MXU push, not 9 K=3 pushes).
    y1 = jnp.maximum(
        jnp.dot(x1_ref[0], w1_ref[...], preferred_element_type=jnp.float32),
        0.0)                                                     # (64, 128) f32

    # ---- pool1 2x2 -> interior of the zero-padded stage-2 input buffer. ---
    pad2_ref[...] = jnp.zeros_like(pad2_ref)                     # halo = 0
    for (ho, wo), px in _pool2x2_pixels(y1, H1, W1, W1):
        pad2_ref[pl.ds((ho + 1) * W2P + (wo + 1), 1), :] = px

    # ---- Stage 2: conv2 (128 -> 256): 9 shifted whole-image GEMMs. --------
    # For tap (kh, kw), the contiguous flat slice of the padded buffer starting
    # at kh*W2P+kw gives exactly the input pixel of every output pixel (the 2
    # extra columns per row are garbage and discarded by the pool below).
    acc2 = jnp.zeros((H2 * W2P, C2), jnp.float32)
    for kh in range(3):
        for kw in range(3):
            off = kh * W2P + kw
            lhs = pad2_ref[off:off + H2 * W2P, :].astype(ACT_DTYPE)
            acc2 = acc2 + jnp.dot(lhs, w2_ref[kh * 3 + kw],
                                  preferred_element_type=jnp.float32)
    y2 = jnp.maximum(acc2, 0.0)                                  # (24, 256) f32

    # ---- pool2 -> interior of the zero-padded stage-3 input buffer. -------
    pad3_ref[...] = jnp.zeros_like(pad3_ref)
    for (ho, wo), px in _pool2x2_pixels(y2, H2, W2, W2P):
        pad3_ref[pl.ds((ho + 1) * W3P + (wo + 1), 1), :] = px

    # ---- Stage 3: conv3 (256 -> 512). --------------------------------------
    acc3 = jnp.zeros((H3 * W3P, C3), jnp.float32)
    for kh in range(3):
        for kw in range(3):
            off = kh * W3P + kw
            lhs = pad3_ref[off:off + H3 * W3P, :].astype(ACT_DTYPE)
            acc3 = acc3 + jnp.dot(lhs, w3_ref[kh * 3 + kw],
                                  preferred_element_type=jnp.float32)
    y3 = jnp.maximum(acc3, 0.0)                                  # (8, 512) f32

    # ---- pool3 (-> 1x1x512) and fused classifier epilogue. ----------------
    # The 1x1 spatial output makes this 512-vector exactly torch's
    # x.view(x.size(0), -1) flattening (channel order).
    (_, feat), = tuple(_pool2x2_pixels(y3, H3, W3, W3P))         # (1, 512) f32
    logits = jnp.dot(feat.astype(ACT_DTYPE), fc_ref[...],
                     preferred_element_type=jnp.float32)         # (1, 10) f32
    o_ref[0] = logits


# ---------------------------------------------------------------------------
# Wrapper
# ---------------------------------------------------------------------------
def _im2col_3x3_pad1(x_nchw):
    """NCHW (N, 3, 8, 8) -> (N, 64, 27) im2col, K ordered as (cin, kh, kw).

    This tiny prologue (~7 KB) absorbs the first conv's halo padding AND the
    NCHW->feature-major transpose, so no standalone pad/transpose kernels
    remain in the wrapper.
    """
    n = x_nchw.shape[0]
    xp = jnp.pad(x_nchw, ((0, 0), (0, 0), (1, 1), (1, 1)))       # (N, 3, 10, 10)
    taps = [xp[:, :, kh:kh + H1, kw:kw + W1]
            for kh in range(3) for kw in range(3)]
    cols = jnp.stack(taps, axis=2)                               # (N, 3, 9, 8, 8)
    cols = cols.transpose(0, 3, 4, 1, 2)                         # (N, 8, 8, 3, 9)
    return cols.reshape(n, H1 * W1, 3 * 9)


def vgg_forward(x_nchw, params):
    """x: (N, 3, 8, 8) f32 NCHW -> logits (N, 10) f32."""
    n = x_nchw.shape[0]
    x1 = _im2col_3x3_pad1(x_nchw).astype(ACT_DTYPE)              # (N, 64, 27)

    flops = n * (2 * H1 * W1 * 27 * C1
                 + 9 * 2 * H2 * W2P * C1 * C2
                 + 9 * 2 * H3 * W3P * C2 * C3
                 + 2 * C3 * NUM_CLASSES)
    bytes_accessed = (x1.size * 2
                      + (27 * C1 + 9 * C1 * C2 + 9 * C2 * C3
                         + C3 * NUM_CLASSES) * 2
                      + n * NUM_CLASSES * 4)

    out = pl.pallas_call(
        _vgg_fused_kernel,
        out_shape=jax.ShapeDtypeStruct((n, 1, NUM_CLASSES), jnp.float32),
        grid=(n,),
        in_specs=[
            # Per-image im2col block (changes with the batch grid axis).
            pl.BlockSpec((1, H1 * W1, 27), lambda b: (b, 0, 0)),
            # Grid-invariant weights: VMEM-resident, single pipeline buffer.
            _resident_spec((27, C1), lambda b: (0, 0)),           # conv1
            _resident_spec((9, C1, C2), lambda b: (0, 0, 0)),     # conv2 (tap-major)
            _resident_spec((9, C2, C3), lambda b: (0, 0, 0)),     # conv3 (tap-major)
            _resident_spec((C3, NUM_CLASSES), lambda b: (0, 0)),  # classifier
        ],
        out_specs=pl.BlockSpec((1, 1, NUM_CLASSES), lambda b: (b, 0, 0)),
        scratch_shapes=[
            pltpu.VMEM((PAD2_ROWS, C1), jnp.float32),  # zero-padded conv2 input
            pltpu.VMEM((PAD3_ROWS, C2), jnp.float32),  # zero-padded conv3 input
        ],
        compiler_params=pltpu.CompilerParams(
            dimension_semantics=("parallel",)),        # batch -> both TCs on v7x
        cost_estimate=pl.CostEstimate(flops=flops, transcendentals=0,
                                      bytes_accessed=bytes_accessed),
    )(x1, params["w1"], params["w2"], params["w3"], params["fc"])
    return out.reshape(n, NUM_CLASSES)


# ---------------------------------------------------------------------------
# Parameter construction (mirrors the torch __init__ initializers)
# ---------------------------------------------------------------------------
def _conv_weight(key, c_in, c_out):
    # PyTorch: Conv2d weight (Cout, Cin, 3, 3) ~ N(0, sqrt(2 / (3*3*Cout)))
    return jax.random.normal(key, (c_out, c_in, 3, 3), jnp.float32) * math.sqrt(
        2.0 / (3 * 3 * c_out))


def init_params(key):
    k1, k2, k3, k4 = jax.random.split(key, 4)
    w1 = _conv_weight(k1, IN_CHANNELS, C1)
    w2 = _conv_weight(k2, C1, C2)
    w3 = _conv_weight(k3, C2, C3)
    # conv1: im2col GEMM layout, K ordered (cin, kh, kw) -> (27, C1)
    w1_g = jnp.transpose(w1, (1, 2, 3, 0)).reshape(9 * IN_CHANNELS, C1)
    # conv2/conv3: tap-major GEMM layout (kh*3+kw, Cin, Cout)
    w2_g = jnp.transpose(w2, (2, 3, 1, 0)).reshape(9, C1, C2)
    w3_g = jnp.transpose(w3, (2, 3, 1, 0)).reshape(9, C2, C3)
    # Linear(512, 10, bias=False): torch default ~ U(-1/sqrt(512), 1/sqrt(512)),
    # stored transposed so the kernel does x @ W^T as a plain (512, 10) GEMM.
    bound = 1.0 / math.sqrt(C3)
    fc = jax.random.uniform(k4, (C3, NUM_CLASSES), jnp.float32,
                            minval=-bound, maxval=bound)
    return {"w1": w1_g.astype(ACT_DTYPE), "w2": w2_g.astype(ACT_DTYPE),
            "w3": w3_g.astype(ACT_DTYPE), "fc": fc.astype(ACT_DTYPE)}


if __name__ == "__main__":
    key = jax.random.PRNGKey(0)
    key, pkey, xkey = jax.random.split(key, 3)
    params = init_params(pkey)
    # Input: NCHW like the PyTorch module; 8x8 spatial so the feature map
    # flattens to exactly 512 for Linear(512, 10, bias=False).
    x = jax.random.normal(xkey, (2, IN_CHANNELS, SPATIAL, SPATIAL), jnp.float32)

    fwd = jax.jit(vgg_forward)
    logits = jax.block_until_ready(fwd(x, params))
    assert logits.shape == (2, NUM_CLASSES), logits.shape
    assert bool(jnp.all(jnp.isfinite(logits)))
    print("KERNEL_OK")
</pallas_src>

<mosaic_0001>
module attributes {stable_mosaic.version = 11 : i64} {
  func.func @_vgg_fused_kernel(%arg0: i32, %arg1: memref<1x64x27xbf16, #tpu.memory_space<vmem>>, %arg2: memref<27x128xbf16, #tpu.memory_space<vmem>>, %arg3: memref<9x128x256xbf16, #tpu.memory_space<vmem>>, %arg4: memref<9x256x512xbf16, #tpu.memory_space<vmem>>, %arg5: memref<512x10xbf16, #tpu.memory_space<vmem>>, %arg6: memref<1x1x10xf32, #tpu.memory_space<vmem>>, %arg7: memref<38x128xf32, #tpu.memory_space<vmem>>, %arg8: memref<18x256xf32, #tpu.memory_space<vmem>>) attributes {dimension_semantics = [#tpu.dimension_semantics<parallel>], iteration_bounds = array<i64: 2>, scalar_prefetch = 0 : i64, scratch_operands = 2 : i64, tpu.core_type = #tpu.core_type<tc>, window_params = [{transform_indices = @transform_0, window_bounds = array<i64: 1, 64, 27>}, {pipeline_mode = #tpu.pipeline_mode<synchronous>, transform_indices = @transform_1, window_bounds = array<i64: 27, 128>}, {pipeline_mode = #tpu.pipeline_mode<synchronous>, transform_indices = @transform_2, window_bounds = array<i64: 9, 128, 256>}, {pipeline_mode = #tpu.pipeline_mode<synchronous>, transform_indices = @transform_3, window_bounds = array<i64: 9, 256, 512>}, {pipeline_mode = #tpu.pipeline_mode<synchronous>, transform_indices = @transform_4, window_bounds = array<i64: 512, 10>}, {transform_indices = @transform_5, window_bounds = array<i64: 1, 1, 10>}]} {
    %c0 = arith.constant 0 : index
    %c0_0 = arith.constant 0 : index
    %c0_1 = arith.constant 0 : index
    %0 = vector.load %arg1[%c0, %c0_0, %c0_1] : memref<1x64x27xbf16, #tpu.memory_space<vmem>>, vector<1x64x27xbf16>
    %1 = vector.shape_cast %0 : vector<1x64x27xbf16> to vector<64x27xbf16>
    %c0_2 = arith.constant 0 : index
    %c0_3 = arith.constant 0 : index
    %2 = vector.load %arg2[%c0_2, %c0_3] : memref<27x128xbf16, #tpu.memory_space<vmem>>, vector<27x128xbf16>
    %cst = arith.constant dense<0.000000e+00> : vector<64x128xf32>
    %3 = tpu.matmul %1, %2, %cst {dimension_numbers = #tpu.dot_dimension_numbers<[1], [0], [0], [1], [0, 0, 1, 1], [], []>} : vector<64x27xbf16>, vector<27x128xbf16>, vector<64x128xf32> -> vector<64x128xf32>
    %cst_4 = arith.constant 0.000000e+00 : f32
    %4 = vector.broadcast %cst_4 : f32 to vector<64x128xf32>
    %5 = arith.maximumf %3, %4 : vector<64x128xf32>
    %cst_5 = arith.constant 0.000000e+00 : f32
    %6 = vector.broadcast %cst_5 : f32 to vector<38x128xf32>
    %c0_6 = arith.constant 0 : index
    %c0_7 = arith.constant 0 : index
    %7 = vector.load %arg7[%c0_6, %c0_7] : memref<38x128xf32, #tpu.memory_space<vmem>>, vector<38x128xf32>
    tpu.vector_store %arg7[%c0_6, %c0_7], %6 {strides = array<i32>} : memref<38x128xf32, #tpu.memory_space<vmem>>, vector<38x128xf32>,
    %8 = vector.extract_strided_slice %5 {offsets = [0, 0], sizes = [8, 128], strides = [1, 1]} : vector<64x128xf32> to vector<8x128xf32>
    %9 = vector.extract_strided_slice %5 {offsets = [8, 0], sizes = [8, 128], strides = [1, 1]} : vector<64x128xf32> to vector<8x128xf32>
    %10 = arith.maximumf %8, %9 : vector<8x128xf32>
    %11 = vector.extract_strided_slice %10 {offsets = [0, 0], sizes = [1, 128], strides = [1, 1]} : vector<8x128xf32> to vector<1x128xf32>
    %12 = vector.extract_strided_slice %10 {offsets = [1, 0], sizes = [1, 128], strides = [1, 1]} : vector<8x128xf32> to vector<1x128xf32>
    %13 = arith.maximumf %11, %12 : vector<1x128xf32>
    %c7 = arith.constant 7 : index
    %c0_8 = arith.constant 0 : index
    %14 = vector.load %arg7[%c7, %c0_8] : memref<38x128xf32, #tpu.memory_space<vmem>>, vector<1x128xf32>
    tpu.vector_store %arg7[%c7, %c0_8], %13 {strides = array<i32>} : memref<38x128xf32, #tpu.memory_space<vmem>>, vector<1x128xf32>,
    %15 = vector.extract_strided_slice %10 {offsets = [2, 0], sizes = [1, 128], strides = [1, 1]} : vector<8x128xf32> to vector<1x128xf32>
    %16 = vector.extract_strided_slice %10 {offsets = [3, 0], sizes = [1, 128], strides = [1, 1]} : vector<8x128xf32> to vector<1x128xf32>
    %17 = arith.maximumf %15, %16 : vector<1x128xf32>
    %c8 = arith.constant 8 : index
    %c0_9 = arith.constant 0 : index
    %18 = vector.load %arg7[%c8, %c0_9] : memref<38x128xf32, #tpu.memory_space<vmem>>, vector<1x128xf32>
    tpu.vector_store %arg7[%c8, %c0_9], %17 {strides = array<i32>} : memref<38x128xf32, #tpu.memory_space<vmem>>, vector<1x128xf32>,
    %19 = vector.extract_strided_slice %10 {offsets = [4, 0], sizes = [1, 128], strides = [1, 1]} : vector<8x128xf32> to vector<1x128xf32>
    %20 = vector.extract_strided_slice %10 {offsets = [5, 0], sizes = [1, 128], strides = [1, 1]} : vector<8x128xf32> to vector<1x128xf32>
    %21 = arith.maximumf %19, %20 : vector<1x128xf32>
    %c9 = arith.constant 9 : index
    %c0_10 = arith.constant 0 : index
    %22 = vector.load %arg7[%c9, %c0_10] : memref<38x128xf32, #tpu.memory_space<vmem>>, vector<1x128xf32>
    tpu.vector_store %arg7[%c9, %c0_10], %21 {strides = array<i32>} : memref<38x128xf32, #tpu.memory_space<vmem>>, vector<1x128xf32>,
    %23 = vector.extract_strided_slice %10 {offsets = [6, 0], sizes = [1, 128], strides = [1, 1]} : vector<8x128xf32> to vector<1x128xf32>
    %24 = vector.extract_strided_slice %10 {offsets = [7, 0], sizes = [1, 128], strides = [1, 1]} : vector<8x128xf32> to vector<1x128xf32>
    %25 = arith.maximumf %23, %24 : vector<1x128xf32>
    %c10 = arith.constant 10 : index
    %c0_11 = arith.constant 0 : index
    %26 = vector.load %arg7[%c10, %c0_11] : memref<38x128xf32, #tpu.memory_space<vmem>>, vector<1x128xf32>
    tpu.vector_store %arg7[%c10, %c0_11], %25 {strides = array<i32>} : memref<38x128xf32, #tpu.memory_space<vmem>>, vector<1x128xf32>,
    %27 = vector.extract_strided_slice %5 {offsets = [16, 0], sizes = [8, 128], strides = [1, 1]} : vector<64x128xf32> to vector<8x128xf32>
    %28 = vector.extract_strided_slice %5 {offsets = [24, 0], sizes = [8, 128], strides = [1, 1]} : vector<64x128xf32> to vector<8x128xf32>
    %29 = arith.maximumf %27, %28 : vector<8x128xf32>
    %30 = vector.extract_strided_slice %29 {offsets = [0, 0], sizes = [1, 128], strides = [1, 1]} : vector<8x128xf32> to vector<1x128xf32>
    %31 = vector.extract_strided_slice %29 {offsets = [1, 0], sizes = [1, 128], strides = [1, 1]} : vector<8x128xf32> to vector<1x128xf32>
    %32 = arith.maximumf %30, %31 : vector<1x128xf32>
    %c13 = arith.constant 13 : index
    %c0_12 = arith.constant 0 : index
    %33 = vector.load %arg7[%c13, %c0_12] : memref<38x128xf32, #tpu.memory_space<vmem>>, vector<1x128xf32>
    tpu.vector_store %arg7[%c13, %c0_12], %32 {strides = array<i32>} : memref<38x128xf32, #tpu.memory_space<vmem>>, vector<1x128xf32>,
    %34 = vector.extract_strided_slice %29 {offsets = [2, 0], sizes = [1, 128], strides = [1, 1]} : vector<8x128xf32> to vector<1x128xf32>
    %35 = vector.extract_strided_slice %29 {offsets = [3, 0], sizes = [1, 128], strides = [1, 1]} : vector<8x128xf32> to vector<1x128xf32>
    %36 = arith.maximumf %34, %35 : vector<1x128xf32>
    %c14 = arith.constant 14 : index
    %c0_13 = arith.constant 0 : index
    %37 = vector.load %arg7[%c14, %c0_13] : memref<38x128xf32, #tpu.memory_space<vmem>>, vector<1x128xf32>
    tpu.vector_store %arg7[%c14, %c0_13], %36 {strides = array<i32>} : memref<38x128xf32, #tpu.memory_space<vmem>>, vector<1x128xf32>,
    %38 = vector.extract_strided_slice %29 {offsets = [4, 0], sizes = [1, 128], strides = [1, 1]} : vector<8x128xf32> to vector<1x128xf32>
    %39 = vector.extract_strided_slice %29 {offsets = [5, 0], sizes = [1, 128], strides = [1, 1]} : vector<8x128xf32> to vector<1x128xf32>
    %40 = arith.maximumf %38, %39 : vector<1x128xf32>
    %c15 = arith.constant 15 : index
    %c0_14 = arith.constant 0 : index
    %41 = vector.load %arg7[%c15, %c0_14] : memref<38x128xf32, #tpu.memory_space<vmem>>, vector<1x128xf32>
    tpu.vector_store %arg7[%c15, %c0_14], %40 {strides = array<i32>} : memref<38x128xf32, #tpu.memory_space<vmem>>, vector<1x128xf32>,
    %42 = vector.extract_strided_slice %29 {offsets = [6, 0], sizes = [1, 128], strides = [1, 1]} : vector<8x128xf32> to vector<1x128xf32>
    %43 = vector.extract_strided_slice %29 {offsets = [7, 0], sizes = [1, 128], strides = [1, 1]} : vector<8x128xf32> to vector<1x128xf32>
    %44 = arith.maximumf %42, %43 : vector<1x128xf32>
    %c16 = arith.constant 16 : index
    %c0_15 = arith.constant 0 : index
    %45 = vector.load %arg7[%c16, %c0_15] : memref<38x128xf32, #tpu.memory_space<vmem>>, vector<1x128xf32>
    tpu.vector_store %arg7[%c16, %c0_15], %44 {strides = array<i32>} : memref<38x128xf32, #tpu.memory_space<vmem>>, vector<1x128xf32>,
    %46 = vector.extract_strided_slice %5 {offsets = [32, 0], sizes = [8, 128], strides = [1, 1]} : vector<64x128xf32> to vector<8x128xf32>
    %47 = vector.extract_strided_slice %5 {offsets = [40, 0], sizes = [8, 128], strides = [1, 1]} : vector<64x128xf32> to vector<8x128xf32>
    %48 = arith.maximumf %46, %47 : vector<8x128xf32>
    %49 = vector.extract_strided_slice %48 {offsets = [0, 0], sizes = [1, 128], strides = [1, 1]} : vector<8x128xf32> to vector<1x128xf32>
    %50 = vector.extract_strided_slice %48 {offsets = [1, 0], sizes = [1, 128], strides = [1, 1]} : vector<8x128xf32> to vector<1x128xf32>
    %51 = arith.maximumf %49, %50 : vector<1x128xf32>
    %c19 = arith.constant 19 : index
    %c0_16 = arith.constant 0 : index
    %52 = vector.load %arg7[%c19, %c0_16] : memref<38x128xf32, #tpu.memory_space<vmem>>, vector<1x128xf32>
    tpu.vector_store %arg7[%c19, %c0_16], %51 {strides = array<i32>} : memref<38x128xf32, #tpu.memory_space<vmem>>, vector<1x128xf32>,
    %53 = vector.extract_strided_slice %48 {offsets = [2, 0], sizes = [1, 128], strides = [1, 1]} : vector<8x128xf32> to vector<1x128xf32>
    %54 = vector.extract_strided_slice %48 {offsets = [3, 0], sizes = [1, 128], strides = [1, 1]} : vector<8x128xf32> to vector<1x128xf32>
    %55 = arith.maximumf %53, %54 : vector<1x128xf32>
    %c20 = arith.constant 20 : index
    %c0_17 = arith.constant 0 : index
    %56 = vector.load %arg7[%c20, %c0_17] : memref<38x128xf32, #tpu.memory_space<vmem>>, vector<1x128xf32>
    tpu.vector_store %arg7[%c20, %c0_17], %55 {strides = array<i32>} : memref<38x128xf32, #tpu.memory_space<vmem>>, vector<1x128xf32>,
    %57 = vector.extract_strided_slice %48 {offsets = [4, 0], sizes = [1, 128], strides = [1, 1]} : vector<8x128xf32> to vector<1x128xf32>
    %58 = vector.extract_strided_slice %48 {offsets = [5, 0], sizes = [1, 128], strides = [1, 1]} : vector<8x128xf32> to vector<1x128xf32>
    %59 = arith.maximumf %57, %58 : vector<1x128xf32>
    %c21 = arith.constant 21 : index
    %c0_18 = arith.constant 0 : index
    %60 = vector.load %arg7[%c21, %c0_18] : memref<38x128xf32, #tpu.memory_space<vmem>>, vector<1x128xf32>
    tpu.vector_store %arg7[%c21, %c0_18], %59 {strides = array<i32>} : memref<38x128xf32, #tpu.memory_space<vmem>>, vector<1x128xf32>,
    %61 = vector.extract_strided_slice %48 {offsets = [6, 0], sizes = [1, 128], strides = [1, 1]} : vector<8x128xf32> to vector<1x128xf32>
    %62 = vector.extract_strided_slice %48 {offsets = [7, 0], sizes = [1, 128], strides = [1, 1]} : vector<8x128xf32> to vector<1x128xf32>
    %63 = arith.maximumf %61, %62 : vector<1x128xf32>
    %c22 = arith.constant 22 : index
    %c0_19 = arith.constant 0 : index
    %64 = vector.load %arg7[%c22, %c0_19] : memref<38x128xf32, #tpu.memory_space<vmem>>, vector<1x128xf32>
    tpu.vector_store %arg7[%c22, %c0_19], %63 {strides = array<i32>} : memref<38x128xf32, #tpu.memory_space<vmem>>, vector<1x128xf32>,
    %65 = vector.extract_strided_slice %5 {offsets = [48, 0], sizes = [8, 128], strides = [1, 1]} : vector<64x128xf32> to vector<8x128xf32>
    %66 = vector.extract_strided_slice %5 {offsets = [56, 0], sizes = [8, 128], strides = [1, 1]} : vector<64x128xf32> to vector<8x128xf32>
    %67 = arith.maximumf %65, %66 : vector<8x128xf32>
    %68 = vector.extract_strided_slice %67 {offsets = [0, 0], sizes = [1, 128], strides = [1, 1]} : vector<8x128xf32> to vector<1x128xf32>
    %69 = vector.extract_strided_slice %67 {offsets = [1, 0], sizes = [1, 128], strides = [1, 1]} : vector<8x128xf32> to vector<1x128xf32>
    %70 = arith.maximumf %68, %69 : vector<1x128xf32>
    %c25 = arith.constant 25 : index
    %c0_20 = arith.constant 0 : index
    %71 = vector.load %arg7[%c25, %c0_20] : memref<38x128xf32, #tpu.memory_space<vmem>>, vector<1x128xf32>
    tpu.vector_store %arg7[%c25, %c0_20], %70 {strides = array<i32>} : memref<38x128xf32, #tpu.memory_space<vmem>>, vector<1x128xf32>,
    %72 = vector.extract_strided_slice %67 {offsets = [2, 0], sizes = [1, 128], strides = [1, 1]} : vector<8x128xf32> to vector<1x128xf32>
    %73 = vector.extract_strided_slice %67 {offsets = [3, 0], sizes = [1, 128], strides = [1, 1]} : vector<8x128xf32> to vector<1x128xf32>
    %74 = arith.maximumf %72, %73 : vector<1x128xf32>
    %c26 = arith.constant 26 : index
    %c0_21 = arith.constant 0 : index
    %75 = vector.load %arg7[%c26, %c0_21] : memref<38x128xf32, #tpu.memory_space<vmem>>, vector<1x128xf32>
    tpu.vector_store %arg7[%c26, %c0_21], %74 {strides = array<i32>} : memref<38x128xf32, #tpu.memory_space<vmem>>, vector<1x128xf32>,
    %76 = vector.extract_strided_slice %67 {offsets = [4, 0], sizes = [1, 128], strides = [1, 1]} : vector<8x128xf32> to vector<1x128xf32>
    %77 = vector.extract_strided_slice %67 {offsets = [5, 0], sizes = [1, 128], strides = [1, 1]} : vector<8x128xf32> to vector<1x128xf32>
    %78 = arith.maximumf %76, %77 : vector<1x128xf32>
    %c27 = arith.constant 27 : index
    %c0_22 = arith.constant 0 : index
    %79 = vector.load %arg7[%c27, %c0_22] : memref<38x128xf32, #tpu.memory_space<vmem>>, vector<1x128xf32>
    tpu.vector_store %arg7[%c27, %c0_22], %78 {strides = array<i32>} : memref<38x128xf32, #tpu.memory_space<vmem>>, vector<1x128xf32>,
    %80 = vector.extract_strided_slice %67 {offsets = [6, 0], sizes = [1, 128], strides = [1, 1]} : vector<8x128xf32> to vector<1x128xf32>
    %81 = vector.extract_strided_slice %67 {offsets = [7, 0], sizes = [1, 128], strides = [1, 1]} : vector<8x128xf32> to vector<1x128xf32>
    %82 = arith.maximumf %80, %81 : vector<1x128xf32>
    %c28 = arith.constant 28 : index
    %c0_23 = arith.constant 0 : index
    %83 = vector.load %arg7[%c28, %c0_23] : memref<38x128xf32, #tpu.memory_space<vmem>>, vector<1x128xf32>
    tpu.vector_store %arg7[%c28, %c0_23], %82 {strides = array<i32>} : memref<38x128xf32, #tpu.memory_space<vmem>>, vector<1x128xf32>,
    %cst_24 = arith.constant 0.000000e+00 : f32
    %84 = vector.broadcast %cst_24 : f32 to vector<24x256xf32>
    %c0_25 = arith.constant 0 : index
    %c0_26 = arith.constant 0 : index
    %85 = vector.load %arg7[%c0_25, %c0_26] : memref<38x128xf32, #tpu.memory_space<vmem>>, vector<24x128xf32>
    %86 = arith.truncf %85 : vector<24x128xf32> to vector<24x128xbf16>
    %c0_27 = arith.constant 0 : index
    %c0_28 = arith.constant 0 : index
    %c0_29 = arith.constant 0 : index
    %87 = vector.load %arg3[%c0_27, %c0_28, %c0_29] : memref<9x128x256xbf16, #tpu.memory_space<vmem>>, vector<1x128x256xbf16>
    %88 = vector.shape_cast %87 : vector<1x128x256xbf16> to vector<128x256xbf16>
    %cst_30 = arith.constant dense<0.000000e+00> : vector<24x256xf32>
    %89 = tpu.matmul %86, %88, %cst_30 {dimension_numbers = #tpu.dot_dimension_numbers<[1], [0], [0], [1], [0, 0, 1, 1], [], []>} : vector<24x128xbf16>, vector<128x256xbf16>, vector<24x256xf32> -> vector<24x256xf32>
    %90 = arith.addf %84, %89 : vector<24x256xf32>
    %c1 = arith.constant 1 : index
    %c0_31 = arith.constant 0 : index
    %91 = vector.load %arg7[%c1, %c0_31] : memref<38x128xf32, #tpu.memory_space<vmem>>, vector<24x128xf32>
    %92 = arith.truncf %91 : vector<24x128xf32> to vector<24x128xbf16>
    %c1_32 = arith.constant 1 : index
    %c0_33 = arith.constant 0 : index
    %c0_34 = arith.constant 0 : index
    %93 = vector.load %arg3[%c1_32, %c0_33, %c0_34] : memref<9x128x256xbf16, #tpu.memory_space<vmem>>, vector<1x128x256xbf16>
    %94 = vector.shape_cast %93 : vector<1x128x256xbf16> to vector<128x256xbf16>
    %cst_35 = arith.constant dense<0.000000e+00> : vector<24x256xf32>
    %95 = tpu.matmul %92, %94, %cst_35 {dimension_numbers = #tpu.dot_dimension_numbers<[1], [0], [0], [1], [0, 0, 1, 1], [], []>} : vector<24x128xbf16>, vector<128x256xbf16>, vector<24x256xf32> -> vector<24x256xf32>
    %96 = arith.addf %90, %95 : vector<24x256xf32>
    %c2 = arith.constant 2 : index
    %c0_36 = arith.constant 0 : index
    %97 = vector.load %arg7[%c2, %c0_36] : memref<38x128xf32, #tpu.memory_space<vmem>>, vector<24x128xf32>
    %98 = arith.truncf %97 : vector<24x128xf32> to vector<24x128xbf16>
    %c2_37 = arith.constant 2 : index
    %c0_38 = arith.constant 0 : index
    %c0_39 = arith.constant 0 : index
    %99 = vector.load %arg3[%c2_37, %c0_38, %c0_39] : memref<9x128x256xbf16, #tpu.memory_space<vmem>>, vector<1x128x256xbf16>
    %100 = vector.shape_cast %99 : vector<1x128x256xbf16> to vector<128x256xbf16>
    %cst_40 = arith.constant dense<0.000000e+00> : vector<24x256xf32>
    %101 = tpu.matmul %98, %100, %cst_40 {dimension_numbers = #tpu.dot_dimension_numbers<[1], [0], [0], [1], [0, 0, 1, 1], [], []>} : vector<24x128xbf16>, vector<128x256xbf16>, vector<24x256xf32> -> vector<24x256xf32>
    %102 = arith.addf %96, %101 : vector<24x256xf32>
    %c6 = arith.constant 6 : index
    %c0_41 = arith.constant 0 : index
    %103 = vector.load %arg7[%c6, %c0_41] : memref<38x128xf32, #tpu.memory_space<vmem>>, vector<24x128xf32>
    %104 = arith.truncf %103 : vector<24x128xf32> to vector<24x128xbf16>
    %c3 = arith.constant 3 : index
    %c0_42 = arith.constant 0 : index
    %c0_43 = arith.constant 0 : index
    %105 = vector.load %arg3[%c3, %c0_42, %c0_43] : memref<9x128x256xbf16, #tpu.memory_space<vmem>>, vector<1x128x256xbf16>
    %106 = vector.shape_cast %105 : vector<1x128x256xbf16> to vector<128x256xbf16>
    %cst_44 = arith.constant dense<0.000000e+00> : vector<24x256xf32>
    %107 = tpu.matmul %104, %106, %cst_44 {dimension_numbers = #tpu.dot_dimension_numbers<[1], [0], [0], [1], [0, 0, 1, 1], [], []>} : vector<24x128xbf16>, vector<128x256xbf16>, vector<24x256xf32> -> vector<24x256xf32>
    %108 = arith.addf %102, %107 : vector<24x256xf32>
    %c7_45 = arith.constant 7 : index
    %c0_46 = arith.constant 0 : index
    %109 = vector.load %arg7[%c7_45, %c0_46] : memref<38x128xf32, #tpu.memory_space<vmem>>, vector<24x128xf32>
    %110 = arith.truncf %109 : vector<24x128xf32> to vector<24x128xbf16>
    %c4 = arith.constant 4 : index
    %c0_47 = arith.constant 0 : index
    %c0_48 = arith.constant 0 : index
    %111 = vector.load %arg3[%c4, %c0_47, %c0_48] : memref<9x128x256xbf16, #tpu.memory_space<vmem>>, vector<1x128x256xbf16>
    %112 = vector.shape_cast %111 : vector<1x128x256xbf16> to vector<128x256xbf16>
    %cst_49 = arith.constant dense<0.000000e+00> : vector<24x256xf32>
    %113 = tpu.matmul %110, %112, %cst_49 {dimension_numbers = #tpu.dot_dimension_numbers<[1], [0], [0], [1], [0, 0, 1, 1], [], []>} : vector<24x128xbf16>, vector<128x256xbf16>, vector<24x256xf32> -> vector<24x256xf32>
    %114 = arith.addf %108, %113 : vector<24x256xf32>
    %c8_50 = arith.constant 8 : index
    %c0_51 = arith.constant 0 : index
    %115 = vector.load %arg7[%c8_50, %c0_51] : memref<38x128xf32, #tpu.memory_space<vmem>>, vector<24x128xf32>
    %116 = arith.truncf %115 : vector<24x128xf32> to vector<24x128xbf16>
    %c5 = arith.constant 5 : index
    %c0_52 = arith.constant 0 : index
    %c0_53 = arith.constant 0 : index
    %117 = vector.load %arg3[%c5, %c0_52, %c0_53] : memref<9x128x256xbf16, #tpu.memory_space<vmem>>, vector<1x128x256xbf16>
    %118 = vector.shape_cast %117 : vector<1x128x256xbf16> to vector<128x256xbf16>
    %cst_54 = arith.constant dense<0.000000e+00> : vector<24x256xf32>
    %119 = tpu.matmul %116, %118, %cst_54 {dimension_numbers = #tpu.dot_dimension_numbers<[1], [0], [0], [1], [0, 0, 1, 1], [], []>} : vector<24x128xbf16>, vector<128x256xbf16>, vector<24x256xf32> -> vector<24x256xf32>
    %120 = arith.addf %114, %119 : vector<24x256xf32>
    %c12 = arith.constant 12 : index
    %c0_55 = arith.constant 0 : index
    %121 = vector.load %arg7[%c12, %c0_55] : memref<38x128xf32, #tpu.memory_space<vmem>>, vector<24x128xf32>
    %122 = arith.truncf %121 : vector<24x128xf32> to vector<24x128xbf16>
    %c6_56 = arith.constant 6 : index
    %c0_57 = arith.constant 0 : index
    %c0_58 = arith.constant 0 : index
    %123 = vector.load %arg3[%c6_56, %c0_57, %c0_58] : memref<9x128x256xbf16, #tpu.memory_space<vmem>>, vector<1x128x256xbf16>
    %124 = vector.shape_cast %123 : vector<1x128x256xbf16> to vector<128x256xbf16>
    %cst_59 = arith.constant dense<0.000000e+00> : vector<24x256xf32>
    %125 = tpu.matmul %122, %124, %cst_59 {dimension_numbers = #tpu.dot_dimension_numbers<[1], [0], [0], [1], [0, 0, 1, 1], [], []>} : vector<24x128xbf16>, vector<128x256xbf16>, vector<24x256xf32> -> vector<24x256xf32>
    %126 = arith.addf %120, %125 : vector<24x256xf32>
    %c13_60 = arith.constant 13 : index
    %c0_61 = arith.constant 0 : index
    %127 = vector.load %arg7[%c13_60, %c0_61] : memref<38x128xf32, #tpu.memory_space<vmem>>, vector<24x128xf32>
    %128 = arith.truncf %127 : vector<24x128xf32> to vector<24x128xbf16>
    %c7_62 = arith.constant 7 : index
    %c0_63 = arith.constant 0 : index
    %c0_64 = arith.constant 0 : index
    %129 = vector.load %arg3[%c7_62, %c0_63, %c0_64] : memref<9x128x256xbf16, #tpu.memory_space<vmem>>, vector<1x128x256xbf16>
    %130 = vector.shape_cast %129 : vector<1x128x256xbf16> to vector<128x256xbf16>
    %cst_65 = arith.constant dense<0.000000e+00> : vector<24x256xf32>
    %131 = tpu.matmul %128, %130, %cst_65 {dimension_numbers = #tpu.dot_dimension_numbers<[1], [0], [0], [1], [0, 0, 1, 1], [], []>} : vector<24x128xbf16>, vector<128x256xbf16>, vector<24x256xf32> -> vector<24x256xf32>
    %132 = arith.addf %126, %131 : vector<24x256xf32>
    %c14_66 = arith.constant 14 : index
    %c0_67 = arith.constant 0 : index
    %133 = vector.load %arg7[%c14_66, %c0_67] : memref<38x128xf32, #tpu.memory_space<vmem>>, vector<24x128xf32>
    %134 = arith.truncf %133 : vector<24x128xf32> to vector<24x128xbf16>
    %c8_68 = arith.constant 8 : index
    %c0_69 = arith.constant 0 : index
    %c0_70 = arith.constant 0 : index
    %135 = vector.load %arg3[%c8_68, %c0_69, %c0_70] : memref<9x128x256xbf16, #tpu.memory_space<vmem>>, vector<1x128x256xbf16>
    %136 = vector.shape_cast %135 : vector<1x128x256xbf16> to vector<128x256xbf16>
    %cst_71 = arith.constant dense<0.000000e+00> : vector<24x256xf32>
    %137 = tpu.matmul %134, %136, %cst_71 {dimension_numbers = #tpu.dot_dimension_numbers<[1], [0], [0], [1], [0, 0, 1, 1], [], []>} : vector<24x128xbf16>, vector<128x256xbf16>, vector<24x256xf32> -> vector<24x256xf32>
    %138 = arith.addf %132, %137 : vector<24x256xf32>
    %cst_72 = arith.constant 0.000000e+00 : f32
    %139 = vector.broadcast %cst_72 : f32 to vector<24x256xf32>
    %140 = arith.maximumf %138, %139 : vector<24x256xf32>
    %cst_73 = arith.constant 0.000000e+00 : f32
    %141 = vector.broadcast %cst_73 : f32 to vector<18x256xf32>
    %c0_74 = arith.constant 0 : index
    %c0_75 = arith.constant 0 : index
    %142 = vector.load %arg8[%c0_74, %c0_75] : memref<18x256xf32, #tpu.memory_space<vmem>>, vector<18x256xf32>
    tpu.vector_store %arg8[%c0_74, %c0_75], %141 {strides = array<i32>} : memref<18x256xf32, #tpu.memory_space<vmem>>, vector<18x256xf32>,
    %143 = vector.extract_strided_slice %140 {offsets = [0, 0], sizes = [4, 256], strides = [1, 1]} : vector<24x256xf32> to vector<4x256xf32>
    %144 = vector.extract_strided_slice %140 {offsets = [6, 0], sizes = [4, 256], strides = [1, 1]} : vector<24x256xf32> to vector<4x256xf32>
    %145 = arith.maximumf %143, %144 : vector<4x256xf32>
    %146 = vector.extract_strided_slice %145 {offsets = [0, 0], sizes = [1, 256], strides = [1, 1]} : vector<4x256xf32> to vector<1x256xf32>
    %147 = vector.extract_strided_slice %145 {offsets = [1, 0], sizes = [1, 256], strides = [1, 1]} : vector<4x256xf32> to vector<1x256xf32>
    %148 = arith.maximumf %146, %147 : vector<1x256xf32>
    %c5_76 = arith.constant 5 : index
    %c0_77 = arith.constant 0 : index
    %149 = vector.load %arg8[%c5_76, %c0_77] : memref<18x256xf32, #tpu.memory_space<vmem>>, vector<1x256xf32>
    tpu.vector_store %arg8[%c5_76, %c0_77], %148 {strides = array<i32>} : memref<18x256xf32, #tpu.memory_space<vmem>>, vector<1x256xf32>,
    %150 = vector.extract_strided_slice %145 {offsets = [2, 0], sizes = [1, 256], strides = [1, 1]} : vector<4x256xf32> to vector<1x256xf32>
    %151 = vector.extract_strided_slice %145 {offsets = [3, 0], sizes = [1, 256], strides = [1, 1]} : vector<4x256xf32> to vector<1x256xf32>
    %152 = arith.maximumf %150, %151 : vector<1x256xf32>
    %c6_78 = arith.constant 6 : index
    %c0_79 = arith.constant 0 : index
    %153 = vector.load %arg8[%c6_78, %c0_79] : memref<18x256xf32, #tpu.memory_space<vmem>>, vector<1x256xf32>
    tpu.vector_store %arg8[%c6_78, %c0_79], %152 {strides = array<i32>} : memref<18x256xf32, #tpu.memory_space<vmem>>, vector<1x256xf32>,
    %154 = vector.extract_strided_slice %140 {offsets = [12, 0], sizes = [4, 256], strides = [1, 1]} : vector<24x256xf32> to vector<4x256xf32>
    %155 = vector.extract_strided_slice %140 {offsets = [18, 0], sizes = [4, 256], strides = [1, 1]} : vector<24x256xf32> to vector<4x256xf32>
    %156 = arith.maximumf %154, %155 : vector<4x256xf32>
    %157 = vector.extract_strided_slice %156 {offsets = [0, 0], sizes = [1, 256], strides = [1, 1]} : vector<4x256xf32> to vector<1x256xf32>
    %158 = vector.extract_strided_slice %156 {offsets = [1, 0], sizes = [1, 256], strides = [1, 1]} : vector<4x256xf32> to vector<1x256xf32>
    %159 = arith.maximumf %157, %158 : vector<1x256xf32>
    %c9_80 = arith.constant 9 : index
    %c0_81 = arith.constant 0 : index
    %160 = vector.load %arg8[%c9_80, %c0_81] : memref<18x256xf32, #tpu.memory_space<vmem>>, vector<1x256xf32>
    tpu.vector_store %arg8[%c9_80, %c0_81], %159 {strides = array<i32>} : memref<18x256xf32, #tpu.memory_space<vmem>>, vector<1x256xf32>,
    %161 = vector.extract_strided_slice %156 {offsets = [2, 0], sizes = [1, 256], strides = [1, 1]} : vector<4x256xf32> to vector<1x256xf32>
    %162 = vector.extract_strided_slice %156 {offsets = [3, 0], sizes = [1, 256], strides = [1, 1]} : vector<4x256xf32> to vector<1x256xf32>
    %163 = arith.maximumf %161, %162 : vector<1x256xf32>
    %c10_82 = arith.constant 10 : index
    %c0_83 = arith.constant 0 : index
    %164 = vector.load %arg8[%c10_82, %c0_83] : memref<18x256xf32, #tpu.memory_space<vmem>>, vector<1x256xf32>
    tpu.vector_store %arg8[%c10_82, %c0_83], %163 {strides = array<i32>} : memref<18x256xf32, #tpu.memory_space<vmem>>, vector<1x256xf32>,
    %cst_84 = arith.constant 0.000000e+00 : f32
    %165 = vector.broadcast %cst_84 : f32 to vector<8x512xf32>
    %c0_85 = arith.constant 0 : index
    %c0_86 = arith.constant 0 : index
    %166 = vector.load %arg8[%c0_85, %c0_86] : memref<18x256xf32, #tpu.memory_space<vmem>>, vector<8x256xf32>
    %167 = arith.truncf %166 : vector<8x256xf32> to vector<8x256xbf16>
    %c0_87 = arith.constant 0 : index
    %c0_88 = arith.constant 0 : index
    %c0_89 = arith.constant 0 : index
    %168 = vector.load %arg4[%c0_87, %c0_88, %c0_89] : memref<9x256x512xbf16, #tpu.memory_space<vmem>>, vector<1x256x512xbf16>
    %169 = vector.shape_cast %168 : vector<1x256x512xbf16> to vector<256x512xbf16>
    %cst_90 = arith.constant dense<0.000000e+00> : vector<8x512xf32>
    %170 = tpu.matmul %167, %169, %cst_90 {dimension_numbers = #tpu.dot_dimension_numbers<[1], [0], [0], [1], [0, 0, 1, 1], [], []>} : vector<8x256xbf16>, vector<256x512xbf16>, vector<8x512xf32> -> vector<8x512xf32>
    %171 = arith.addf %165, %170 : vector<8x512xf32>
    %c1_91 = arith.constant 1 : index
    %c0_92 = arith.constant 0 : index
    %172 = vector.load %arg8[%c1_91, %c0_92] : memref<18x256xf32, #tpu.memory_space<vmem>>, vector<8x256xf32>
    %173 = arith.truncf %172 : vector<8x256xf32> to vector<8x256xbf16>
    %c1_93 = arith.constant 1 : index
    %c0_94 = arith.constant 0 : index
    %c0_95 = arith.constant 0 : index
    %174 = vector.load %arg4[%c1_93, %c0_94, %c0_95] : memref<9x256x512xbf16, #tpu.memory_space<vmem>>, vector<1x256x512xbf16>
    %175 = vector.shape_cast %174 : vector<1x256x512xbf16> to vector<256x512xbf16>
    %cst_96 = arith.constant dense<0.000000e+00> : vector<8x512xf32>
    %176 = tpu.matmul %173, %175, %cst_96 {dimension_numbers = #tpu.dot_dimension_numbers<[1], [0], [0], [1], [0, 0, 1, 1], [], []>} : vector<8x256xbf16>, vector<256x512xbf16>, vector<8x512xf32> -> vector<8x512xf32>
    %177 = arith.addf %171, %176 : vector<8x512xf32>
    %c2_97 = arith.constant 2 : index
    %c0_98 = arith.constant 0 : index
    %178 = vector.load %arg8[%c2_97, %c0_98] : memref<18x256xf32, #tpu.memory_space<vmem>>, vector<8x256xf32>
    %179 = arith.truncf %178 : vector<8x256xf32> to vector<8x256xbf16>
    %c2_99 = arith.constant 2 : index
    %c0_100 = arith.constant 0 : index
    %c0_101 = arith.constant 0 : index
    %180 = vector.load %arg4[%c2_99, %c0_100, %c0_101] : memref<9x256x512xbf16, #tpu.memory_space<vmem>>, vector<1x256x512xbf16>
    %181 = vector.shape_cast %180 : vector<1x256x512xbf16> to vector<256x512xbf16>
    %cst_102 = arith.constant dense<0.000000e+00> : vector<8x512xf32>
    %182 = tpu.matmul %179, %181, %cst_102 {dimension_numbers = #tpu.dot_dimension_numbers<[1], [0], [0], [1], [0, 0, 1, 1], [], []>} : vector<8x256xbf16>, vector<256x512xbf16>, vector<8x512xf32> -> vector<8x512xf32>
    %183 = arith.addf %177, %182 : vector<8x512xf32>
    %c4_103 = arith.constant 4 : index
    %c0_104 = arith.constant 0 : index
    %184 = vector.load %arg8[%c4_103, %c0_104] : memref<18x256xf32, #tpu.memory_space<vmem>>, vector<8x256xf32>
    %185 = arith.truncf %184 : vector<8x256xf32> to vector<8x256xbf16>
    %c3_105 = arith.constant 3 : index
    %c0_106 = arith.constant 0 : index
    %c0_107 = arith.constant 0 : index
    %186 = vector.load %arg4[%c3_105, %c0_106, %c0_107] : memref<9x256x512xbf16, #tpu.memory_space<vmem>>, vector<1x256x512xbf16>
    %187 = vector.shape_cast %186 : vector<1x256x512xbf16> to vector<256x512xbf16>
    %cst_108 = arith.constant dense<0.000000e+00> : vector<8x512xf32>
    %188 = tpu.matmul %185, %187, %cst_108 {dimension_numbers = #tpu.dot_dimension_numbers<[1], [0], [0], [1], [0, 0, 1, 1], [], []>} : vector<8x256xbf16>, vector<256x512xbf16>, vector<8x512xf32> -> vector<8x512xf32>
    %189 = arith.addf %183, %188 : vector<8x512xf32>
    %c5_109 = arith.constant 5 : index
    %c0_110 = arith.constant 0 : index
    %190 = vector.load %arg8[%c5_109, %c0_110] : memref<18x256xf32, #tpu.memory_space<vmem>>, vector<8x256xf32>
    %191 = arith.truncf %190 : vector<8x256xf32> to vector<8x256xbf16>
    %c4_111 = arith.constant 4 : index
    %c0_112 = arith.constant 0 : index
    %c0_113 = arith.constant 0 : index
    %192 = vector.load %arg4[%c4_111, %c0_112, %c0_113] : memref<9x256x512xbf16, #tpu.memory_space<vmem>>, vector<1x256x512xbf16>
    %193 = vector.shape_cast %192 : vector<1x256x512xbf16> to vector<256x512xbf16>
    %cst_114 = arith.constant dense<0.000000e+00> : vector<8x512xf32>
    %194 = tpu.matmul %191, %193, %cst_114 {dimension_numbers = #tpu.dot_dimension_numbers<[1], [0], [0], [1], [0, 0, 1, 1], [], []>} : vector<8x256xbf16>, vector<256x512xbf16>, vector<8x512xf32> -> vector<8x512xf32>
    %195 = arith.addf %189, %194 : vector<8x512xf32>
    %c6_115 = arith.constant 6 : index
    %c0_116 = arith.constant 0 : index
    %196 = vector.load %arg8[%c6_115, %c0_116] : memref<18x256xf32, #tpu.memory_space<vmem>>, vector<8x256xf32>
    %197 = arith.truncf %196 : vector<8x256xf32> to vector<8x256xbf16>
    %c5_117 = arith.constant 5 : index
    %c0_118 = arith.constant 0 : index
    %c0_119 = arith.constant 0 : index
    %198 = vector.load %arg4[%c5_117, %c0_118, %c0_119] : memref<9x256x512xbf16, #tpu.memory_space<vmem>>, vector<1x256x512xbf16>
    %199 = vector.shape_cast %198 : vector<1x256x512xbf16> to vector<256x512xbf16>
    %cst_120 = arith.constant dense<0.000000e+00> : vector<8x512xf32>
    %200 = tpu.matmul %197, %199, %cst_120 {dimension_numbers = #tpu.dot_dimension_numbers<[1], [0], [0], [1], [0, 0, 1, 1], [], []>} : vector<8x256xbf16>, vector<256x512xbf16>, vector<8x512xf32> -> vector<8x512xf32>
    %201 = arith.addf %195, %200 : vector<8x512xf32>
    %c8_121 = arith.constant 8 : index
    %c0_122 = arith.constant 0 : index
    %202 = vector.load %arg8[%c8_121, %c0_122] : memref<18x256xf32, #tpu.memory_space<vmem>>, vector<8x256xf32>
    %203 = arith.truncf %202 : vector<8x256xf32> to vector<8x256xbf16>
    %c6_123 = arith.constant 6 : index
    %c0_124 = arith.constant 0 : index
    %c0_125 = arith.constant 0 : index
    %204 = vector.load %arg4[%c6_123, %c0_124, %c0_125] : memref<9x256x512xbf16, #tpu.memory_space<vmem>>, vector<1x256x512xbf16>
    %205 = vector.shape_cast %204 : vector<1x256x512xbf16> to vector<256x512xbf16>
    %cst_126 = arith.constant dense<0.000000e+00> : vector<8x512xf32>
    %206 = tpu.matmul %203, %205, %cst_126 {dimension_numbers = #tpu.dot_dimension_numbers<[1], [0], [0], [1], [0, 0, 1, 1], [], []>} : vector<8x256xbf16>, vector<256x512xbf16>, vector<8x512xf32> -> vector<8x512xf32>
    %207 = arith.addf %201, %206 : vector<8x512xf32>
    %c9_127 = arith.constant 9 : index
    %c0_128 = arith.constant 0 : index
    %208 = vector.load %arg8[%c9_127, %c0_128] : memref<18x256xf32, #tpu.memory_space<vmem>>, vector<8x256xf32>
    %209 = arith.truncf %208 : vector<8x256xf32> to vector<8x256xbf16>
    %c7_129 = arith.constant 7 : index
    %c0_130 = arith.constant 0 : index
    %c0_131 = arith.constant 0 : index
    %210 = vector.load %arg4[%c7_129, %c0_130, %c0_131] : memref<9x256x512xbf16, #tpu.memory_space<vmem>>, vector<1x256x512xbf16>
    %211 = vector.shape_cast %210 : vector<1x256x512xbf16> to vector<256x512xbf16>
    %cst_132 = arith.constant dense<0.000000e+00> : vector<8x512xf32>
    %212 = tpu.matmul %209, %211, %cst_132 {dimension_numbers = #tpu.dot_dimension_numbers<[1], [0], [0], [1], [0, 0, 1, 1], [], []>} : vector<8x256xbf16>, vector<256x512xbf16>, vector<8x512xf32> -> vector<8x512xf32>
    %213 = arith.addf %207, %212 : vector<8x512xf32>
    %c10_133 = arith.constant 10 : index
    %c0_134 = arith.constant 0 : index
    %214 = vector.load %arg8[%c10_133, %c0_134] : memref<18x256xf32, #tpu.memory_space<vmem>>, vector<8x256xf32>
    %215 = arith.truncf %214 : vector<8x256xf32> to vector<8x256xbf16>
    %c8_135 = arith.constant 8 : index
    %c0_136 = arith.constant 0 : index
    %c0_137 = arith.constant 0 : index
    %216 = vector.load %arg4[%c8_135, %c0_136, %c0_137] : memref<9x256x512xbf16, #tpu.memory_space<vmem>>, vector<1x256x512xbf16>
    %217 = vector.shape_cast %216 : vector<1x256x512xbf16> to vector<256x512xbf16>
    %cst_138 = arith.constant dense<0.000000e+00> : vector<8x512xf32>
    %218 = tpu.matmul %215, %217, %cst_138 {dimension_numbers = #tpu.dot_dimension_numbers<[1], [0], [0], [1], [0, 0, 1, 1], [], []>} : vector<8x256xbf16>, vector<256x512xbf16>, vector<8x512xf32> -> vector<8x512xf32>
    %219 = arith.addf %213, %218 : vector<8x512xf32>
    %cst_139 = arith.constant 0.000000e+00 : f32
    %220 = vector.broadcast %cst_139 : f32 to vector<8x512xf32>
    %221 = arith.maximumf %219, %220 : vector<8x512xf32>
    %222 = vector.extract_strided_slice %221 {offsets = [0, 0], sizes = [2, 512], strides = [1, 1]} : vector<8x512xf32> to vector<2x512xf32>
    %223 = vector.extract_strided_slice %221 {offsets = [4, 0], sizes = [2, 512], strides = [1, 1]} : vector<8x512xf32> to vector<2x512xf32>
    %224 = arith.maximumf %222, %223 : vector<2x512xf32>
    %225 = vector.extract_strided_slice %224 {offsets = [0, 0], sizes = [1, 512], strides = [1, 1]} : vector<2x512xf32> to vector<1x512xf32>
    %226 = vector.extract_strided_slice %224 {offsets = [1, 0], sizes = [1, 512], strides = [1, 1]} : vector<2x512xf32> to vector<1x512xf32>
    %227 = arith.maximumf %225, %226 : vector<1x512xf32>
    %228 = arith.truncf %227 : vector<1x512xf32> to vector<1x512xbf16>
    %c0_140 = arith.constant 0 : index
    %c0_141 = arith.constant 0 : index
    %229 = vector.load %arg5[%c0_140, %c0_141] : memref<512x10xbf16, #tpu.memory_space<vmem>>, vector<512x10xbf16>
    %cst_142 = arith.constant dense<0.000000e+00> : vector<1x10xf32>
    %230 = tpu.matmul %228, %229, %cst_142 {dimension_numbers = #tpu.dot_dimension_numbers<[1], [0], [0], [1], [0, 0, 1, 1], [], []>} : vector<1x512xbf16>, vector<512x10xbf16>, vector<1x10xf32> -> vector<1x10xf32>
    %c0_143 = arith.constant 0 : index
    %c0_144 = arith.constant 0 : index
    %c0_145 = arith.constant 0 : index
    %231 = vector.load %arg6[%c0_143, %c0_144, %c0_145] : memref<1x1x10xf32, #tpu.memory_space<vmem>>, vector<1x1x10xf32>
    %232 = vector.shape_cast %231 : vector<1x1x10xf32> to vector<1x10xf32>
    %233 = vector.shape_cast %230 : vector<1x10xf32> to vector<1x1x10xf32>
    tpu.vector_store %arg6[%c0_143, %c0_144, %c0_145], %233 {strides = array<i32>} : memref<1x1x10xf32, #tpu.memory_space<vmem>>, vector<1x1x10xf32>,
    return
  }
  func.func @transform_0(%arg0: i32) -> (i32, i32, i32) {
    %c0_i32 = arith.constant 0 : i32
    %c0_i32_0 = arith.constant 0 : i32
    %c0_i32_1 = arith.constant 0 : i32
    return %arg0, %c0_i32, %c0_i32_0 : i32, i32, i32
  }
  func.func @transform_1(%arg0: i32) -> (i32, i32) {
    %c0_i32 = arith.constant 0 : i32
    %c0_i32_0 = arith.constant 0 : i32
    %c0_i32_1 = arith.constant 0 : i32
    return %c0_i32, %c0_i32_0 : i32, i32
  }
  func.func @transform_2(%arg0: i32) -> (i32, i32, i32) {
    %c0_i32 = arith.constant 0 : i32
    %c0_i32_0 = arith.constant 0 : i32
    %c0_i32_1 = arith.constant 0 : i32
    %c0_i32_2 = arith.constant 0 : i32
    return %c0_i32, %c0_i32_0, %c0_i32_1 : i32, i32, i32
  }
  func.func @transform_3(%arg0: i32) -> (i32, i32, i32) {
    %c0_i32 = arith.constant 0 : i32
    %c0_i32_0 = arith.constant 0 : i32
    %c0_i32_1 = arith.constant 0 : i32
    %c0_i32_2 = arith.constant 0 : i32
    return %c0_i32, %c0_i32_0, %c0_i32_1 : i32, i32, i32
  }
  func.func @transform_4(%arg0: i32) -> (i32, i32) {
    %c0_i32 = arith.constant 0 : i32
    %c0_i32_0 = arith.constant 0 : i32
    %c0_i32_1 = arith.constant 0 : i32
    return %c0_i32, %c0_i32_0 : i32, i32
  }
  func.func @transform_5(%arg0: i32) -> (i32, i32, i32) {
    %c0_i32 = arith.constant 0 : i32
    %c0_i32_0 = arith.constant 0 : i32
    %c0_i32_1 = arith.constant 0 : i32
    return %arg0, %c0_i32, %c0_i32_0 : i32, i32, i32
  }
}

</mosaic_0001>

<llo_original>
// kernel: vgg_forward.1
$region0: #{vgg_forward.1}
  #allocation0 [shape = 'u32[]', space=smem, size = 0x4, offset = 0x4, fixed_abs, tag = 'smem constant byte address 0x4 - core index']
  #allocation1 [shape = 'u32[144,128]{1,0:T(1,128)}', space=vmem, size = 0x12000, scoped, tag = 'internal scratch']
  #allocation2 [shape = 'f32[38,128]{1,0:T(8,128)}', space=vmem, size = 0x5000, scoped, tag = 'scratch operand']
  #allocation3 [shape = 'f32[18,256]{1,0:T(8,128)}', space=vmem, size = 0x6000, scoped, tag = 'scratch operand']
  %s0 = inlined_call_operand.vmem [shape: bf16[2,64,27], index: 0, kind: input, shape index: {}]
  %s1 = inlined_call_operand.hbm [shape: bf16[27,128], index: 1, kind: input, shape index: {}]
  %s2 = inlined_call_operand.hbm [shape: bf16[9,128,256], index: 2, kind: input, shape index: {}]
  %s3 = inlined_call_operand.hbm [shape: bf16[9,256,512], index: 3, kind: input, shape index: {}]
  %s4 = inlined_call_operand.vmem [shape: bf16[512,10], index: 4, kind: input, shape index: {}]
  %s5 = inlined_call_operand.hbm [shape: f32[2,1,10], index: 5, kind: output, shape index: {}]
  %s6 = sld [smem:[#allocation0]]
  $region65: #{vgg_forward.1} parent=0
    _
  %s8 = ssub.s32 1, %s6
  %s9 = scalar_select 0, %s8, %s6
  $region1: #{vgg_forward.1} parent=0
    #allocation4 [shape = 'u8[8192]{0}', space=vmem, size = 0x2000, scoped, tag = 'input window, operand 1, single buffered']
    #allocation5 [shape = 's32[2]{0}', space=sflag, size = 0x8, scoped, tag = 'scoped memory for vgg_forward.1']
    #allocation6 [shape = 's32[2]{0}', space=sflag, size = 0x8, scoped, tag = 'scoped memory for vgg_forward.1']
    #allocation7 [shape = 'u8[589824]{0}', space=vmem, size = 0x90000, scoped, tag = 'input window, operand 2, single buffered']
    #allocation8 [shape = 's32[1]{0}', space=sflag, size = 0x4, scoped, tag = 'scoped memory for vgg_forward.1']
    #allocation9 [shape = 'u8[2359296]{0}', space=vmem, size = 0x240000, scoped, tag = 'input window, operand 3, single buffered']
    #allocation10 [shape = 'u8[1024]{0}', space=vmem, size = 0x400, scoped, tag = 'output window, operand 0']
    %10 = vsyncpa [#allocation5], 0
    %11 = vsyncpa [#allocation8], 0
    %12 = vsyncpa [#allocation6], 0
    %s13 = scalar_lea.sflag [#allocation6], 1
    %14 = vsyncpa %s13, 0
    loop: start=0, step=1, limit=4
    $region2: #{vgg_forward.1} parent=1 // loop_pre_header
      _
    $region3: #{vgg_forward.1} parent=1 // loop_header
      %s16 = sphi 0, %s20
      %p17 = scmp.ge.s32.totalorder %s16, 4
      %s26 = sphi 0, %s28
      %s29 = sphi 0, %s26
      %s30 = sphi 0, %s29
      %s46 = sphi 0, %s30
      %s50 = sphi 0, %s50
      %s52 = sphi 0, %s50
      %s53 = sphi 0, %s52
      %s67 = sphi 0, %s53
      %s71 = sphi 0, %s71
      %s73 = sphi 0, %s71
      %s74 = sphi 0, %s73
      %s88 = sphi 0, %s74
      %s92 = sphi 0, %s92
      %s94 = sphi 0, %s92
      %s95 = sphi 0, %s94
      %s109 = sphi 0, %s95
      %s113 = sphi 0, %s113
      %s115 = sphi 0, %s113
      %s116 = sphi 0, %s115
      %s130 = sphi 0, %s116
      %s136 = sphi 0, %s138
      %s139 = sphi 0, %s136
      %s140 = sphi 0, %s139
      %s156 = sphi 0, %s140
    $region4: #{vgg_forward.1} parent=1 // loop_header_branch
      %19 = sbr.rel (%p17) target = $region8
    $region5: #{vgg_forward.1} parent=1 // loop_body
      %s21 = ssub.s32 %s16, 1
      %s22 = ssub.s32 %s16, 2
      %s23 = sadd.s32 %s16, 1
      %s24 = ssub.s32 %s16, %s23
      %p25 = scmp.eq.s32.totalorder %s24, 0
      %s27 = sadd.s32 %s26, 1
      %s28 = scalar_select %p25, %s26, %s27
      %p31 = pneg %p25
      %p32 = scmp.eq.s32.totalorder %s16, 1
      %p33 = por %p31, %p32
      %p34 = scmp.ne.s32.totalorder %s26, %s29
      %p35 = scmp.eq.s32.totalorder %s16, 0
      %p36 = por %p34, %p35
      %p37 = scmp.ne.s32.totalorder %s26, %s29
      %p38 = scmp.eq.s32.totalorder %s21, 1
      %p39 = por %p37, %p38
      %p40 = scmp.ne.s32.totalorder %s29, %s30
      %p41 = scmp.eq.s32.totalorder %s21, 0
      %p42 = por %p40, %p41
      %p43 = scmp.ne.s32.totalorder %s29, %s30
      %p44 = scmp.eq.s32.totalorder %s22, 1
      %p45 = por %p43, %p44
      %p47 = scmp.ne.s32.totalorder %s30, %s46
      %p48 = scmp.eq.s32.totalorder %s22, 0
      %p49 = por %p47, %p48
      %s51 = sadd.s32 %s50, 1
      %p54 = scmp.eq.s32.totalorder %s16, 1
      %p55 = scmp.ne.s32.totalorder %s50, %s52
      %p56 = scmp.eq.s32.totalorder %s16, 0
      %p57 = por %p55, %p56
      %p58 = scmp.ne.s32.totalorder %s50, %s52
      %p59 = scmp.eq.s32.totalorder %s21, 1
      %p60 = por %p58, %p59
      %p61 = scmp.ne.s32.totalorder %s52, %s53
      %p62 = scmp.eq.s32.totalorder %s21, 0
      %p63 = por %p61, %p62
      %p64 = scmp.ne.s32.totalorder %s52, %s53
      %p65 = scmp.eq.s32.totalorder %s22, 1
      %p66 = por %p64, %p65
      %p68 = scmp.ne.s32.totalorder %s53, %s67
      %p69 = scmp.eq.s32.totalorder %s22, 0
      %p70 = por %p68, %p69
      %s72 = sadd.s32 %s71, 1
      %p75 = scmp.eq.s32.totalorder %s16, 1
      %p76 = scmp.ne.s32.totalorder %s71, %s73
      %p77 = scmp.eq.s32.totalorder %s16, 0
      %p78 = por %p76, %p77
      %p79 = scmp.ne.s32.totalorder %s71, %s73
      %p80 = scmp.eq.s32.totalorder %s21, 1
      %p81 = por %p79, %p80
      %p82 = scmp.ne.s32.totalorder %s73, %s74
      %p83 = scmp.eq.s32.totalorder %s21, 0
      %p84 = por %p82, %p83
      %p85 = scmp.ne.s32.totalorder %s73, %s74
      %p86 = scmp.eq.s32.totalorder %s22, 1
      %p87 = por %p85, %p86
      %p89 = scmp.ne.s32.totalorder %s74, %s88
      %p90 = scmp.eq.s32.totalorder %s22, 0
      %p91 = por %p89, %p90
      %s93 = sadd.s32 %s92, 1
      %p96 = scmp.eq.s32.totalorder %s16, 1
      %p97 = scmp.ne.s32.totalorder %s92, %s94
      %p98 = scmp.eq.s32.totalorder %s16, 0
      %p99 = por %p97, %p98
      %p100 = scmp.ne.s32.totalorder %s92, %s94
      %p101 = scmp.eq.s32.totalorder %s21, 1
      %p102 = por %p100, %p101
      %p103 = scmp.ne.s32.totalorder %s94, %s95
      %p104 = scmp.eq.s32.totalorder %s21, 0
      %p105 = por %p103, %p104
      %p106 = scmp.ne.s32.totalorder %s94, %s95
      %p107 = scmp.eq.s32.totalorder %s22, 1
      %p108 = por %p106, %p107
      %p110 = scmp.ne.s32.totalorder %s95, %s109
      %p111 = scmp.eq.s32.totalorder %s22, 0
      %p112 = por %p110, %p111
      %s114 = sadd.s32 %s113, 1
      %p117 = scmp.eq.s32.totalorder %s16, 1
      %p118 = scmp.ne.s32.totalorder %s113, %s115
      %p119 = scmp.eq.s32.totalorder %s16, 0
      %p120 = por %p118, %p119
      %p121 = scmp.ne.s32.totalorder %s113, %s115
      %p122 = scmp.eq.s32.totalorder %s21, 1
      %p123 = por %p121, %p122
      %p124 = scmp.ne.s32.totalorder %s115, %s116
      %p125 = scmp.eq.s32.totalorder %s21, 0
      %p126 = por %p124, %p125
      %p127 = scmp.ne.s32.totalorder %s115, %s116
      %p128 = scmp.eq.s32.totalorder %s22, 1
      %p129 = por %p127, %p128
      %p131 = scmp.ne.s32.totalorder %s116, %s130
      %p132 = scmp.eq.s32.totalorder %s22, 0
      %p133 = por %p131, %p132
      %s134 = ssub.s32 %s16, %s23
      %p135 = scmp.eq.s32.totalorder %s134, 0
      %s137 = sadd.s32 %s136, 1
      %s138 = scalar_select %p135, %s136, %s137
      %p141 = pneg %p135
      %p142 = scmp.eq.s32.totalorder %s16, 1
      %p143 = por %p141, %p142
      %p144 = scmp.ne.s32.totalorder %s136, %s139
      %p145 = scmp.eq.s32.totalorder %s16, 0
      %p146 = por %p144, %p145
      %p147 = scmp.ne.s32.totalorder %s136, %s139
      %p148 = scmp.eq.s32.totalorder %s21, 1
      %p149 = por %p147, %p148
      %p150 = scmp.ne.s32.totalorder %s139, %s140
      %p151 = scmp.eq.s32.totalorder %s21, 0
      %p152 = por %p150, %p151
      %p153 = scmp.ne.s32.totalorder %s139, %s140
      %p154 = scmp.eq.s32.totalorder %s22, 1
      %p155 = por %p153, %p154
      %p157 = scmp.ne.s32.totalorder %s140, %s156
      %p158 = scmp.eq.s32.totalorder %s22, 0
      %p159 = por %p157, %p158
      %p160 = scmp.le.s32.totalorder 1, %s16
      %p161 = scmp.lt.s32.totalorder %s16, 3
      %p162 = pnand %p160, %p161
      %p163 = pneg %p162
      // Predicated region
      $region9: #{vgg_forward.1} parent=5 // pred_check
        _
      $region10: #{vgg_forward.1} parent=5 // pred_check_branch
        %165 = sbr.rel (%p162) target = $region12
      $region11: #{vgg_forward.1} parent=5 // pred_region
        %s166 = ssub.s32 %s16, 1
        // Predicated region
        $region13: #{vgg_forward.1} parent=11 // pred_check
          %p167 = pneg %p63
        $region14: #{vgg_forward.1} parent=11 // pred_check_branch
          %169 = sbr.rel (%p167) target = $region16
        $region15: #{vgg_forward.1} parent=11 // pred_region
          %s171 = ssub.s32 256, 256
          %172 = vsyncadd [#allocation5], %s171
          %s173 = sshll.u32 [#allocation4], 4
          %s174 = int_to_ptr.vmem [resolvable:$true] %s173
          %179 = dma.hbm_to_vmem [thread:$0]  %s1, 256, %s174, [#allocation5], 64, 64, 4
        $region16: #{vgg_forward.1} parent=11 // pred_fallthru
          _
        // Predicated region
        $region17: #{vgg_forward.1} parent=11 // pred_check
          %p180 = pneg %p84
        $region18: #{vgg_forward.1} parent=11 // pred_check_branch
          %182 = sbr.rel (%p180) target = $region20
        $region19: #{vgg_forward.1} parent=11 // pred_region
          %s184 = ssub.s32 18432, 18432
          %185 = vsyncadd [#allocation8], %s184
          %s186 = sshll.u32 [#allocation7], 4
          %s187 = int_to_ptr.vmem [resolvable:$true] %s186
          %192 = dma.hbm_to_vmem [thread:$0]  %s2, 18432, %s187, [#allocation8], 128, 128, 8
        $region20: #{vgg_forward.1} parent=11 // pred_fallthru
          _
        // Predicated region
        $region21: #{vgg_forward.1} parent=11 // pred_check
          %p193 = pneg %p105
        $region22: #{vgg_forward.1} parent=11 // pred_check_branch
          %195 = sbr.rel (%p193) target = $region24
        $region23: #{vgg_forward.1} parent=11 // pred_region
          %s197 = ssub.s32 73728, 73728
          %198 = vsyncadd [#allocation8], %s197
          %s199 = sshll.u32 [#allocation9], 4
          %s200 = int_to_ptr.vmem [resolvable:$true] %s199
          %205 = dma.hbm_to_vmem [thread:$0]  %s3, 73728, %s200, [#allocation8], 256, 256, 16
        $region24: #{vgg_forward.1} parent=11 // pred_fallthru
          _
        // Predicated region
        $region25: #{vgg_forward.1} parent=11 // pred_check
          %p206 = pneg %p126
        $region26: #{vgg_forward.1} parent=11 // pred_check_branch
          %208 = sbr.rel (%p206) target = $region28
        $region27: #{vgg_forward.1} parent=11 // pred_region
          _
        $region28: #{vgg_forward.1} parent=11 // pred_fallthru
          _
      $region12: #{vgg_forward.1} parent=5 // pred_fallthru
        _
      %p209 = scmp.lt.s32.totalorder %s16, 2
      // Predicated region
      $region29: #{vgg_forward.1} parent=5 // pred_check
        %p210 = pneg %p209
      $region30: #{vgg_forward.1} parent=5 // pred_check_branch
        %212 = sbr.rel (%p210) target = $region32
      $region31: #{vgg_forward.1} parent=5 // pred_region
        // Predicated region
        $region33: #{vgg_forward.1} parent=31 // pred_check
          %p213 = pneg %p36
        $region34: #{vgg_forward.1} parent=31 // pred_check_branch
          %215 = sbr.rel (%p213) target = $region36
        $region35: #{vgg_forward.1} parent=31 // pred_region
          %p216 = scmp.lt.s32.totalorder %s16, 1
          %s217 = scalar_select %p216, %s16, 1
          %s218 = smul.addr %s217, 8
          %s219 = smul.addr %s218, 4
          %s220 = scalar_lea.vmem %s0, %s219
        $region36: #{vgg_forward.1} parent=31 // pred_fallthru
          _
      $region32: #{vgg_forward.1} parent=5 // pred_fallthru
        _
      %p221 = scmp.le.s32.totalorder 1, %s16
      %p222 = scmp.lt.s32.totalorder %s16, 3
      %p223 = pnand %p221, %p222
      %p224 = pneg %p223
      // Predicated region
      $region37: #{vgg_forward.1} parent=5 // pred_check
        _
      $region38: #{vgg_forward.1} parent=5 // pred_check_branch
        %226 = sbr.rel (%p223) target = $region40
      $region39: #{vgg_forward.1} parent=5 // pred_region
        %s227 = ssub.s32 %s16, 1
        // Predicated region
        $region41: #{vgg_forward.1} parent=39 // pred_check
          %p228 = pneg %p63
        $region42: #{vgg_forward.1} parent=39 // pred_check_branch
          %230 = sbr.rel (%p228) target = $region44
        $region43: #{vgg_forward.1} parent=39 // pred_region
          %231 = dma.done [#allocation5], 256
        $region44: #{vgg_forward.1} parent=39 // pred_fallthru
          _
        // Predicated region
        $region45: #{vgg_forward.1} parent=39 // pred_check
          %p232 = pneg %p84
        $region46: #{vgg_forward.1} parent=39 // pred_check_branch
          %234 = sbr.rel (%p232) target = $region48
        $region47: #{vgg_forward.1} parent=39 // pred_region
          %235 = dma.done [#allocation8], 18432
        $region48: #{vgg_forward.1} parent=39 // pred_fallthru
          _
        // Predicated region
        $region49: #{vgg_forward.1} parent=39 // pred_check
          %p236 = pneg %p105
        $region50: #{vgg_forward.1} parent=39 // pred_check_branch
          %238 = sbr.rel (%p236) target = $region52
        $region51: #{vgg_forward.1} parent=39 // pred_region
          %239 = dma.done [#allocation8], 73728
        $region52: #{vgg_forward.1} parent=39 // pred_fallthru
          _
        %p240 = scmp.lt.s32.totalorder %s21, 1
        %s241 = scalar_select %p240, %s21, 1
        %s242 = smul.addr %s241, 8
        %s243 = smul.addr %s242, 4
        %s244 = scalar_lea.vmem %s0, %s243
        %p245 = pneg %p42
        %p246 = pneg %p39
        %p247 = pneg %p63
        %p248 = pneg %p60
        %p249 = pneg %p84
        %p250 = pneg %p81
        %p251 = pneg %p105
        %p252 = pneg %p102
        %p253 = pneg %p126
        %p254 = pneg %p123
        %p255 = pneg %p152
        %p256 = pneg %p149
        %s257 = sand.u32 %s139, 1
        %s258 = scalar_lea.sflag [#allocation6], %s257
        %s259 = sand.u32 %s139, 1
        %s260 = scalar_lea.vmem [#allocation10], %s259
        %p261 = scmp.lt.s32.totalorder %s21, 1
        %s262 = scalar_select %p261, %s21, 1
        %s263 = smul.addr %s262, 8
        %s264 = smul.addr %s263, 4
        %s265 = scalar_lea.vmem %s0, %s264
        %v267 = vld [vmem:[%s265] sm:$0xf]
        %v268 = vld [vmem:[%s265 + $0x4] sm:$0xf]
        %v269 = vld [vmem:[%s265 + $0x8] sm:$0xf]
        %v270 = vld [vmem:[%s265 + $0xc] sm:$0xf]
        %v271 = vld [vmem:[%s265 + $0x10] sm:$0xf]
        %v272 = vld [vmem:[%s265 + $0x14] sm:$0xf]
        %v273 = vld [vmem:[%s265 + $0x18] sm:$0xf]
        %v274 = vld [vmem:[%s265 + $0x1c] sm:$0xf]
        %v275 = vld [vmem:[#allocation4] sm:$0xf]
        %v276 = vld [vmem:[#allocation4 + $0x4] sm:$0xf]
        %v277 = vld [vmem:[#allocation4 + $0x8] sm:$0xf]
        %v278 = vld [vmem:[#allocation4 + $0xc] sm:$0x3]
        %v287 = vunpack.c.l.b16 %v267
        %v288 = vunpack.c.l.b16 %v268
        %v289 = vunpack.c.l.b16 %v269
        %v290 = vunpack.c.l.b16 %v270
        %v291 = vunpack.c.l.b16 %v271
        %v292 = vunpack.c.l.b16 %v272
        %v293 = vunpack.c.l.b16 %v273
        %v294 = vunpack.c.l.b16 %v274
        %v295 = vpack.c.b16 %v288, %v287
        %v296 = vpack.c.b16 %v290, %v289
        %v297 = vpack.c.b16 %v292, %v291
        %v298 = vpack.c.b16 %v294, %v293
        %v303 = vunpack.c.l.b16 %v275
        %v304 = vunpack.c.l.b16 %v276
        %v305 = vunpack.c.l.b16 %v277
        %v306 = vunpack.c.l.b16 %v278
        %v307 = vpack.c.b16 %v304, %v303
        %v308 = vpack.c.b16 %v306, %v305
        %vm310 = vcmask 220160
        %v312 = vsel %vm310, %v295, 0
        %v315 = vsel %vm310, %v296, 0
        %v318 = vsel %vm310, %v297, 0
        %v321 = vsel %vm310, %v298, 0
        %vm323 = vcmask 1044480
        %vm324 = vcmask 1045504
        %v325 = vsel %vm323, 4294967295, 65535
        %v326 = vsel %vm324, %v325, 0
        %v328 = vand.u32 %v308, %v326
        %330 = vmatprep.subr.bf16.mxu0 0
        %331 = vmatpush1.bf16.msra.mxu0 %v307
        %332 = vmatprep.subr.bf16.mxu0 0
        %333 = vmatpush1.bf16.msra.mxu0 %v328
        %334 = vmatprep.subr.bf16.mxu0 0
        %335 = vmatpush1.bf16.msra.mxu0 0
        %336 = vmatprep.subr.bf16.mxu0 0
        %337 = vmatpush1.bf16.msra.mxu0 0
        %338 = vmatprep.subr.bf16.mxu0 0
        %339 = vmatpush1.bf16.msra.mxu0 0
        %340 = vmatprep.subr.bf16.mxu0 0
        %341 = vmatpush1.bf16.msra.mxu0 0
        %342 = vmatprep.subr.bf16.mxu0 0
        %343 = vmatpush1.bf16.msra.mxu0 0
        %344 = vmatprep.subr.bf16.mxu0 0
        %345 = vmatpush1.bf16.msra.mxu0 0
        %346 = vmatprep.subr.bf16.mxu0 0
        %347 = vmatpush1.bf16.msra.mxu0 0
        %348 = vmatprep.subr.bf16.mxu0 0
        %349 = vmatpush1.bf16.msra.mxu0 0
        %350 = vmatprep.subr.bf16.mxu0 0
        %351 = vmatpush1.bf16.msra.mxu0 0
        %352 = vmatprep.subr.bf16.mxu0 0
        %353 = vmatpush1.bf16.msra.mxu0 0
        %354 = vmatprep.subr.bf16.mxu0 0
        %355 = vmatpush1.bf16.msra.mxu0 0
        %356 = vmatprep.subr.bf16.mxu0 0
        %357 = vmatpush1.bf16.msra.mxu0 0
        %358 = vmatprep.subr.bf16.mxu0 0
        %359 = vmatpush1.bf16.msra.mxu0 0
        %360 = vmatprep.subr.bf16.mxu0 0
        %361 = vmatpush1.bf16.msra.mxu0 0
        %362 = vmatprep.mubr.bf16.mxu0 0
        %363 = vmatmul.mubr.bf16.gmra.mrb[0].mxu0 %v312
        %v364 = vpop.f32.mrb[0].mxu0
        %v365 = vadd.f32 0.0, %v364
        %v366 = vpop.f32.mrb[0].mxu0
        %v367 = vpop.f32.mrb[0].mxu0
        %v368 = vadd.f32 0.0, %v367
        %v369 = vpop.f32.mrb[0].mxu0
        %370 = vmatprep.mubr.bf16.mxu0 0
        %371 = vmatmul.mubr.bf16.gmra.mrb[0].mxu0 %v315
        %v372 = vpop.f32.mrb[0].mxu0
        %v373 = vadd.f32 0.0, %v372
        %v374 = vpop.f32.mrb[0].mxu0
        %v375 = vpop.f32.mrb[0].mxu0
        %v376 = vadd.f32 0.0, %v375
        %v377 = vpop.f32.mrb[0].mxu0
        %378 = vmatprep.mubr.bf16.mxu0 0
        %379 = vmatmul.mubr.bf16.gmra.mrb[0].mxu0 %v318
        %v380 = vpop.f32.mrb[0].mxu0
        %v381 = vadd.f32 0.0, %v380
        %v382 = vpop.f32.mrb[0].mxu0
        %v383 = vpop.f32.mrb[0].mxu0
        %v384 = vadd.f32 0.0, %v383
        %v385 = vpop.f32.mrb[0].mxu0
        %386 = vmatprep.mubr.bf16.mxu0 0
        %387 = vmatmul.mubr.bf16.gmra.mrb[0].mxu0 %v321
        %v388 = vpop.f32.mrb[0].mxu0
        %v389 = vadd.f32 0.0, %v388
        %v390 = vpop.f32.mrb[0].mxu0
        %v391 = vpop.f32.mrb[0].mxu0
        %v392 = vadd.f32 0.0, %v391
        %v393 = vpop.f32.mrb[0].mxu0
        %394 = vdwg.mxu0
        %v395 = vmax.f32 %v365, 0.0
        %v396 = vmax.f32 %v368, 0.0
        %v397 = vmax.f32 %v373, 0.0
        %v398 = vmax.f32 %v376, 0.0
        %v399 = vmax.f32 %v381, 0.0
        %v400 = vmax.f32 %v384, 0.0
        %v401 = vmax.f32 %v389, 0.0
        %v402 = vmax.f32 %v392, 0.0
        %403 = vst [vmem:[#allocation2] sm:$0xff] 0.0
        %404 = vst [vmem:[#allocation2 + $0x8] sm:$0xff] 0.0
        %405 = vst [vmem:[#allocation2 + $0x10] sm:$0xff] 0.0
        %406 = vst [vmem:[#allocation2 + $0x18] sm:$0xff] 0.0
        %407 = vst [vmem:[#allocation2 + $0x20] sm:$0x3f] 0.0
        %v408 = vmax.f32 %v395, %v396
        %v410 = vrot.slane %v408, 1
        %v412 = vmax.f32 %v408, %v410
        %413 = vst [vmem:[#allocation2 + $0x7] sm:$0x1] %v412
        %414 = vst [vmem:[#allocation2 + $0x6] sm:$0x4] %v412
        %415 = vst [vmem:[#allocation2 + $0x5] sm:$0x10] %v412
        %416 = vst [vmem:[#allocation2 + $0x4] sm:$0x40] %v412
        %v417 = vmax.f32 %v397, %v398
        %v419 = vrot.slane %v417, 1
        %v421 = vmax.f32 %v417, %v419
        %422 = vst [vmem:[#allocation2 + $0xd] sm:$0x1] %v421
        %423 = vst [vmem:[#allocation2 + $0xc] sm:$0x4] %v421
        %424 = vst [vmem:[#allocation2 + $0xb] sm:$0x10] %v421
        %425 = vst [vmem:[#allocation2 + $0xa] sm:$0x40] %v421
        %v426 = vmax.f32 %v399, %v400
        %v428 = vrot.slane %v426, 1
        %v430 = vmax.f32 %v426, %v428
        %431 = vst [vmem:[#allocation2 + $0x13] sm:$0x1] %v430
        %432 = vst [vmem:[#allocation2 + $0x12] sm:$0x4] %v430
        %433 = vst [vmem:[#allocation2 + $0x11] sm:$0x10] %v430
        %434 = vst [vmem:[#allocation2 + $0x10] sm:$0x40] %v430
        %v435 = vmax.f32 %v401, %v402
        %v437 = vrot.slane %v435, 1
        %v439 = vmax.f32 %v435, %v437
        %440 = vst [vmem:[#allocation2 + $0x19] sm:$0x1] %v439
        %441 = vst [vmem:[#allocation2 + $0x18] sm:$0x4] %v439
        %442 = vst [vmem:[#allocation2 + $0x17] sm:$0x10] %v439
        %443 = vst [vmem:[#allocation2 + $0x16] sm:$0x40] %v439
        %v444 = vld [vmem:[#allocation2] sm:$0xff]
        %v445 = vld [vmem:[#allocation2 + $0x8] sm:$0xff]
        %v446 = vld [vmem:[#allocation2 + $0x10] sm:$0xff]
        %v447 = vpack.c.bf16 %v445, %v444
        %v448 = vpack.c.bf16 %v446, %v446
        %v449 = vld [vmem:[#allocation7] sm:$0xff]
        %v450 = vld [vmem:[#allocation7 + $0x8] sm:$0xff]
        %v451 = vld [vmem:[#allocation7 + $0x10] sm:$0xff]
        %v452 = vld [vmem:[#allocation7 + $0x18] sm:$0xff]
        %v453 = vld [vmem:[#allocation7 + $0x20] sm:$0xff]
        %v454 = vld [vmem:[#allocation7 + $0x28] sm:$0xff]
        %v455 = vld [vmem:[#allocation7 + $0x30] sm:$0xff]
        %v456 = vld [vmem:[#allocation7 + $0x38] sm:$0xff]
        %v457 = vld [vmem:[#allocation7 + $0x40] sm:$0xff]
        %v458 = vld [vmem:[#allocation7 + $0x48] sm:$0xff]
        %v459 = vld [vmem:[#allocation7 + $0x50] sm:$0xff]
        %v460 = vld [vmem:[#allocation7 + $0x58] sm:$0xff]
        %v461 = vld [vmem:[#allocation7 + $0x60] sm:$0xff]
        %v462 = vld [vmem:[#allocation7 + $0x68] sm:$0xff]
        %v463 = vld [vmem:[#allocation7 + $0x70] sm:$0xff]
        %v464 = vld [vmem:[#allocation7 + $0x78] sm:$0xff]
        %v465 = vld [vmem:[#allocation2 + $0x1] sm:$0xff]
        %v466 = vld [vmem:[#allocation2 + $0x9] sm:$0xff]
        %v467 = vld [vmem:[#allocation2 + $0x11] sm:$0xff]
        %v468 = vpack.c.bf16 %v466, %v465
        %v469 = vpack.c.bf16 %v467, %v467
        %s470 = scalar_lea.vmem [#allocation7], 128
        %v471 = vld [vmem:[%s470] sm:$0xff]
        %v472 = vld [vmem:[%s470 + $0x8] sm:$0xff]
        %v473 = vld [vmem:[%s470 + $0x10] sm:$0xff]
        %v474 = vld [vmem:[%s470 + $0x18] sm:$0xff]
        %v475 = vld [vmem:[%s470 + $0x20] sm:$0xff]
        %v476 = vld [vmem:[%s470 + $0x28] sm:$0xff]
        %v477 = vld [vmem:[%s470 + $0x30] sm:$0xff]
        %v478 = vld [vmem:[%s470 + $0x38] sm:$0xff]
        %v479 = vld [vmem:[%s470 + $0x40] sm:$0xff]
        %v480 = vld [vmem:[%s470 + $0x48] sm:$0xff]
        %v481 = vld [vmem:[%s470 + $0x50] sm:$0xff]
        %v482 = vld [vmem:[%s470 + $0x58] sm:$0xff]
        %v483 = vld [vmem:[%s470 + $0x60] sm:$0xff]
        %v484 = vld [vmem:[%s470 + $0x68] sm:$0xff]
        %v485 = vld [vmem:[%s470 + $0x70] sm:$0xff]
        %v486 = vld [vmem:[%s470 + $0x78] sm:$0xff]
        %v503 = vunpack.c.l.b16 %v471
        %v504 = vunpack.c.h.b16 %v471
        %v505 = vunpack.c.l.b16 %v472
        %v506 = vunpack.c.h.b16 %v472
        %v507 = vunpack.c.l.b16 %v473
        %v508 = vunpack.c.h.b16 %v473
        %v509 = vunpack.c.l.b16 %v474
        %v510 = vunpack.c.h.b16 %v474
        %v511 = vunpack.c.l.b16 %v475
        %v512 = vunpack.c.h.b16 %v475
        %v513 = vunpack.c.l.b16 %v476
        %v514 = vunpack.c.h.b16 %v476
        %v515 = vunpack.c.l.b16 %v477
        %v516 = vunpack.c.h.b16 %v477
        %v517 = vunpack.c.l.b16 %v478
        %v518 = vunpack.c.h.b16 %v478
        %v519 = vunpack.c.l.b16 %v479
        %v520 = vunpack.c.h.b16 %v479
        %v521 = vunpack.c.l.b16 %v480
        %v522 = vunpack.c.h.b16 %v480
        %v523 = vunpack.c.l.b16 %v481
        %v524 = vunpack.c.h.b16 %v481
        %v525 = vunpack.c.l.b16 %v482
        %v526 = vunpack.c.h.b16 %v482
        %v527 = vunpack.c.l.b16 %v483
        %v528 = vunpack.c.h.b16 %v483
        %v529 = vunpack.c.l.b16 %v484
        %v530 = vunpack.c.h.b16 %v484
        %v531 = vunpack.c.l.b16 %v485
        %v532 = vunpack.c.h.b16 %v485
        %v533 = vunpack.c.l.b16 %v486
        %v534 = vunpack.c.h.b16 %v486
        %v535 = vpack.c.b16 %v505, %v503
        %v536 = vpack.c.b16 %v506, %v504
        %v537 = vpack.c.b16 %v509, %v507
        %v538 = vpack.c.b16 %v510, %v508
        %v539 = vpack.c.b16 %v513, %v511
        %v540 = vpack.c.b16 %v514, %v512
        %v541 = vpack.c.b16 %v517, %v515
        %v542 = vpack.c.b16 %v518, %v516
        %v543 = vpack.c.b16 %v521, %v519
        %v544 = vpack.c.b16 %v522, %v520
        %v545 = vpack.c.b16 %v525, %v523
        %v546 = vpack.c.b16 %v526, %v524
        %v547 = vpack.c.b16 %v529, %v527
        %v548 = vpack.c.b16 %v530, %v528
        %v549 = vpack.c.b16 %v533, %v531
        %v550 = vpack.c.b16 %v534, %v532
        %567 = vmatprep.subr.bf16.mxu0 %v536
        %568 = vmatpush1.bf16.msra.mxu0 %v535
        %569 = vmatprep.subr.bf16.mxu0 %v538
        %570 = vmatpush1.bf16.msra.mxu0 %v537
        %571 = vmatprep.subr.bf16.mxu0 %v540
        %572 = vmatpush1.bf16.msra.mxu0 %v539
        %573 = vmatprep.subr.bf16.mxu0 %v542
        %574 = vmatpush1.bf16.msra.mxu0 %v541
        %575 = vmatprep.subr.bf16.mxu0 %v544
        %576 = vmatpush1.bf16.msra.mxu0 %v543
        %577 = vmatprep.subr.bf16.mxu0 %v546
        %578 = vmatpush1.bf16.msra.mxu0 %v545
        %579 = vmatprep.subr.bf16.mxu0 %v548
        %580 = vmatpush1.bf16.msra.mxu0 %v547
        %581 = vmatprep.subr.bf16.mxu0 %v550
        %582 = vmatpush1.bf16.msra.mxu0 %v549
        %583 = vmatprep.subr.bf16.mxu0 0
        %584 = vmatpush1.bf16.msra.mxu0 0
        %585 = vmatprep.subr.bf16.mxu0 0
        %586 = vmatpush1.bf16.msra.mxu0 0
        %587 = vmatprep.subr.bf16.mxu0 0
        %588 = vmatpush1.bf16.msra.mxu0 0
        %589 = vmatprep.subr.bf16.mxu0 0
        %590 = vmatpush1.bf16.msra.mxu0 0
        %591 = vmatprep.subr.bf16.mxu0 0
        %592 = vmatpush1.bf16.msra.mxu0 0
        %593 = vmatprep.subr.bf16.mxu0 0
        %594 = vmatpush1.bf16.msra.mxu0 0
        %595 = vmatprep.subr.bf16.mxu0 0
        %596 = vmatpush1.bf16.msra.mxu0 0
        %597 = vmatprep.subr.bf16.mxu0 0
        %598 = vmatpush1.bf16.msra.mxu0 0
        %599 = vmatprep.mubr.bf16.mxu0 0
        %600 = vmatmul.mubr.bf16.gmra.mrb[0].mxu0 %v468
        %v601 = vpop.f32.mrb[0].mxu0
        %v602 = vadd.f32 0.0, %v601
        %v603 = vpop.f32.mrb[0].mxu0
        %v604 = vadd.f32 0.0, %v603
        %v605 = vpop.f32.mrb[0].mxu0
        %v606 = vadd.f32 0.0, %v605
        %v607 = vpop.f32.mrb[0].mxu0
        %v608 = vadd.f32 0.0, %v607
        %609 = vmatprep.mubr.bf16.mxu0 0
        %610 = vmatmul.mubr.bf16.gmra.mrb[0].mxu0 %v469
        %v611 = vpop.f32.mrb[0].mxu0
        %v612 = vadd.f32 0.0, %v611
        %v613 = vpop.f32.mrb[0].mxu0
        %v614 = vadd.f32 0.0, %v613
        %v615 = vpop.f32.mrb[0].mxu0
        %v616 = vpop.f32.mrb[0].mxu0
        %617 = vdwg.mxu0
        %v634 = vunpack.c.l.b16 %v449
        %v635 = vunpack.c.h.b16 %v449
        %v636 = vunpack.c.l.b16 %v450
        %v637 = vunpack.c.h.b16 %v450
        %v638 = vunpack.c.l.b16 %v451
        %v639 = vunpack.c.h.b16 %v451
        %v640 = vunpack.c.l.b16 %v452
        %v641 = vunpack.c.h.b16 %v452
        %v642 = vunpack.c.l.b16 %v453
        %v643 = vunpack.c.h.b16 %v453
        %v644 = vunpack.c.l.b16 %v454
        %v645 = vunpack.c.h.b16 %v454
        %v646 = vunpack.c.l.b16 %v455
        %v647 = vunpack.c.h.b16 %v455
        %v648 = vunpack.c.l.b16 %v456
        %v649 = vunpack.c.h.b16 %v456
        %v650 = vunpack.c.l.b16 %v457
        %v651 = vunpack.c.h.b16 %v457
        %v652 = vunpack.c.l.b16 %v458
        %v653 = vunpack.c.h.b16 %v458
        %v654 = vunpack.c.l.b16 %v459
        %v655 = vunpack.c.h.b16 %v459
        %v656 = vunpack.c.l.b16 %v460
        %v657 = vunpack.c.h.b16 %v460
        %v658 = vunpack.c.l.b16 %v461
        %v659 = vunpack.c.h.b16 %v461
        %v660 = vunpack.c.l.b16 %v462
        %v661 = vunpack.c.h.b16 %v462
        %v662 = vunpack.c.l.b16 %v463
        %v663 = vunpack.c.h.b16 %v463
        %v664 = vunpack.c.l.b16 %v464
        %v665 = vunpack.c.h.b16 %v464
        %v666 = vpack.c.b16 %v636, %v634
        %v667 = vpack.c.b16 %v637, %v635
        %v668 = vpack.c.b16 %v640, %v638
        %v669 = vpack.c.b16 %v641, %v639
        %v670 = vpack.c.b16 %v644, %v642
        %v671 = vpack.c.b16 %v645, %v643
        %v672 = vpack.c.b16 %v648, %v646
        %v673 = vpack.c.b16 %v649, %v647
        %v674 = vpack.c.b16 %v652, %v650
        %v675 = vpack.c.b16 %v653, %v651
        %v676 = vpack.c.b16 %v656, %v654
        %v677 = vpack.c.b16 %v657, %v655
        %v678 = vpack.c.b16 %v660, %v658
        %v679 = vpack.c.b16 %v661, %v659
        %v680 = vpack.c.b16 %v664, %v662
        %v681 = vpack.c.b16 %v665, %v663
        %698 = vmatprep.subr.bf16.mxu0 %v667
        %699 = vmatpush1.bf16.msra.mxu0 %v666
        %700 = vmatprep.subr.bf16.mxu0 %v669
        %701 = vmatpush1.bf16.msra.mxu0 %v668
        %702 = vmatprep.subr.bf16.mxu0 %v671
        %703 = vmatpush1.bf16.msra.mxu0 %v670
        %704 = vmatprep.subr.bf16.mxu0 %v673
        %705 = vmatpush1.bf16.msra.mxu0 %v672
        %706 = vmatprep.subr.bf16.mxu0 %v675
        %707 = vmatpush1.bf16.msra.mxu0 %v674
        %708 = vmatprep.subr.bf16.mxu0 %v677
        %709 = vmatpush1.bf16.msra.mxu0 %v676
        %710 = vmatprep.subr.bf16.mxu0 %v679
        %711 = vmatpush1.bf16.msra.mxu0 %v678
        %712 = vmatprep.subr.bf16.mxu0 %v681
        %713 = vmatpush1.bf16.msra.mxu0 %v680
        %714 = vmatprep.subr.bf16.mxu0 0
        %715 = vmatpush1.bf16.msra.mxu0 0
        %716 = vmatprep.subr.bf16.mxu0 0
        %717 = vmatpush1.bf16.msra.mxu0 0
        %718 = vmatprep.subr.bf16.mxu0 0
        %719 = vmatpush1.bf16.msra.mxu0 0
        %720 = vmatprep.subr.bf16.mxu0 0
        %721 = vmatpush1.bf16.msra.mxu0 0
        %722 = vmatprep.subr.bf16.mxu0 0
        %723 = vmatpush1.bf16.msra.mxu0 0
        %724 = vmatprep.subr.bf16.mxu0 0
        %725 = vmatpush1.bf16.msra.mxu0 0
        %726 = vmatprep.subr.bf16.mxu0 0
        %727 = vmatpush1.bf16.msra.mxu0 0
        %728 = vmatprep.subr.bf16.mxu0 0
        %729 = vmatpush1.bf16.msra.mxu0 0
        %730 = vmatprep.mubr.bf16.mxu0 0
        %731 = vmatmul.mubr.bf16.gmra.mrb[0].mxu0 %v447
        %v732 = vpop.f32.mrb[0].mxu0
        %v733 = vadd.f32 %v602, %v732
        %v734 = vpop.f32.mrb[0].mxu0
        %v735 = vadd.f32 %v604, %v734
        %v736 = vpop.f32.mrb[0].mxu0
        %v737 = vadd.f32 %v606, %v736
        %v738 = vpop.f32.mrb[0].mxu0
        %v739 = vadd.f32 %v608, %v738
        %740 = vmatprep.mubr.bf16.mxu0 0
        %741 = vmatmul.mubr.bf16.gmra.mrb[0].mxu0 %v448
        %v742 = vpop.f32.mrb[0].mxu0
        %v743 = vadd.f32 %v612, %v742
        %v744 = vpop.f32.mrb[0].mxu0
        %v745 = vadd.f32 %v614, %v744
        %v746 = vpop.f32.mrb[0].mxu0
        %v747 = vpop.f32.mrb[0].mxu0
        %748 = vdwg.mxu0
        %v749 = vld [vmem:[#allocation2 + $0x2] sm:$0xff]
        %v750 = vld [vmem:[#allocation2 + $0xa] sm:$0xff]
        %v751 = vld [vmem:[#allocation2 + $0x12] sm:$0xff]
        %v752 = vpack.c.bf16 %v750, %v749
        %v753 = vpack.c.bf16 %v751, %v751
        %s754 = scalar_lea.vmem [#allocation7], 256
        %v755 = vld [vmem:[%s754] sm:$0xff]
        %v756 = vld [vmem:[%s754 + $0x8] sm:$0xff]
        %v757 = vld [vmem:[%s754 + $0x10] sm:$0xff]
        %v758 = vld [vmem:[%s754 + $0x18] sm:$0xff]
        %v759 = vld [vmem:[%s754 + $0x20] sm:$0xff]
        %v760 = vld [vmem:[%s754 + $0x28] sm:$0xff]
        %v761 = vld [vmem:[%s754 + $0x30] sm:$0xff]
        %v762 = vld [vmem:[%s754 + $0x38] sm:$0xff]
        %v763 = vld [vmem:[%s754 + $0x40] sm:$0xff]
        %v764 = vld [vmem:[%s754 + $0x48] sm:$0xff]
        %v765 = vld [vmem:[%s754 + $0x50] sm:$0xff]
        %v766 = vld [vmem:[%s754 + $0x58] sm:$0xff]
        %v767 = vld [vmem:[%s754 + $0x60] sm:$0xff]
        %v768 = vld [vmem:[%s754 + $0x68] sm:$0xff]
        %v769 = vld [vmem:[%s754 + $0x70] sm:$0xff]
        %v770 = vld [vmem:[%s754 + $0x78] sm:$0xff]
        %v787 = vunpack.c.l.b16 %v755
        %v788 = vunpack.c.h.b16 %v755
        %v789 = vunpack.c.l.b16 %v756
        %v790 = vunpack.c.h.b16 %v756
        %v791 = vunpack.c.l.b16 %v757
        %v792 = vunpack.c.h.b16 %v757
        %v793 = vunpack.c.l.b16 %v758
        %v794 = vunpack.c.h.b16 %v758
        %v795 = vunpack.c.l.b16 %v759
        %v796 = vunpack.c.h.b16 %v759
        %v797 = vunpack.c.l.b16 %v760
        %v798 = vunpack.c.h.b16 %v760
        %v799 = vunpack.c.l.b16 %v761
        %v800 = vunpack.c.h.b16 %v761
        %v801 = vunpack.c.l.b16 %v762
        %v802 = vunpack.c.h.b16 %v762
        %v803 = vunpack.c.l.b16 %v763
        %v804 = vunpack.c.h.b16 %v763
        %v805 = vunpack.c.l.b16 %v764
        %v806 = vunpack.c.h.b16 %v764
        %v807 = vunpack.c.l.b16 %v765
        %v808 = vunpack.c.h.b16 %v765
        %v809 = vunpack.c.l.b16 %v766
        %v810 = vunpack.c.h.b16 %v766
        %v811 = vunpack.c.l.b16 %v767
        %v812 = vunpack.c.h.b16 %v767
        %v813 = vunpack.c.l.b16 %v768
        %v814 = vunpack.c.h.b16 %v768
        %v815 = vunpack.c.l.b16 %v769
        %v816 = vunpack.c.h.b16 %v769
        %v817 = vunpack.c.l.b16 %v770
        %v818 = vunpack.c.h.b16 %v770
        %v819 = vpack.c.b16 %v789, %v787
        %v820 = vpack.c.b16 %v790, %v788
        %v821 = vpack.c.b16 %v793, %v791
        %v822 = vpack.c.b16 %v794, %v792
        %v823 = vpack.c.b16 %v797, %v795
        %v824 = vpack.c.b16 %v798, %v796
        %v825 = vpack.c.b16 %v801, %v799
        %v826 = vpack.c.b16 %v802, %v800
        %v827 = vpack.c.b16 %v805, %v803
        %v828 = vpack.c.b16 %v806, %v804
        %v829 = vpack.c.b16 %v809, %v807
        %v830 = vpack.c.b16 %v810, %v808
        %v831 = vpack.c.b16 %v813, %v811
        %v832 = vpack.c.b16 %v814, %v812
        %v833 = vpack.c.b16 %v817, %v815
        %v834 = vpack.c.b16 %v818, %v816
        %851 = vmatprep.subr.bf16.mxu0 %v820
        %852 = vmatpush1.bf16.msra.mxu0 %v819
        %853 = vmatprep.subr.bf16.mxu0 %v822
        %854 = vmatpush1.bf16.msra.mxu0 %v821
        %855 = vmatprep.subr.bf16.mxu0 %v824
        %856 = vmatpush1.bf16.msra.mxu0 %v823
        %857 = vmatprep.subr.bf16.mxu0 %v826
        %858 = vmatpush1.bf16.msra.mxu0 %v825
        %859 = vmatprep.subr.bf16.mxu0 %v828
        %860 = vmatpush1.bf16.msra.mxu0 %v827
        %861 = vmatprep.subr.bf16.mxu0 %v830
        %862 = vmatpush1.bf16.msra.mxu0 %v829
        %863 = vmatprep.subr.bf16.mxu0 %v832
        %864 = vmatpush1.bf16.msra.mxu0 %v831
        %865 = vmatprep.subr.bf16.mxu0 %v834
        %866 = vmatpush1.bf16.msra.mxu0 %v833
        %867 = vmatprep.subr.bf16.mxu0 0
        %868 = vmatpush1.bf16.msra.mxu0 0
        %869 = vmatprep.subr.bf16.mxu0 0
        %870 = vmatpush1.bf16.msra.mxu0 0
        %871 = vmatprep.subr.bf16.mxu0 0
        %872 = vmatpush1.bf16.msra.mxu0 0
        %873 = vmatprep.subr.bf16.mxu0 0
        %874 = vmatpush1.bf16.msra.mxu0 0
        %875 = vmatprep.subr.bf16.mxu0 0
        %876 = vmatpush1.bf16.msra.mxu0 0
        %877 = vmatprep.subr.bf16.mxu0 0
        %878 = vmatpush1.bf16.msra.mxu0 0
        %879 = vmatprep.subr.bf16.mxu0 0
        %880 = vmatpush1.bf16.msra.mxu0 0
        %881 = vmatprep.subr.bf16.mxu0 0
        %882 = vmatpush1.bf16.msra.mxu0 0
        %883 = vmatprep.mubr.bf16.mxu0 0
        %884 = vmatmul.mubr.bf16.gmra.mrb[0].mxu0 %v752
        %v885 = vpop.f32.mrb[0].mxu0
        %v886 = vadd.f32 0.0, %v885
        %v887 = vpop.f32.mrb[0].mxu0
        %v888 = vadd.f32 0.0, %v887
        %v889 = vpop.f32.mrb[0].mxu0
        %v890 = vadd.f32 0.0, %v889
        %v891 = vpop.f32.mrb[0].mxu0
        %v892 = vadd.f32 0.0, %v891
        %893 = vmatprep.mubr.bf16.mxu0 0
        %894 = vmatmul.mubr.bf16.gmra.mrb[0].mxu0 %v753
        %v895 = vpop.f32.mrb[0].mxu0
        %v896 = vadd.f32 0.0, %v895
        %v897 = vpop.f32.mrb[0].mxu0
        %v898 = vadd.f32 0.0, %v897
        %v899 = vpop.f32.mrb[0].mxu0
        %v900 = vpop.f32.mrb[0].mxu0
        %901 = vdwg.mxu0
        %v902 = vadd.f32 %v733, %v886
        %v903 = vadd.f32 %v735, %v888
        %v904 = vadd.f32 %v737, %v890
        %v905 = vadd.f32 %v739, %v892
        %v906 = vadd.f32 %v743, %v896
        %v907 = vadd.f32 %v745, %v898
        %v908 = vld [vmem:[#allocation2 + $0x6] sm:$0xff]
        %v909 = vld [vmem:[#allocation2 + $0xe] sm:$0xff]
        %v910 = vld [vmem:[#allocation2 + $0x16] sm:$0xff]
        %v911 = vpack.c.bf16 %v909, %v908
        %v912 = vpack.c.bf16 %v910, %v910
        %s913 = scalar_lea.vmem [#allocation7], 384
        %v914 = vld [vmem:[%s913] sm:$0xff]
        %v915 = vld [vmem:[%s913 + $0x8] sm:$0xff]
        %v916 = vld [vmem:[%s913 + $0x10] sm:$0xff]
        %v917 = vld [vmem:[%s913 + $0x18] sm:$0xff]
        %v918 = vld [vmem:[%s913 + $0x20] sm:$0xff]
        %v919 = vld [vmem:[%s913 + $0x28] sm:$0xff]
        %v920 = vld [vmem:[%s913 + $0x30] sm:$0xff]
        %v921 = vld [vmem:[%s913 + $0x38] sm:$0xff]
        %v922 = vld [vmem:[%s913 + $0x40] sm:$0xff]
        %v923 = vld [vmem:[%s913 + $0x48] sm:$0xff]
        %v924 = vld [vmem:[%s913 + $0x50] sm:$0xff]
        %v925 = vld [vmem:[%s913 + $0x58] sm:$0xff]
        %v926 = vld [vmem:[%s913 + $0x60] sm:$0xff]
        %v927 = vld [vmem:[%s913 + $0x68] sm:$0xff]
        %v928 = vld [vmem:[%s913 + $0x70] sm:$0xff]
        %v929 = vld [vmem:[%s913 + $0x78] sm:$0xff]
        %v946 = vunpack.c.l.b16 %v914
        %v947 = vunpack.c.h.b16 %v914
        %v948 = vunpack.c.l.b16 %v915
        %v949 = vunpack.c.h.b16 %v915
        %v950 = vunpack.c.l.b16 %v916
        %v951 = vunpack.c.h.b16 %v916
        %v952 = vunpack.c.l.b16 %v917
        %v953 = vunpack.c.h.b16 %v917
        %v954 = vunpack.c.l.b16 %v918
        %v955 = vunpack.c.h.b16 %v918
        %v956 = vunpack.c.l.b16 %v919
        %v957 = vunpack.c.h.b16 %v919
        %v958 = vunpack.c.l.b16 %v920
        %v959 = vunpack.c.h.b16 %v920
        %v960 = vunpack.c.l.b16 %v921
        %v961 = vunpack.c.h.b16 %v921
        %v962 = vunpack.c.l.b16 %v922
        %v963 = vunpack.c.h.b16 %v922
        %v964 = vunpack.c.l.b16 %v923
        %v965 = vunpack.c.h.b16 %v923
        %v966 = vunpack.c.l.b16 %v924
        %v967 = vunpack.c.h.b16 %v924
        %v968 = vunpack.c.l.b16 %v925
        %v969 = vunpack.c.h.b16 %v925
        %v970 = vunpack.c.l.b16 %v926
        %v971 = vunpack.c.h.b16 %v926
        %v972 = vunpack.c.l.b16 %v927
        %v973 = vunpack.c.h.b16 %v927
        %v974 = vunpack.c.l.b16 %v928
        %v975 = vunpack.c.h.b16 %v928
        %v976 = vunpack.c.l.b16 %v929
        %v977 = vunpack.c.h.b16 %v929
        %v978 = vpack.c.b16 %v948, %v946
        %v979 = vpack.c.b16 %v949, %v947
        %v980 = vpack.c.b16 %v952, %v950
        %v981 = vpack.c.b16 %v953, %v951
        %v982 = vpack.c.b16 %v956, %v954
        %v983 = vpack.c.b16 %v957, %v955
        %v984 = vpack.c.b16 %v960, %v958
        %v985 = vpack.c.b16 %v961, %v959
        %v986 = vpack.c.b16 %v964, %v962
        %v987 = vpack.c.b16 %v965, %v963
        %v988 = vpack.c.b16 %v968, %v966
        %v989 = vpack.c.b16 %v969, %v967
        %v990 = vpack.c.b16 %v972, %v970
        %v991 = vpack.c.b16 %v973, %v971
        %v992 = vpack.c.b16 %v976, %v974
        %v993 = vpack.c.b16 %v977, %v975
        %1010 = vmatprep.subr.bf16.mxu0 %v979
        %1011 = vmatpush1.bf16.msra.mxu0 %v978
        %1012 = vmatprep.subr.bf16.mxu0 %v981
        %1013 = vmatpush1.bf16.msra.mxu0 %v980
        %1014 = vmatprep.subr.bf16.mxu0 %v983
        %1015 = vmatpush1.bf16.msra.mxu0 %v982
        %1016 = vmatprep.subr.bf16.mxu0 %v985
        %1017 = vmatpush1.bf16.msra.mxu0 %v984
        %1018 = vmatprep.subr.bf16.mxu0 %v987
        %1019 = vmatpush1.bf16.msra.mxu0 %v986
        %1020 = vmatprep.subr.bf16.mxu0 %v989
        %1021 = vmatpush1.bf16.msra.mxu0 %v988
        %1022 = vmatprep.subr.bf16.mxu0 %v991
        %1023 = vmatpush1.bf16.msra.mxu0 %v990
        %1024 = vmatprep.subr.bf16.mxu0 %v993
        %1025 = vmatpush1.bf16.msra.mxu0 %v992
        %1026 = vmatprep.subr.bf16.mxu0 0
        %1027 = vmatpush1.bf16.msra.mxu0 0
        %1028 = vmatprep.subr.bf16.mxu0 0
        %1029 = vmatpush1.bf16.msra.mxu0 0
        %1030 = vmatprep.subr.bf16.mxu0 0
        %1031 = vmatpush1.bf16.msra.mxu0 0
        %1032 = vmatprep.subr.bf16.mxu0 0
        %1033 = vmatpush1.bf16.msra.mxu0 0
        %1034 = vmatprep.subr.bf16.mxu0 0
        %1035 = vmatpush1.bf16.msra.mxu0 0
        %1036 = vmatprep.subr.bf16.mxu0 0
        %1037 = vmatpush1.bf16.msra.mxu0 0
        %1038 = vmatprep.subr.bf16.mxu0 0
        %1039 = vmatpush1.bf16.msra.mxu0 0
        %1040 = vmatprep.subr.bf16.mxu0 0
        %1041 = vmatpush1.bf16.msra.mxu0 0
        %1042 = vmatprep.mubr.bf16.mxu0 0
        %1043 = vmatmul.mubr.bf16.gmra.mrb[0].mxu0 %v911
        %v1044 = vpop.f32.mrb[0].mxu0
        %v1045 = vadd.f32 0.0, %v1044
        %v1046 = vpop.f32.mrb[0].mxu0
        %v1047 = vadd.f32 0.0, %v1046
        %v1048 = vpop.f32.mrb[0].mxu0
        %v1049 = vadd.f32 0.0, %v1048
        %v1050 = vpop.f32.mrb[0].mxu0
        %v1051 = vadd.f32 0.0, %v1050
        %1052 = vmatprep.mubr.bf16.mxu0 0
        %1053 = vmatmul.mubr.bf16.gmra.mrb[0].mxu0 %v912
        %v1054 = vpop.f32.mrb[0].mxu0
        %v1055 = vadd.f32 0.0, %v1054
        %v1056 = vpop.f32.mrb[0].mxu0
        %v1057 = vadd.f32 0.0, %v1056
        %v1058 = vpop.f32.mrb[0].mxu0
        %v1059 = vpop.f32.mrb[0].mxu0
        %1060 = vdwg.mxu0
        %v1061 = vadd.f32 %v902, %v1045
        %v1062 = vadd.f32 %v903, %v1047
        %v1063 = vadd.f32 %v904, %v1049
        %v1064 = vadd.f32 %v905, %v1051
        %v1065 = vadd.f32 %v906, %v1055
        %v1066 = vadd.f32 %v907, %v1057
        %v1067 = vld [vmem:[#allocation2 + $0x7] sm:$0xff]
        %v1068 = vld [vmem:[#allocation2 + $0xf] sm:$0xff]
        %v1069 = vld [vmem:[#allocation2 + $0x17] sm:$0xff]
        %v1070 = vpack.c.bf16 %v1068, %v1067
        %v1071 = vpack.c.bf16 %v1069, %v1069
        %s1072 = scalar_lea.vmem [#allocation7], 512
        %v1073 = vld [vmem:[%s1072] sm:$0xff]
        %v1074 = vld [vmem:[%s1072 + $0x8] sm:$0xff]
        %v1075 = vld [vmem:[%s1072 + $0x10] sm:$0xff]
        %v1076 = vld [vmem:[%s1072 + $0x18] sm:$0xff]
        %v1077 = vld [vmem:[%s1072 + $0x20] sm:$0xff]
        %v1078 = vld [vmem:[%s1072 + $0x28] sm:$0xff]
        %v1079 = vld [vmem:[%s1072 + $0x30] sm:$0xff]
        %v1080 = vld [vmem:[%s1072 + $0x38] sm:$0xff]
        %v1081 = vld [vmem:[%s1072 + $0x40] sm:$0xff]
        %v1082 = vld [vmem:[%s1072 + $0x48] sm:$0xff]
        %v1083 = vld [vmem:[%s1072 + $0x50] sm:$0xff]
        %v1084 = vld [vmem:[%s1072 + $0x58] sm:$0xff]
        %v1085 = vld [vmem:[%s1072 + $0x60] sm:$0xff]
        %v1086 = vld [vmem:[%s1072 + $0x68] sm:$0xff]
        %v1087 = vld [vmem:[%s1072 + $0x70] sm:$0xff]
        %v1088 = vld [vmem:[%s1072 + $0x78] sm:$0xff]
        %v1105 = vunpack.c.l.b16 %v1073
        %v1106 = vunpack.c.h.b16 %v1073
        %v1107 = vunpack.c.l.b16 %v1074
        %v1108 = vunpack.c.h.b16 %v1074
        %v1109 = vunpack.c.l.b16 %v1075
        %v1110 = vunpack.c.h.b16 %v1075
        %v1111 = vunpack.c.l.b16 %v1076
        %v1112 = vunpack.c.h.b16 %v1076
        %v1113 = vunpack.c.l.b16 %v1077
        %v1114 = vunpack.c.h.b16 %v1077
        %v1115 = vunpack.c.l.b16 %v1078
        %v1116 = vunpack.c.h.b16 %v1078
        %v1117 = vunpack.c.l.b16 %v1079
        %v1118 = vunpack.c.h.b16 %v1079
        %v1119 = vunpack.c.l.b16 %v1080
        %v1120 = vunpack.c.h.b16 %v1080
        %v1121 = vunpack.c.l.b16 %v1081
        %v1122 = vunpack.c.h.b16 %v1081
        %v1123 = vunpack.c.l.b16 %v1082
        %v1124 = vunpack.c.h.b16 %v1082
        %v1125 = vunpack.c.l.b16 %v1083
        %v1126 = vunpack.c.h.b16 %v1083
        %v1127 = vunpack.c.l.b16 %v1084
        %v1128 = vunpack.c.h.b16 %v1084
        %v1129 = vunpack.c.l.b16 %v1085
        %v1130 = vunpack.c.h.b16 %v1085
        %v1131 = vunpack.c.l.b16 %v1086
        %v1132 = vunpack.c.h.b16 %v1086
        %v1133 = vunpack.c.l.b16 %v1087
        %v1134 = vunpack.c.h.b16 %v1087
        %v1135 = vunpack.c.l.b16 %v1088
        %v1136 = vunpack.c.h.b16 %v1088
        %v1137 = vpack.c.b16 %v1107, %v1105
        %v1138 = vpack.c.b16 %v1108, %v1106
        %v1139 = vpack.c.b16 %v1111, %v1109
        %v1140 = vpack.c.b16 %v1112, %v1110
        %v1141 = vpack.c.b16 %v1115, %v1113
        %v1142 = vpack.c.b16 %v1116, %v1114
        %v1143 = vpack.c.b16 %v1119, %v1117
        %v1144 = vpack.c.b16 %v1120, %v1118
        %v1145 = vpack.c.b16 %v1123, %v1121
        %v1146 = vpack.c.b16 %v1124, %v1122
        %v1147 = vpack.c.b16 %v1127, %v1125
        %v1148 = vpack.c.b16 %v1128, %v1126
        %v1149 = vpack.c.b16 %v1131, %v1129
        %v1150 = vpack.c.b16 %v1132, %v1130
        %v1151 = vpack.c.b16 %v1135, %v1133
        %v1152 = vpack.c.b16 %v1136, %v1134
        %1169 = vmatprep.subr.bf16.mxu0 %v1138
        %1170 = vmatpush1.bf16.msra.mxu0 %v1137
        %1171 = vmatprep.subr.bf16.mxu0 %v1140
        %1172 = vmatpush1.bf16.msra.mxu0 %v1139
        %1173 = vmatprep.subr.bf16.mxu0 %v1142
        %1174 = vmatpush1.bf16.msra.mxu0 %v1141
        %1175 = vmatprep.subr.bf16.mxu0 %v1144
        %1176 = vmatpush1.bf16.msra.mxu0 %v1143
        %1177 = vmatprep.subr.bf16.mxu0 %v1146
        %1178 = vmatpush1.bf16.msra.mxu0 %v1145
        %1179 = vmatprep.subr.bf16.mxu0 %v1148
        %1180 = vmatpush1.bf16.msra.mxu0 %v1147
        %1181 = vmatprep.subr.bf16.mxu0 %v1150
        %1182 = vmatpush1.bf16.msra.mxu0 %v1149
        %1183 = vmatprep.subr.bf16.mxu0 %v1152
        %1184 = vmatpush1.bf16.msra.mxu0 %v1151
        %1185 = vmatprep.subr.bf16.mxu0 0
        %1186 = vmatpush1.bf16.msra.mxu0 0
        %1187 = vmatprep.subr.bf16.mxu0 0
        %1188 = vmatpush1.bf16.msra.mxu0 0
        %1189 = vmatprep.subr.bf16.mxu0 0
        %1190 = vmatpush1.bf16.msra.mxu0 0
        %1191 = vmatprep.subr.bf16.mxu0 0
        %1192 = vmatpush1.bf16.msra.mxu0 0
        %1193 = vmatprep.subr.bf16.mxu0 0
        %1194 = vmatpush1.bf16.msra.mxu0 0
        %1195 = vmatprep.subr.bf16.mxu0 0
        %1196 = vmatpush1.bf16.msra.mxu0 0
        %1197 = vmatprep.subr.bf16.mxu0 0
        %1198 = vmatpush1.bf16.msra.mxu0 0
        %1199 = vmatprep.subr.bf16.mxu0 0
        %1200 = vmatpush1.bf16.msra.mxu0 0
        %1201 = vmatprep.mubr.bf16.mxu0 0
        %1202 = vmatmul.mubr.bf16.gmra.mrb[0].mxu0 %v1070
        %v1203 = vpop.f32.mrb[0].mxu0
        %v1204 = vadd.f32 0.0, %v1203
        %v1205 = vpop.f32.mrb[0].mxu0
        %v1206 = vadd.f32 0.0, %v1205
        %v1207 = vpop.f32.mrb[0].mxu0
        %v1208 = vadd.f32 0.0, %v1207
        %v1209 = vpop.f32.mrb[0].mxu0
        %v1210 = vadd.f32 0.0, %v1209
        %1211 = vmatprep.mubr.bf16.mxu0 0
        %1212 = vmatmul.mubr.bf16.gmra.mrb[0].mxu0 %v1071
        %v1213 = vpop.f32.mrb[0].mxu0
        %v1214 = vadd.f32 0.0, %v1213
        %v1215 = vpop.f32.mrb[0].mxu0
        %v1216 = vadd.f32 0.0, %v1215
        %v1217 = vpop.f32.mrb[0].mxu0
        %v1218 = vpop.f32.mrb[0].mxu0
        %1219 = vdwg.mxu0
        %v1220 = vadd.f32 %v1061, %v1204
        %v1221 = vadd.f32 %v1062, %v1206
        %v1222 = vadd.f32 %v1063, %v1208
        %v1223 = vadd.f32 %v1064, %v1210
        %v1224 = vadd.f32 %v1065, %v1214
        %v1225 = vadd.f32 %v1066, %v1216
        %v1226 = vld [vmem:[#allocation2 + $0x8] sm:$0xff]
        %v1227 = vld [vmem:[#allocation2 + $0x10] sm:$0xff]
        %v1228 = vld [vmem:[#allocation2 + $0x18] sm:$0xff]
        %v1229 = vpack.c.bf16 %v1227, %v1226
        %v1230 = vpack.c.bf16 %v1228, %v1228
        %s1231 = scalar_lea.vmem [#allocation7], 640
        %v1232 = vld [vmem:[%s1231] sm:$0xff]
        %v1233 = vld [vmem:[%s1231 + $0x8] sm:$0xff]
        %v1234 = vld [vmem:[%s1231 + $0x10] sm:$0xff]
        %v1235 = vld [vmem:[%s1231 + $0x18] sm:$0xff]
        %v1236 = vld [vmem:[%s1231 + $0x20] sm:$0xff]
        %v1237 = vld [vmem:[%s1231 + $0x28] sm:$0xff]
        %v1238 = vld [vmem:[%s1231 + $0x30] sm:$0xff]
        %v1239 = vld [vmem:[%s1231 + $0x38] sm:$0xff]
        %v1240 = vld [vmem:[%s1231 + $0x40] sm:$0xff]
        %v1241 = vld [vmem:[%s1231 + $0x48] sm:$0xff]
        %v1242 = vld [vmem:[%s1231 + $0x50] sm:$0xff]
        %v1243 = vld [vmem:[%s1231 + $0x58] sm:$0xff]
        %v1244 = vld [vmem:[%s1231 + $0x60] sm:$0xff]
        %v1245 = vld [vmem:[%s1231 + $0x68] sm:$0xff]
        %v1246 = vld [vmem:[%s1231 + $0x70] sm:$0xff]
        %v1247 = vld [vmem:[%s1231 + $0x78] sm:$0xff]
        %v1264 = vunpack.c.l.b16 %v1232
        %v1265 = vunpack.c.h.b16 %v1232
        %v1266 = vunpack.c.l.b16 %v1233
        %v1267 = vunpack.c.h.b16 %v1233
        %v1268 = vunpack.c.l.b16 %v1234
        %v1269 = vunpack.c.h.b16 %v1234
        %v1270 = vunpack.c.l.b16 %v1235
        %v1271 = vunpack.c.h.b16 %v1235
        %v1272 = vunpack.c.l.b16 %v1236
        %v1273 = vunpack.c.h.b16 %v1236
        %v1274 = vunpack.c.l.b16 %v1237
        %v1275 = vunpack.c.h.b16 %v1237
        %v1276 = vunpack.c.l.b16 %v1238
        %v1277 = vunpack.c.h.b16 %v1238
        %v1278 = vunpack.c.l.b16 %v1239
        %v1279 = vunpack.c.h.b16 %v1239
        %v1280 = vunpack.c.l.b16 %v1240
        %v1281 = vunpack.c.h.b16 %v1240
        %v1282 = vunpack.c.l.b16 %v1241
        %v1283 = vunpack.c.h.b16 %v1241
        %v1284 = vunpack.c.l.b16 %v1242
        %v1285 = vunpack.c.h.b16 %v1242
        %v1286 = vunpack.c.l.b16 %v1243
        %v1287 = vunpack.c.h.b16 %v1243
        %v1288 = vunpack.c.l.b16 %v1244
        %v1289 = vunpack.c.h.b16 %v1244
        %v1290 = vunpack.c.l.b16 %v1245
        %v1291 = vunpack.c.h.b16 %v1245
        %v1292 = vunpack.c.l.b16 %v1246
        %v1293 = vunpack.c.h.b16 %v1246
        %v1294 = vunpack.c.l.b16 %v1247
        %v1295 = vunpack.c.h.b16 %v1247
        %v1296 = vpack.c.b16 %v1266, %v1264
        %v1297 = vpack.c.b16 %v1267, %v1265
        %v1298 = vpack.c.b16 %v1270, %v1268
        %v1299 = vpack.c.b16 %v1271, %v1269
        %v1300 = vpack.c.b16 %v1274, %v1272
        %v1301 = vpack.c.b16 %v1275, %v1273
        %v1302 = vpack.c.b16 %v1278, %v1276
        %v1303 = vpack.c.b16 %v1279, %v1277
        %v1304 = vpack.c.b16 %v1282, %v1280
        %v1305 = vpack.c.b16 %v1283, %v1281
        %v1306 = vpack.c.b16 %v1286, %v1284
        %v1307 = vpack.c.b16 %v1287, %v1285
        %v1308 = vpack.c.b16 %v1290, %v1288
        %v1309 = vpack.c.b16 %v1291, %v1289
        %v1310 = vpack.c.b16 %v1294, %v1292
        %v1311 = vpack.c.b16 %v1295, %v1293
        %1328 = vmatprep.subr.bf16.mxu0 %v1297
        %1329 = vmatpush1.bf16.msra.mxu0 %v1296
        %1330 = vmatprep.subr.bf16.mxu0 %v1299
        %1331 = vmatpush1.bf16.msra.mxu0 %v1298
        %1332 = vmatprep.subr.bf16.mxu0 %v1301
        %1333 = vmatpush1.bf16.msra.mxu0 %v1300
        %1334 = vmatprep.subr.bf16.mxu0 %v1303
        %1335 = vmatpush1.bf16.msra.mxu0 %v1302
        %1336 = vmatprep.subr.bf16.mxu0 %v1305
        %1337 = vmatpush1.bf16.msra.mxu0 %v1304
        %1338 = vmatprep.subr.bf16.mxu0 %v1307
        %1339 = vmatpush1.bf16.msra.mxu0 %v1306
        %1340 = vmatprep.subr.bf16.mxu0 %v1309
        %1341 = vmatpush1.bf16.msra.mxu0 %v1308
        %1342 = vmatprep.subr.bf16.mxu0 %v1311
        %1343 = vmatpush1.bf16.msra.mxu0 %v1310
        %1344 = vmatprep.subr.bf16.mxu0 0
        %1345 = vmatpush1.bf16.msra.mxu0 0
        %1346 = vmatprep.subr.bf16.mxu0 0
        %1347 = vmatpush1.bf16.msra.mxu0 0
        %1348 = vmatprep.subr.bf16.mxu0 0
        %1349 = vmatpush1.bf16.msra.mxu0 0
        %1350 = vmatprep.subr.bf16.mxu0 0
        %1351 = vmatpush1.bf16.msra.mxu0 0
        %1352 = vmatprep.subr.bf16.mxu0 0
        %1353 = vmatpush1.bf16.msra.mxu0 0
        %1354 = vmatprep.subr.bf16.mxu0 0
        %1355 = vmatpush1.bf16.msra.mxu0 0
        %1356 = vmatprep.subr.bf16.mxu0 0
        %1357 = vmatpush1.bf16.msra.mxu0 0
        %1358 = vmatprep.subr.bf16.mxu0 0
        %1359 = vmatpush1.bf16.msra.mxu0 0
        %1360 = vmatprep.mubr.bf16.mxu0 0
        %1361 = vmatmul.mubr.bf16.gmra.mrb[0].mxu0 %v1229
        %v1362 = vpop.f32.mrb[0].mxu0
        %v1363 = vadd.f32 0.0, %v1362
        %v1364 = vpop.f32.mrb[0].mxu0
        %v1365 = vadd.f32 0.0, %v1364
        %v1366 = vpop.f32.mrb[0].mxu0
        %v1367 = vadd.f32 0.0, %v1366
        %v1368 = vpop.f32.mrb[0].mxu0
        %v1369 = vadd.f32 0.0, %v1368
        %1370 = vmatprep.mubr.bf16.mxu0 0
        %1371 = vmatmul.mubr.bf16.gmra.mrb[0].mxu0 %v1230
        %v1372 = vpop.f32.mrb[0].mxu0
        %v1373 = vadd.f32 0.0, %v1372
        %v1374 = vpop.f32.mrb[0].mxu0
        %v1375 = vadd.f32 0.0, %v1374
        %v1376 = vpop.f32.mrb[0].mxu0
        %v1377 = vpop.f32.mrb[0].mxu0
        %1378 = vdwg.mxu0
        %v1379 = vadd.f32 %v1220, %v1363
        %v1380 = vadd.f32 %v1221, %v1365
        %v1381 = vadd.f32 %v1222, %v1367
        %v1382 = vadd.f32 %v1223, %v1369
        %v1383 = vadd.f32 %v1224, %v1373
        %v1384 = vadd.f32 %v1225, %v1375
        %v1385 = vld [vmem:[#allocation2 + $0xc] sm:$0xff]
        %v1386 = vld [vmem:[#allocation2 + $0x14] sm:$0xff]
        %v1387 = vld [vmem:[#allocation2 + $0x1c] sm:$0xff]
        %v1388 = vpack.c.bf16 %v1386, %v1385
        %v1389 = vpack.c.bf16 %v1387, %v1387
        %s1390 = scalar_lea.vmem [#allocation7], 768
        %v1391 = vld [vmem:[%s1390] sm:$0xff]
        %v1392 = vld [vmem:[%s1390 + $0x8] sm:$0xff]
        %v1393 = vld [vmem:[%s1390 + $0x10] sm:$0xff]
        %v1394 = vld [vmem:[%s1390 + $0x18] sm:$0xff]
        %v1395 = vld [vmem:[%s1390 + $0x20] sm:$0xff]
        %v1396 = vld [vmem:[%s1390 + $0x28] sm:$0xff]
        %v1397 = vld [vmem:[%s1390 + $0x30] sm:$0xff]
        %v1398 = vld [vmem:[%s1390 + $0x38] sm:$0xff]
        %v1399 = vld [vmem:[%s1390 + $0x40] sm:$0xff]
        %v1400 = vld [vmem:[%s1390 + $0x48] sm:$0xff]
        %v1401 = vld [vmem:[%s1390 + $0x50] sm:$0xff]
        %v1402 = vld [vmem:[%s1390 + $0x58] sm:$0xff]
        %v1403 = vld [vmem:[%s1390 + $0x60] sm:$0xff]
        %v1404 = vld [vmem:[%s1390 + $0x68] sm:$0xff]
        %v1405 = vld [vmem:[%s1390 + $0x70] sm:$0xff]
        %v1406 = vld [vmem:[%s1390 + $0x78] sm:$0xff]
        %v1423 = vunpack.c.l.b16 %v1391
        %v1424 = vunpack.c.h.b16 %v1391
        %v1425 = vunpack.c.l.b16 %v1392
        %v1426 = vunpack.c.h.b16 %v1392
        %v1427 = vunpack.c.l.b16 %v1393
        %v1428 = vunpack.c.h.b16 %v1393
        %v1429 = vunpack.c.l.b16 %v1394
        %v1430 = vunpack.c.h.b16 %v1394
        %v1431 = vunpack.c.l.b16 %v1395
        %v1432 = vunpack.c.h.b16 %v1395
        %v1433 = vunpack.c.l.b16 %v1396
        %v1434 = vunpack.c.h.b16 %v1396
        %v1435 = vunpack.c.l.b16 %v1397
        %v1436 = vunpack.c.h.b16 %v1397
        %v1437 = vunpack.c.l.b16 %v1398
        %v1438 = vunpack.c.h.b16 %v1398
        %v1439 = vunpack.c.l.b16 %v1399
        %v1440 = vunpack.c.h.b16 %v1399
        %v1441 = vunpack.c.l.b16 %v1400
        %v1442 = vunpack.c.h.b16 %v1400
        %v1443 = vunpack.c.l.b16 %v1401
        %v1444 = vunpack.c.h.b16 %v1401
        %v1445 = vunpack.c.l.b16 %v1402
        %v1446 = vunpack.c.h.b16 %v1402
        %v1447 = vunpack.c.l.b16 %v1403
        %v1448 = vunpack.c.h.b16 %v1403
        %v1449 = vunpack.c.l.b16 %v1404
        %v1450 = vunpack.c.h.b16 %v1404
        %v1451 = vunpack.c.l.b16 %v1405
        %v1452 = vunpack.c.h.b16 %v1405
        %v1453 = vunpack.c.l.b16 %v1406
        %v1454 = vunpack.c.h.b16 %v1406
        %v1455 = vpack.c.b16 %v1425, %v1423
        %v1456 = vpack.c.b16 %v1426, %v1424
        %v1457 = vpack.c.b16 %v1429, %v1427
        %v1458 = vpack.c.b16 %v1430, %v1428
        %v1459 = vpack.c.b16 %v1433, %v1431
        %v1460 = vpack.c.b16 %v1434, %v1432
        %v1461 = vpack.c.b16 %v1437, %v1435
        %v1462 = vpack.c.b16 %v1438, %v1436
        %v1463 = vpack.c.b16 %v1441, %v1439
        %v1464 = vpack.c.b16 %v1442, %v1440
        %v1465 = vpack.c.b16 %v1445, %v1443
        %v1466 = vpack.c.b16 %v1446, %v1444
        %v1467 = vpack.c.b16 %v1449, %v1447
        %v1468 = vpack.c.b16 %v1450, %v1448
        %v1469 = vpack.c.b16 %v1453, %v1451
        %v1470 = vpack.c.b16 %v1454, %v1452
        %1487 = vmatprep.subr.bf16.mxu0 %v1456
        %1488 = vmatpush1.bf16.msra.mxu0 %v1455
        %1489 = vmatprep.subr.bf16.mxu0 %v1458
        %1490 = vmatpush1.bf16.msra.mxu0 %v1457
        %1491 = vmatprep.subr.bf16.mxu0 %v1460
        %1492 = vmatpush1.bf16.msra.mxu0 %v1459
        %1493 = vmatprep.subr.bf16.mxu0 %v1462
        %1494 = vmatpush1.bf16.msra.mxu0 %v1461
        %1495 = vmatprep.subr.bf16.mxu0 %v1464
        %1496 = vmatpush1.bf16.msra.mxu0 %v1463
        %1497 = vmatprep.subr.bf16.mxu0 %v1466
        %1498 = vmatpush1.bf16.msra.mxu0 %v1465
        %1499 = vmatprep.subr.bf16.mxu0 %v1468
        %1500 = vmatpush1.bf16.msra.mxu0 %v1467
        %1501 = vmatprep.subr.bf16.mxu0 %v1470
        %1502 = vmatpush1.bf16.msra.mxu0 %v1469
        %1503 = vmatprep.subr.bf16.mxu0 0
        %1504 = vmatpush1.bf16.msra.mxu0 0
        %1505 = vmatprep.subr.bf16.mxu0 0
        %1506 = vmatpush1.bf16.msra.mxu0 0
        %1507 = vmatprep.subr.bf16.mxu0 0
        %1508 = vmatpush1.bf16.msra.mxu0 0
        %1509 = vmatprep.subr.bf16.mxu0 0
        %1510 = vmatpush1.bf16.msra.mxu0 0
        %1511 = vmatprep.subr.bf16.mxu0 0
        %1512 = vmatpush1.bf16.msra.mxu0 0
        %1513 = vmatprep.subr.bf16.mxu0 0
        %1514 = vmatpush1.bf16.msra.mxu0 0
        %1515 = vmatprep.subr.bf16.mxu0 0
        %1516 = vmatpush1.bf16.msra.mxu0 0
        %1517 = vmatprep.subr.bf16.mxu0 0
        %1518 = vmatpush1.bf16.msra.mxu0 0
        %1519 = vmatprep.mubr.bf16.mxu0 0
        %1520 = vmatmul.mubr.bf16.gmra.mrb[0].mxu0 %v1388
        %v1521 = vpop.f32.mrb[0].mxu0
        %v1522 = vadd.f32 0.0, %v1521
        %v1523 = vpop.f32.mrb[0].mxu0
        %v1524 = vadd.f32 0.0, %v1523
        %v1525 = vpop.f32.mrb[0].mxu0
        %v1526 = vadd.f32 0.0, %v1525
        %v1527 = vpop.f32.mrb[0].mxu0
        %v1528 = vadd.f32 0.0, %v1527
        %1529 = vmatprep.mubr.bf16.mxu0 0
        %1530 = vmatmul.mubr.bf16.gmra.mrb[0].mxu0 %v1389
        %v1531 = vpop.f32.mrb[0].mxu0
        %v1532 = vadd.f32 0.0, %v1531
        %v1533 = vpop.f32.mrb[0].mxu0
        %v1534 = vadd.f32 0.0, %v1533
        %v1535 = vpop.f32.mrb[0].mxu0
        %v1536 = vpop.f32.mrb[0].mxu0
        %1537 = vdwg.mxu0
        %v1538 = vadd.f32 %v1379, %v1522
        %v1539 = vadd.f32 %v1380, %v1524
        %v1540 = vadd.f32 %v1381, %v1526
        %v1541 = vadd.f32 %v1382, %v1528
        %v1542 = vadd.f32 %v1383, %v1532
        %v1543 = vadd.f32 %v1384, %v1534
        %v1544 = vld [vmem:[#allocation2 + $0xd] sm:$0xff]
        %v1545 = vld [vmem:[#allocation2 + $0x15] sm:$0xff]
        %v1546 = vld [vmem:[#allocation2 + $0x1d] sm:$0xff]
        %v1547 = vpack.c.bf16 %v1545, %v1544
        %v1548 = vpack.c.bf16 %v1546, %v1546
        %s1549 = scalar_lea.vmem [#allocation7], 896
        %v1550 = vld [vmem:[%s1549] sm:$0xff]
        %v1551 = vld [vmem:[%s1549 + $0x8] sm:$0xff]
        %v1552 = vld [vmem:[%s1549 + $0x10] sm:$0xff]
        %v1553 = vld [vmem:[%s1549 + $0x18] sm:$0xff]
        %v1554 = vld [vmem:[%s1549 + $0x20] sm:$0xff]
        %v1555 = vld [vmem:[%s1549 + $0x28] sm:$0xff]
        %v1556 = vld [vmem:[%s1549 + $0x30] sm:$0xff]
        %v1557 = vld [vmem:[%s1549 + $0x38] sm:$0xff]
        %v1558 = vld [vmem:[%s1549 + $0x40] sm:$0xff]
        %v1559 = vld [vmem:[%s1549 + $0x48] sm:$0xff]
        %v1560 = vld [vmem:[%s1549 + $0x50] sm:$0xff]
        %v1561 = vld [vmem:[%s1549 + $0x58] sm:$0xff]
        %v1562 = vld [vmem:[%s1549 + $0x60] sm:$0xff]
        %v1563 = vld [vmem:[%s1549 + $0x68] sm:$0xff]
        %v1564 = vld [vmem:[%s1549 + $0x70] sm:$0xff]
        %v1565 = vld [vmem:[%s1549 + $0x78] sm:$0xff]
        %v1582 = vunpack.c.l.b16 %v1550
        %v1583 = vunpack.c.h.b16 %v1550
        %v1584 = vunpack.c.l.b16 %v1551
        %v1585 = vunpack.c.h.b16 %v1551
        %v1586 = vunpack.c.l.b16 %v1552
        %v1587 = vunpack.c.h.b16 %v1552
        %v1588 = vunpack.c.l.b16 %v1553
        %v1589 = vunpack.c.h.b16 %v1553
        %v1590 = vunpack.c.l.b16 %v1554
        %v1591 = vunpack.c.h.b16 %v1554
        %v1592 = vunpack.c.l.b16 %v1555
        %v1593 = vunpack.c.h.b16 %v1555
        %v1594 = vunpack.c.l.b16 %v1556
        %v1595 = vunpack.c.h.b16 %v1556
        %v1596 = vunpack.c.l.b16 %v1557
        %v1597 = vunpack.c.h.b16 %v1557
        %v1598 = vunpack.c.l.b16 %v1558
        %v1599 = vunpack.c.h.b16 %v1558
        %v1600 = vunpack.c.l.b16 %v1559
        %v1601 = vunpack.c.h.b16 %v1559
        %v1602 = vunpack.c.l.b16 %v1560
        %v1603 = vunpack.c.h.b16 %v1560
        %v1604 = vunpack.c.l.b16 %v1561
        %v1605 = vunpack.c.h.b16 %v1561
        %v1606 = vunpack.c.l.b16 %v1562
        %v1607 = vunpack.c.h.b16 %v1562
        %v1608 = vunpack.c.l.b16 %v1563
        %v1609 = vunpack.c.h.b16 %v1563
        %v1610 = vunpack.c.l.b16 %v1564
        %v1611 = vunpack.c.h.b16 %v1564
        %v1612 = vunpack.c.l.b16 %v1565
        %v1613 = vunpack.c.h.b16 %v1565
        %v1614 = vpack.c.b16 %v1584, %v1582
        %v1615 = vpack.c.b16 %v1585, %v1583
        %v1616 = vpack.c.b16 %v1588, %v1586
        %v1617 = vpack.c.b16 %v1589, %v1587
        %v1618 = vpack.c.b16 %v1592, %v1590
        %v1619 = vpack.c.b16 %v1593, %v1591
        %v1620 = vpack.c.b16 %v1596, %v1594
        %v1621 = vpack.c.b16 %v1597, %v1595
        %v1622 = vpack.c.b16 %v1600, %v1598
        %v1623 = vpack.c.b16 %v1601, %v1599
        %v1624 = vpack.c.b16 %v1604, %v1602
        %v1625 = vpack.c.b16 %v1605, %v1603
        %v1626 = vpack.c.b16 %v1608, %v1606
        %v1627 = vpack.c.b16 %v1609, %v1607
        %v1628 = vpack.c.b16 %v1612, %v1610
        %v1629 = vpack.c.b16 %v1613, %v1611
        %1646 = vmatprep.subr.bf16.mxu0 %v1615
        %1647 = vmatpush1.bf16.msra.mxu0 %v1614
        %1648 = vmatprep.subr.bf16.mxu0 %v1617
        %1649 = vmatpush1.bf16.msra.mxu0 %v1616
        %1650 = vmatprep.subr.bf16.mxu0 %v1619
        %1651 = vmatpush1.bf16.msra.mxu0 %v1618
        %1652 = vmatprep.subr.bf16.mxu0 %v1621
        %1653 = vmatpush1.bf16.msra.mxu0 %v1620
        %1654 = vmatprep.subr.bf16.mxu0 %v1623
        %1655 = vmatpush1.bf16.msra.mxu0 %v1622
        %1656 = vmatprep.subr.bf16.mxu0 %v1625
        %1657 = vmatpush1.bf16.msra.mxu0 %v1624
        %1658 = vmatprep.subr.bf16.mxu0 %v1627
        %1659 = vmatpush1.bf16.msra.mxu0 %v1626
        %1660 = vmatprep.subr.bf16.mxu0 %v1629
        %1661 = vmatpush1.bf16.msra.mxu0 %v1628
        %1662 = vmatprep.subr.bf16.mxu0 0
        %1663 = vmatpush1.bf16.msra.mxu0 0
        %1664 = vmatprep.subr.bf16.mxu0 0
        %1665 = vmatpush1.bf16.msra.mxu0 0
        %1666 = vmatprep.subr.bf16.mxu0 0
        %1667 = vmatpush1.bf16.msra.mxu0 0
        %1668 = vmatprep.subr.bf16.mxu0 0
        %1669 = vmatpush1.bf16.msra.mxu0 0
        %1670 = vmatprep.subr.bf16.mxu0 0
        %1671 = vmatpush1.bf16.msra.mxu0 0
        %1672 = vmatprep.subr.bf16.mxu0 0
        %1673 = vmatpush1.bf16.msra.mxu0 0
        %1674 = vmatprep.subr.bf16.mxu0 0
        %1675 = vmatpush1.bf16.msra.mxu0 0
        %1676 = vmatprep.subr.bf16.mxu0 0
        %1677 = vmatpush1.bf16.msra.mxu0 0
        %1678 = vmatprep.mubr.bf16.mxu0 0
        %1679 = vmatmul.mubr.bf16.gmra.mrb[0].mxu0 %v1547
        %v1680 = vpop.f32.mrb[0].mxu0
        %v1681 = vadd.f32 0.0, %v1680
        %v1682 = vpop.f32.mrb[0].mxu0
        %v1683 = vadd.f32 0.0, %v1682
        %v1684 = vpop.f32.mrb[0].mxu0
        %v1685 = vadd.f32 0.0, %v1684
        %v1686 = vpop.f32.mrb[0].mxu0
        %v1687 = vadd.f32 0.0, %v1686
        %1688 = vmatprep.mubr.bf16.mxu0 0
        %1689 = vmatmul.mubr.bf16.gmra.mrb[0].mxu0 %v1548
        %v1690 = vpop.f32.mrb[0].mxu0
        %v1691 = vadd.f32 0.0, %v1690
        %v1692 = vpop.f32.mrb[0].mxu0
        %v1693 = vadd.f32 0.0, %v1692
        %v1694 = vpop.f32.mrb[0].mxu0
        %v1695 = vpop.f32.mrb[0].mxu0
        %1696 = vdwg.mxu0
        %v1697 = vadd.f32 %v1538, %v1681
        %v1698 = vadd.f32 %v1539, %v1683
        %v1699 = vadd.f32 %v1540, %v1685
        %v1700 = vadd.f32 %v1541, %v1687
        %v1701 = vadd.f32 %v1542, %v1691
        %v1702 = vadd.f32 %v1543, %v1693
        %v1703 = vld [vmem:[#allocation2 + $0xe] sm:$0xff]
        %v1704 = vld [vmem:[#allocation2 + $0x16] sm:$0xff]
        %v1705 = vld [vmem:[#allocation2 + $0x1e] sm:$0xff]
        %v1706 = vpack.c.bf16 %v1704, %v1703
        %v1707 = vpack.c.bf16 %v1705, %v1705
        %s1708 = scalar_lea.vmem [#allocation7], 1024
        %v1709 = vld [vmem:[%s1708] sm:$0xff]
        %v1710 = vld [vmem:[%s1708 + $0x8] sm:$0xff]
        %v1711 = vld [vmem:[%s1708 + $0x10] sm:$0xff]
        %v1712 = vld [vmem:[%s1708 + $0x18] sm:$0xff]
        %v1713 = vld [vmem:[%s1708 + $0x20] sm:$0xff]
        %v1714 = vld [vmem:[%s1708 + $0x28] sm:$0xff]
        %v1715 = vld [vmem:[%s1708 + $0x30] sm:$0xff]
        %v1716 = vld [vmem:[%s1708 + $0x38] sm:$0xff]
        %v1717 = vld [vmem:[%s1708 + $0x40] sm:$0xff]
        %v1718 = vld [vmem:[%s1708 + $0x48] sm:$0xff]
        %v1719 = vld [vmem:[%s1708 + $0x50] sm:$0xff]
        %v1720 = vld [vmem:[%s1708 + $0x58] sm:$0xff]
        %v1721 = vld [vmem:[%s1708 + $0x60] sm:$0xff]
        %v1722 = vld [vmem:[%s1708 + $0x68] sm:$0xff]
        %v1723 = vld [vmem:[%s1708 + $0x70] sm:$0xff]
        %v1724 = vld [vmem:[%s1708 + $0x78] sm:$0xff]
        %v1741 = vunpack.c.l.b16 %v1709
        %v1742 = vunpack.c.h.b16 %v1709
        %v1743 = vunpack.c.l.b16 %v1710
        %v1744 = vunpack.c.h.b16 %v1710
        %v1745 = vunpack.c.l.b16 %v1711
        %v1746 = vunpack.c.h.b16 %v1711
        %v1747 = vunpack.c.l.b16 %v1712
        %v1748 = vunpack.c.h.b16 %v1712
        %v1749 = vunpack.c.l.b16 %v1713
        %v1750 = vunpack.c.h.b16 %v1713
        %v1751 = vunpack.c.l.b16 %v1714
        %v1752 = vunpack.c.h.b16 %v1714
        %v1753 = vunpack.c.l.b16 %v1715
        %v1754 = vunpack.c.h.b16 %v1715
        %v1755 = vunpack.c.l.b16 %v1716
        %v1756 = vunpack.c.h.b16 %v1716
        %v1757 = vunpack.c.l.b16 %v1717
        %v1758 = vunpack.c.h.b16 %v1717
        %v1759 = vunpack.c.l.b16 %v1718
        %v1760 = vunpack.c.h.b16 %v1718
        %v1761 = vunpack.c.l.b16 %v1719
        %v1762 = vunpack.c.h.b16 %v1719
        %v1763 = vunpack.c.l.b16 %v1720
        %v1764 = vunpack.c.h.b16 %v1720
        %v1765 = vunpack.c.l.b16 %v1721
        %v1766 = vunpack.c.h.b16 %v1721
        %v1767 = vunpack.c.l.b16 %v1722
        %v1768 = vunpack.c.h.b16 %v1722
        %v1769 = vunpack.c.l.b16 %v1723
        %v1770 = vunpack.c.h.b16 %v1723
        %v1771 = vunpack.c.l.b16 %v1724
        %v1772 = vunpack.c.h.b16 %v1724
        %v1773 = vpack.c.b16 %v1743, %v1741
        %v1774 = vpack.c.b16 %v1744, %v1742
        %v1775 = vpack.c.b16 %v1747, %v1745
        %v1776 = vpack.c.b16 %v1748, %v1746
        %v1777 = vpack.c.b16 %v1751, %v1749
        %v1778 = vpack.c.b16 %v1752, %v1750
        %v1779 = vpack.c.b16 %v1755, %v1753
        %v1780 = vpack.c.b16 %v1756, %v1754
        %v1781 = vpack.c.b16 %v1759, %v1757
        %v1782 = vpack.c.b16 %v1760, %v1758
        %v1783 = vpack.c.b16 %v1763, %v1761
        %v1784 = vpack.c.b16 %v1764, %v1762
        %v1785 = vpack.c.b16 %v1767, %v1765
        %v1786 = vpack.c.b16 %v1768, %v1766
        %v1787 = vpack.c.b16 %v1771, %v1769
        %v1788 = vpack.c.b16 %v1772, %v1770
        %1805 = vmatprep.subr.bf16.mxu0 %v1774
        %1806 = vmatpush1.bf16.msra.mxu0 %v1773
        %1807 = vmatprep.subr.bf16.mxu0 %v1776
        %1808 = vmatpush1.bf16.msra.mxu0 %v1775
        %1809 = vmatprep.subr.bf16.mxu0 %v1778
        %1810 = vmatpush1.bf16.msra.mxu0 %v1777
        %1811 = vmatprep.subr.bf16.mxu0 %v1780
        %1812 = vmatpush1.bf16.msra.mxu0 %v1779
        %1813 = vmatprep.subr.bf16.mxu0 %v1782
        %1814 = vmatpush1.bf16.msra.mxu0 %v1781
        %1815 = vmatprep.subr.bf16.mxu0 %v1784
        %1816 = vmatpush1.bf16.msra.mxu0 %v1783
        %1817 = vmatprep.subr.bf16.mxu0 %v1786
        %1818 = vmatpush1.bf16.msra.mxu0 %v1785
        %1819 = vmatprep.subr.bf16.mxu0 %v1788
        %1820 = vmatpush1.bf16.msra.mxu0 %v1787
        %1821 = vmatprep.subr.bf16.mxu0 0
        %1822 = vmatpush1.bf16.msra.mxu0 0
        %1823 = vmatprep.subr.bf16.mxu0 0
        %1824 = vmatpush1.bf16.msra.mxu0 0
        %1825 = vmatprep.subr.bf16.mxu0 0
        %1826 = vmatpush1.bf16.msra.mxu0 0
        %1827 = vmatprep.subr.bf16.mxu0 0
        %1828 = vmatpush1.bf16.msra.mxu0 0
        %1829 = vmatprep.subr.bf16.mxu0 0
        %1830 = vmatpush1.bf16.msra.mxu0 0
        %1831 = vmatprep.subr.bf16.mxu0 0
        %1832 = vmatpush1.bf16.msra.mxu0 0
        %1833 = vmatprep.subr.bf16.mxu0 0
        %1834 = vmatpush1.bf16.msra.mxu0 0
        %1835 = vmatprep.subr.bf16.mxu0 0
        %1836 = vmatpush1.bf16.msra.mxu0 0
        %1837 = vmatprep.mubr.bf16.mxu0 0
        %1838 = vmatmul.mubr.bf16.gmra.mrb[0].mxu0 %v1706
        %v1839 = vpop.f32.mrb[0].mxu0
        %v1840 = vadd.f32 0.0, %v1839
        %v1841 = vpop.f32.mrb[0].mxu0
        %v1842 = vadd.f32 0.0, %v1841
        %v1843 = vpop.f32.mrb[0].mxu0
        %v1844 = vadd.f32 0.0, %v1843
        %v1845 = vpop.f32.mrb[0].mxu0
        %v1846 = vadd.f32 0.0, %v1845
        %1847 = vmatprep.mubr.bf16.mxu0 0
        %1848 = vmatmul.mubr.bf16.gmra.mrb[0].mxu0 %v1707
        %v1849 = vpop.f32.mrb[0].mxu0
        %v1850 = vadd.f32 0.0, %v1849
        %v1851 = vpop.f32.mrb[0].mxu0
        %v1852 = vadd.f32 0.0, %v1851
        %v1853 = vpop.f32.mrb[0].mxu0
        %v1854 = vpop.f32.mrb[0].mxu0
        %1855 = vdwg.mxu0
        %v1856 = vadd.f32 %v1697, %v1840
        %v1857 = vadd.f32 %v1698, %v1842
        %v1858 = vadd.f32 %v1699, %v1844
        %v1859 = vadd.f32 %v1700, %v1846
        %v1860 = vadd.f32 %v1701, %v1850
        %v1861 = vadd.f32 %v1702, %v1852
        %v1862 = vmax.f32 %v1856, 0.0
        %v1863 = vmax.f32 %v1857, 0.0
        %v1864 = vmax.f32 %v1858, 0.0
        %v1865 = vmax.f32 %v1859, 0.0
        %v1866 = vmax.f32 %v1860, 0.0
        %v1867 = vmax.f32 %v1861, 0.0
        %1868 = vst [vmem:[#allocation3] sm:$0xff] 0.0
        %1869 = vst [vmem:[#allocation3 + $0x8] sm:$0xff] 0.0
        %1870 = vst [vmem:[#allocation3 + $0x10] sm:$0xff] 0.0
        %1871 = vst [vmem:[#allocation3 + $0x18] sm:$0xff] 0.0
        %1872 = vst [vmem:[#allocation3 + $0x20] sm:$0x3] 0.0
        %1873 = vst [vmem:[#allocation3 + $0x28] sm:$0x3] 0.0
        %vm1878 = vcmask 1041408
        %v1879 = vrot.slane %v1862, 6
        %v1880 = vrot.slane %v1864, 6
        %v1881 = vsel %vm1878, %v1879, %v1880
        %v1882 = vrot.slane %v1863, 6
        %v1883 = vrot.slane %v1865, 6
        %v1884 = vsel %vm1878, %v1882, %v1883
        %v1887 = vmax.f32 %v1862, %v1881
        %v1888 = vmax.f32 %v1863, %v1884
        %v1891 = vrot.slane %v1887, 1
        %v1892 = vrot.slane %v1888, 1
        %v1895 = vmax.f32 %v1887, %v1891
        %v1896 = vmax.f32 %v1888, %v1892
        %v1899 = vcombine.low %v1895, %v1896
        %v1901 = vunpack.c.l.s4 1966171168
        %v1902 = vunpack.c.0.s8 %v1901
        %v1903 = vlaneseq
        %v1904 = vshrl.u32 %v1903, 7
        %v1905 = vsub.s32 %v1902, %v1904
        %v1906 = vrot.slane %v1899, %v1905
        %v1908 = vunpack.c.l.s4 1966171168
        %v1909 = vunpack.c.0.s8 %v1908
        %v1910 = vlaneseq
        %v1911 = vshrl.u32 %v1910, 7
        %v1912 = vsub.s32 %v1909, %v1911
        %v1913 = vrot.slane %v1906, %v1912
        %v1915 = vlaneseq
        %vm1916 = vcmp.ge.s32.totalorder %v1915, 0
        %vm1917 = vcmp.lt.s32.totalorder %v1915, 256
        %vm1918 = vmand %vm1916, %vm1917
        %s1919 = scalar_lea.vmem [#allocation3], 5
        %1920 = vst.msk [vmem:[%s1919] ss:$8 sm:$0x3] %vm1918, %v1913
        %1921 = vst.msk [vmem:[%s1919] ss:$8 sm:$0x0] %vm1918, %v1913
        %v1922 = vcombine.high %v1913, %v1913
        %s1924 = scalar_lea.vmem [#allocation3], 6
        %1925 = vst.msk [vmem:[%s1924] ss:$8 sm:$0x3] %vm1918, %v1922
        %1926 = vst.msk [vmem:[%s1924] ss:$8 sm:$0x0] %vm1918, %v1922
        %v1929 = vrot.slane %v1866, 6
        %v1930 = vrot.slane %v1867, 6
        %v1933 = vmax.f32 %v1864, %v1929
        %v1934 = vmax.f32 %v1865, %v1930
        %v1937 = vrot.slane %v1933, 1
        %v1938 = vrot.slane %v1934, 1
        %v1941 = vmax.f32 %v1933, %v1937
        %v1942 = vmax.f32 %v1934, %v1938
        %v1945 = vcombine.high %v1941, %v1942
        %v1947 = vunpack.c.l.s4 1966171168
        %v1948 = vunpack.c.0.s8 %v1947
        %v1949 = vlaneseq
        %v1950 = vshrl.u32 %v1949, 7
        %v1951 = vsub.s32 %v1948, %v1950
        %v1952 = vrot.slane %v1945, %v1951
        %v1954 = vunpack.c.l.s4 1966171168
        %v1955 = vunpack.c.0.s8 %v1954
        %v1956 = vlaneseq
        %v1957 = vshrl.u32 %v1956, 7
        %v1958 = vsub.s32 %v1955, %v1957
        %v1959 = vrot.slane %v1952, %v1958
        %s1961 = scalar_lea.vmem [#allocation3], 17
        %1962 = vst.msk [vmem:[%s1961] ss:$8 sm:$0x3] %vm1918, %v1959
        %1963 = vst.msk [vmem:[%s1961] ss:$8 sm:$0x0] %vm1918, %v1959
        %v1964 = vcombine.high %v1959, %v1959
        %s1966 = scalar_lea.vmem [#allocation3], 18
        %1967 = vst.msk [vmem:[%s1966] ss:$8 sm:$0x3] %vm1918, %v1964
        %1968 = vst.msk [vmem:[%s1966] ss:$8 sm:$0x0] %vm1918, %v1964
        %v1969 = vld [vmem:[#allocation3] sm:$0xff]
        %v1970 = vld [vmem:[#allocation3 + $0x8] sm:$0xff]
        %v1971 = vpack.c.bf16 %v1969, %v1969
        %v1972 = vpack.c.bf16 %v1970, %v1970
        %v1973 = vld [vmem:[#allocation9] sm:$0xff]
        %v1974 = vld [vmem:[#allocation9 + $0x8] sm:$0xff]
        %v1975 = vld [vmem:[#allocation9 + $0x10] sm:$0xff]
        %v1976 = vld [vmem:[#allocation9 + $0x18] sm:$0xff]
        %v1977 = vld [vmem:[#allocation9 + $0x20] sm:$0xff]
        %v1978 = vld [vmem:[#allocation9 + $0x28] sm:$0xff]
        %v1979 = vld [vmem:[#allocation9 + $0x30] sm:$0xff]
        %v1980 = vld [vmem:[#allocation9 + $0x38] sm:$0xff]
        %v1981 = vld [vmem:[#allocation9 + $0x40] sm:$0xff]
        %v1982 = vld [vmem:[#allocation9 + $0x48] sm:$0xff]
        %v1983 = vld [vmem:[#allocation9 + $0x50] sm:$0xff]
        %v1984 = vld [vmem:[#allocation9 + $0x58] sm:$0xff]
        %v1985 = vld [vmem:[#allocation9 + $0x60] sm:$0xff]
        %v1986 = vld [vmem:[#allocation9 + $0x68] sm:$0xff]
        %v1987 = vld [vmem:[#allocation9 + $0x70] sm:$0xff]
        %v1988 = vld [vmem:[#allocation9 + $0x78] sm:$0xff]
        %v1989 = vld [vmem:[#allocation9 + $0x80] sm:$0xff]
        %v1990 = vld [vmem:[#allocation9 + $0x88] sm:$0xff]
        %v1991 = vld [vmem:[#allocation9 + $0x90] sm:$0xff]
        %v1992 = vld [vmem:[#allocation9 + $0x98] sm:$0xff]
        %v1993 = vld [vmem:[#allocation9 + $0xa0] sm:$0xff]
        %v1994 = vld [vmem:[#allocation9 + $0xa8] sm:$0xff]
        %v1995 = vld [vmem:[#allocation9 + $0xb0] sm:$0xff]
        %v1996 = vld [vmem:[#allocation9 + $0xb8] sm:$0xff]
        %v1997 = vld [vmem:[#allocation9 + $0xc0] sm:$0xff]
        %v1998 = vld [vmem:[#allocation9 + $0xc8] sm:$0xff]
        %v1999 = vld [vmem:[#allocation9 + $0xd0] sm:$0xff]
        %v2000 = vld [vmem:[#allocation9 + $0xd8] sm:$0xff]
        %v2001 = vld [vmem:[#allocation9 + $0xe0] sm:$0xff]
        %v2002 = vld [vmem:[#allocation9 + $0xe8] sm:$0xff]
        %v2003 = vld [vmem:[#allocation9 + $0xf0] sm:$0xff]
        %v2004 = vld [vmem:[#allocation9 + $0xf8] sm:$0xff]
        %v2005 = vld [vmem:[#allocation9 + $0x100] sm:$0xff]
        %v2006 = vld [vmem:[#allocation9 + $0x108] sm:$0xff]
        %v2007 = vld [vmem:[#allocation9 + $0x110] sm:$0xff]
        %v2008 = vld [vmem:[#allocation9 + $0x118] sm:$0xff]
        %v2009 = vld [vmem:[#allocation9 + $0x120] sm:$0xff]
        %v2010 = vld [vmem:[#allocation9 + $0x128] sm:$0xff]
        %v2011 = vld [vmem:[#allocation9 + $0x130] sm:$0xff]
        %v2012 = vld [vmem:[#allocation9 + $0x138] sm:$0xff]
        %v2013 = vld [vmem:[#allocation9 + $0x140] sm:$0xff]
        %v2014 = vld [vmem:[#allocation9 + $0x148] sm:$0xff]
        %v2015 = vld [vmem:[#allocation9 + $0x150] sm:$0xff]
        %v2016 = vld [vmem:[#allocation9 + $0x158] sm:$0xff]
        %v2017 = vld [vmem:[#allocation9 + $0x160] sm:$0xff]
        %v2018 = vld [vmem:[#allocation9 + $0x168] sm:$0xff]
        %v2019 = vld [vmem:[#allocation9 + $0x170] sm:$0xff]
        %v2020 = vld [vmem:[#allocation9 + $0x178] sm:$0xff]
        %v2021 = vld [vmem:[#allocation9 + $0x180] sm:$0xff]
        %v2022 = vld [vmem:[#allocation9 + $0x188] sm:$0xff]
        %v2023 = vld [vmem:[#allocation9 + $0x190] sm:$0xff]
        %v2024 = vld [vmem:[#allocation9 + $0x198] sm:$0xff]
        %v2025 = vld [vmem:[#allocation9 + $0x1a0] sm:$0xff]
        %v2026 = vld [vmem:[#allocation9 + $0x1a8] sm:$0xff]
        %v2027 = vld [vmem:[#allocation9 + $0x1b0] sm:$0xff]
        %v2028 = vld [vmem:[#allocation9 + $0x1b8] sm:$0xff]
        %v2029 = vld [vmem:[#allocation9 + $0x1c0] sm:$0xff]
        %v2030 = vld [vmem:[#allocation9 + $0x1c8] sm:$0xff]
        %v2031 = vld [vmem:[#allocation9 + $0x1d0] sm:$0xff]
        %v2032 = vld [vmem:[#allocation9 + $0x1d8] sm:$0xff]
        %v2033 = vld [vmem:[#allocation9 + $0x1e0] sm:$0xff]
        %v2034 = vld [vmem:[#allocation9 + $0x1e8] sm:$0xff]
        %v2035 = vld [vmem:[#allocation9 + $0x1f0] sm:$0xff]
        %v2036 = vld [vmem:[#allocation9 + $0x1f8] sm:$0xff]
        %v2037 = vld [vmem:[#allocation3] sm:$0xfe]
        %v2038 = vld [vmem:[#allocation3 + $0x8] sm:$0xfe]
        %v2039 = vld [vmem:[#allocation3 + $0x10] sm:$0x1]
        %v2040 = vld [vmem:[#allocation3 + $0x18] sm:$0x1]
        %v2041 = vpack.c.bf16 %v2039, %v2037
        %v2042 = vpack.c.bf16 %v2040, %v2038
        %s2043 = scalar_lea.vmem [#allocation9], 512
        %v2044 = vld [vmem:[%s2043] sm:$0xff]
        %v2045 = vld [vmem:[%s2043 + $0x8] sm:$0xff]
        %v2046 = vld [vmem:[%s2043 + $0x10] sm:$0xff]
        %v2047 = vld [vmem:[%s2043 + $0x18] sm:$0xff]
        %v2048 = vld [vmem:[%s2043 + $0x20] sm:$0xff]
        %v2049 = vld [vmem:[%s2043 + $0x28] sm:$0xff]
        %v2050 = vld [vmem:[%s2043 + $0x30] sm:$0xff]
        %v2051 = vld [vmem:[%s2043 + $0x38] sm:$0xff]
        %v2052 = vld [vmem:[%s2043 + $0x40] sm:$0xff]
        %v2053 = vld [vmem:[%s2043 + $0x48] sm:$0xff]
        %v2054 = vld [vmem:[%s2043 + $0x50] sm:$0xff]
        %v2055 = vld [vmem:[%s2043 + $0x58] sm:$0xff]
        %v2056 = vld [vmem:[%s2043 + $0x60] sm:$0xff]
        %v2057 = vld [vmem:[%s2043 + $0x68] sm:$0xff]
        %v2058 = vld [vmem:[%s2043 + $0x70] sm:$0xff]
        %v2059 = vld [vmem:[%s2043 + $0x78] sm:$0xff]
        %v2060 = vld [vmem:[%s2043 + $0x80] sm:$0xff]
        %v2061 = vld [vmem:[%s2043 + $0x88] sm:$0xff]
        %v2062 = vld [vmem:[%s2043 + $0x90] sm:$0xff]
        %v2063 = vld [vmem:[%s2043 + $0x98] sm:$0xff]
        %v2064 = vld [vmem:[%s2043 + $0xa0] sm:$0xff]
        %v2065 = vld [vmem:[%s2043 + $0xa8] sm:$0xff]
        %v2066 = vld [vmem:[%s2043 + $0xb0] sm:$0xff]
        %v2067 = vld [vmem:[%s2043 + $0xb8] sm:$0xff]
        %v2068 = vld [vmem:[%s2043 + $0xc0] sm:$0xff]
        %v2069 = vld [vmem:[%s2043 + $0xc8] sm:$0xff]
        %v2070 = vld [vmem:[%s2043 + $0xd0] sm:$0xff]
        %v2071 = vld [vmem:[%s2043 + $0xd8] sm:$0xff]
        %v2072 = vld [vmem:[%s2043 + $0xe0] sm:$0xff]
        %v2073 = vld [vmem:[%s2043 + $0xe8] sm:$0xff]
        %v2074 = vld [vmem:[%s2043 + $0xf0] sm:$0xff]
        %v2075 = vld [vmem:[%s2043 + $0xf8] sm:$0xff]
        %v2076 = vld [vmem:[%s2043 + $0x100] sm:$0xff]
        %v2077 = vld [vmem:[%s2043 + $0x108] sm:$0xff]
        %v2078 = vld [vmem:[%s2043 + $0x110] sm:$0xff]
        %v2079 = vld [vmem:[%s2043 + $0x118] sm:$0xff]
        %v2080 = vld [vmem:[%s2043 + $0x120] sm:$0xff]
        %v2081 = vld [vmem:[%s2043 + $0x128] sm:$0xff]
        %v2082 = vld [vmem:[%s2043 + $0x130] sm:$0xff]
        %v2083 = vld [vmem:[%s2043 + $0x138] sm:$0xff]
        %v2084 = vld [vmem:[%s2043 + $0x140] sm:$0xff]
        %v2085 = vld [vmem:[%s2043 + $0x148] sm:$0xff]
        %v2086 = vld [vmem:[%s2043 + $0x150] sm:$0xff]
        %v2087 = vld [vmem:[%s2043 + $0x158] sm:$0xff]
        %v2088 = vld [vmem:[%s2043 + $0x160] sm:$0xff]
        %v2089 = vld [vmem:[%s2043 + $0x168] sm:$0xff]
        %v2090 = vld [vmem:[%s2043 + $0x170] sm:$0xff]
        %v2091 = vld [vmem:[%s2043 + $0x178] sm:$0xff]
        %v2092 = vld [vmem:[%s2043 + $0x180] sm:$0xff]
        %v2093 = vld [vmem:[%s2043 + $0x188] sm:$0xff]
        %v2094 = vld [vmem:[%s2043 + $0x190] sm:$0xff]
        %v2095 = vld [vmem:[%s2043 + $0x198] sm:$0xff]
        %v2096 = vld [vmem:[%s2043 + $0x1a0] sm:$0xff]
        %v2097 = vld [vmem:[%s2043 + $0x1a8] sm:$0xff]
        %v2098 = vld [vmem:[%s2043 + $0x1b0] sm:$0xff]
        %v2099 = vld [vmem:[%s2043 + $0x1b8] sm:$0xff]
        %v2100 = vld [vmem:[%s2043 + $0x1c0] sm:$0xff]
        %v2101 = vld [vmem:[%s2043 + $0x1c8] sm:$0xff]
        %v2102 = vld [vmem:[%s2043 + $0x1d0] sm:$0xff]
        %v2103 = vld [vmem:[%s2043 + $0x1d8] sm:$0xff]
        %v2104 = vld [vmem:[%s2043 + $0x1e0] sm:$0xff]
        %v2105 = vld [vmem:[%s2043 + $0x1e8] sm:$0xff]
        %v2106 = vld [vmem:[%s2043 + $0x1f0] sm:$0xff]
        %v2107 = vld [vmem:[%s2043 + $0x1f8] sm:$0xff]
        %v2109 = vshrl.u32 %v2041, 16
        %v2111 = vshll.u32 %v2041, 16
        %v2113 = vrot.slane %v2111, 1
        %v2114 = vor.u32 %v2109, %v2113
        %v2116 = vshrl.u32 %v2042, 16
        %v2118 = vshll.u32 %v2042, 16
        %v2120 = vrot.slane %v2118, 1
        %v2121 = vor.u32 %v2116, %v2120
        %v2188 = vunpack.c.l.b16 %v2044
        %v2189 = vunpack.c.h.b16 %v2044
        %v2190 = vunpack.c.l.b16 %v2045
        %v2191 = vunpack.c.h.b16 %v2045
        %v2192 = vunpack.c.l.b16 %v2046
        %v2193 = vunpack.c.h.b16 %v2046
        %v2194 = vunpack.c.l.b16 %v2047
        %v2195 = vunpack.c.h.b16 %v2047
        %v2196 = vunpack.c.l.b16 %v2048
        %v2197 = vunpack.c.h.b16 %v2048
        %v2198 = vunpack.c.l.b16 %v2049
        %v2199 = vunpack.c.h.b16 %v2049
        %v2200 = vunpack.c.l.b16 %v2050
        %v2201 = vunpack.c.h.b16 %v2050
        %v2202 = vunpack.c.l.b16 %v2051
        %v2203 = vunpack.c.h.b16 %v2051
        %v2204 = vunpack.c.l.b16 %v2052
        %v2205 = vunpack.c.h.b16 %v2052
        %v2206 = vunpack.c.l.b16 %v2053
        %v2207 = vunpack.c.h.b16 %v2053
        %v2208 = vunpack.c.l.b16 %v2054
        %v2209 = vunpack.c.h.b16 %v2054
        %v2210 = vunpack.c.l.b16 %v2055
        %v2211 = vunpack.c.h.b16 %v2055
        %v2212 = vunpack.c.l.b16 %v2056
        %v2213 = vunpack.c.h.b16 %v2056
        %v2214 = vunpack.c.l.b16 %v2057
        %v2215 = vunpack.c.h.b16 %v2057
        %v2216 = vunpack.c.l.b16 %v2058
        %v2217 = vunpack.c.h.b16 %v2058
        %v2218 = vunpack.c.l.b16 %v2059
        %v2219 = vunpack.c.h.b16 %v2059
        %v2220 = vunpack.c.l.b16 %v2060
        %v2221 = vunpack.c.h.b16 %v2060
        %v2222 = vunpack.c.l.b16 %v2061
        %v2223 = vunpack.c.h.b16 %v2061
        %v2224 = vunpack.c.l.b16 %v2062
        %v2225 = vunpack.c.h.b16 %v2062
        %v2226 = vunpack.c.l.b16 %v2063
        %v2227 = vunpack.c.h.b16 %v2063
        %v2228 = vunpack.c.l.b16 %v2064
        %v2229 = vunpack.c.h.b16 %v2064
        %v2230 = vunpack.c.l.b16 %v2065
        %v2231 = vunpack.c.h.b16 %v2065
        %v2232 = vunpack.c.l.b16 %v2066
        %v2233 = vunpack.c.h.b16 %v2066
        %v2234 = vunpack.c.l.b16 %v2067
        %v2235 = vunpack.c.h.b16 %v2067
        %v2236 = vunpack.c.l.b16 %v2068
        %v2237 = vunpack.c.h.b16 %v2068
        %v2238 = vunpack.c.l.b16 %v2069
        %v2239 = vunpack.c.h.b16 %v2069
        %v2240 = vunpack.c.l.b16 %v2070
        %v2241 = vunpack.c.h.b16 %v2070
        %v2242 = vunpack.c.l.b16 %v2071
        %v2243 = vunpack.c.h.b16 %v2071
        %v2244 = vunpack.c.l.b16 %v2072
        %v2245 = vunpack.c.h.b16 %v2072
        %v2246 = vunpack.c.l.b16 %v2073
        %v2247 = vunpack.c.h.b16 %v2073
        %v2248 = vunpack.c.l.b16 %v2074
        %v2249 = vunpack.c.h.b16 %v2074
        %v2250 = vunpack.c.l.b16 %v2075
        %v2251 = vunpack.c.h.b16 %v2075
        %v2252 = vunpack.c.l.b16 %v2076
        %v2253 = vunpack.c.h.b16 %v2076
        %v2254 = vunpack.c.l.b16 %v2077
        %v2255 = vunpack.c.h.b16 %v2077
        %v2256 = vunpack.c.l.b16 %v2078
        %v2257 = vunpack.c.h.b16 %v2078
        %v2258 = vunpack.c.l.b16 %v2079
        %v2259 = vunpack.c.h.b16 %v2079
        %v2260 = vunpack.c.l.b16 %v2080
        %v2261 = vunpack.c.h.b16 %v2080
        %v2262 = vunpack.c.l.b16 %v2081
        %v2263 = vunpack.c.h.b16 %v2081
        %v2264 = vunpack.c.l.b16 %v2082
        %v2265 = vunpack.c.h.b16 %v2082
        %v2266 = vunpack.c.l.b16 %v2083
        %v2267 = vunpack.c.h.b16 %v2083
        %v2268 = vunpack.c.l.b16 %v2084
        %v2269 = vunpack.c.h.b16 %v2084
        %v2270 = vunpack.c.l.b16 %v2085
        %v2271 = vunpack.c.h.b16 %v2085
        %v2272 = vunpack.c.l.b16 %v2086
        %v2273 = vunpack.c.h.b16 %v2086
        %v2274 = vunpack.c.l.b16 %v2087
        %v2275 = vunpack.c.h.b16 %v2087
        %v2276 = vunpack.c.l.b16 %v2088
        %v2277 = vunpack.c.h.b16 %v2088
        %v2278 = vunpack.c.l.b16 %v2089
        %v2279 = vunpack.c.h.b16 %v2089
        %v2280 = vunpack.c.l.b16 %v2090
        %v2281 = vunpack.c.h.b16 %v2090
        %v2282 = vunpack.c.l.b16 %v2091
        %v2283 = vunpack.c.h.b16 %v2091
        %v2284 = vunpack.c.l.b16 %v2092
        %v2285 = vunpack.c.h.b16 %v2092
        %v2286 = vunpack.c.l.b16 %v2093
        %v2287 = vunpack.c.h.b16 %v2093
        %v2288 = vunpack.c.l.b16 %v2094
        %v2289 = vunpack.c.h.b16 %v2094
        %v2290 = vunpack.c.l.b16 %v2095
        %v2291 = vunpack.c.h.b16 %v2095
        %v2292 = vunpack.c.l.b16 %v2096
        %v2293 = vunpack.c.h.b16 %v2096
        %v2294 = vunpack.c.l.b16 %v2097
        %v2295 = vunpack.c.h.b16 %v2097
        %v2296 = vunpack.c.l.b16 %v2098
        %v2297 = vunpack.c.h.b16 %v2098
        %v2298 = vunpack.c.l.b16 %v2099
        %v2299 = vunpack.c.h.b16 %v2099
        %v2300 = vunpack.c.l.b16 %v2100
        %v2301 = vunpack.c.h.b16 %v2100
        %v2302 = vunpack.c.l.b16 %v2101
        %v2303 = vunpack.c.h.b16 %v2101
        %v2304 = vunpack.c.l.b16 %v2102
        %v2305 = vunpack.c.h.b16 %v2102
        %v2306 = vunpack.c.l.b16 %v2103
        %v2307 = vunpack.c.h.b16 %v2103
        %v2308 = vunpack.c.l.b16 %v2104
        %v2309 = vunpack.c.h.b16 %v2104
        %v2310 = vunpack.c.l.b16 %v2105
        %v2311 = vunpack.c.h.b16 %v2105
        %v2312 = vunpack.c.l.b16 %v2106
        %v2313 = vunpack.c.h.b16 %v2106
        %v2314 = vunpack.c.l.b16 %v2107
        %v2315 = vunpack.c.h.b16 %v2107
        %v2316 = vpack.c.b16 %v2192, %v2188
        %v2317 = vpack.c.b16 %v2193, %v2189
        %v2318 = vpack.c.b16 %v2194, %v2190
        %v2319 = vpack.c.b16 %v2195, %v2191
        %v2320 = vpack.c.b16 %v2200, %v2196
        %v2321 = vpack.c.b16 %v2201, %v2197
        %v2322 = vpack.c.b16 %v2202, %v2198
        %v2323 = vpack.c.b16 %v2203, %v2199
        %v2324 = vpack.c.b16 %v2208, %v2204
        %v2325 = vpack.c.b16 %v2209, %v2205
        %v2326 = vpack.c.b16 %v2210, %v2206
        %v2327 = vpack.c.b16 %v2211, %v2207
        %v2328 = vpack.c.b16 %v2216, %v2212
        %v2329 = vpack.c.b16 %v2217, %v2213
        %v2330 = vpack.c.b16 %v2218, %v2214
        %v2331 = vpack.c.b16 %v2219, %v2215
        %v2332 = vpack.c.b16 %v2224, %v2220
        %v2333 = vpack.c.b16 %v2225, %v2221
        %v2334 = vpack.c.b16 %v2226, %v2222
        %v2335 = vpack.c.b16 %v2227, %v2223
        %v2336 = vpack.c.b16 %v2232, %v2228
        %v2337 = vpack.c.b16 %v2233, %v2229
        %v2338 = vpack.c.b16 %v2234, %v2230
        %v2339 = vpack.c.b16 %v2235, %v2231
        %v2340 = vpack.c.b16 %v2240, %v2236
        %v2341 = vpack.c.b16 %v2241, %v2237
        %v2342 = vpack.c.b16 %v2242, %v2238
        %v2343 = vpack.c.b16 %v2243, %v2239
        %v2344 = vpack.c.b16 %v2248, %v2244
        %v2345 = vpack.c.b16 %v2249, %v2245
        %v2346 = vpack.c.b16 %v2250, %v2246
        %v2347 = vpack.c.b16 %v2251, %v2247
        %v2348 = vpack.c.b16 %v2256, %v2252
        %v2349 = vpack.c.b16 %v2257, %v2253
        %v2350 = vpack.c.b16 %v2258, %v2254
        %v2351 = vpack.c.b16 %v2259, %v2255
        %v2352 = vpack.c.b16 %v2264, %v2260
        %v2353 = vpack.c.b16 %v2265, %v2261
        %v2354 = vpack.c.b16 %v2266, %v2262
        %v2355 = vpack.c.b16 %v2267, %v2263
        %v2356 = vpack.c.b16 %v2272, %v2268
        %v2357 = vpack.c.b16 %v2273, %v2269
        %v2358 = vpack.c.b16 %v2274, %v2270
        %v2359 = vpack.c.b16 %v2275, %v2271
        %v2360 = vpack.c.b16 %v2280, %v2276
        %v2361 = vpack.c.b16 %v2281, %v2277
        %v2362 = vpack.c.b16 %v2282, %v2278
        %v2363 = vpack.c.b16 %v2283, %v2279
        %v2364 = vpack.c.b16 %v2288, %v2284
        %v2365 = vpack.c.b16 %v2289, %v2285
        %v2366 = vpack.c.b16 %v2290, %v2286
        %v2367 = vpack.c.b16 %v2291, %v2287
        %v2368 = vpack.c.b16 %v2296, %v2292
        %v2369 = vpack.c.b16 %v2297, %v2293
        %v2370 = vpack.c.b16 %v2298, %v2294
        %v2371 = vpack.c.b16 %v2299, %v2295
        %v2372 = vpack.c.b16 %v2304, %v2300
        %v2373 = vpack.c.b16 %v2305, %v2301
        %v2374 = vpack.c.b16 %v2306, %v2302
        %v2375 = vpack.c.b16 %v2307, %v2303
        %v2376 = vpack.c.b16 %v2312, %v2308
        %v2377 = vpack.c.b16 %v2313, %v2309
        %v2378 = vpack.c.b16 %v2314, %v2310
        %v2379 = vpack.c.b16 %v2315, %v2311
        %2444 = vmatprep.subr.bf16.mxu0 %v2317
        %2445 = vmatpush1.bf16.msra.mxu0 %v2316
        %2446 = vmatprep.subr.bf16.mxu0 %v2321
        %2447 = vmatpush1.bf16.msra.mxu0 %v2320
        %2448 = vmatprep.subr.bf16.mxu0 %v2325
        %2449 = vmatpush1.bf16.msra.mxu0 %v2324
        %2450 = vmatprep.subr.bf16.mxu0 %v2329
        %2451 = vmatpush1.bf16.msra.mxu0 %v2328
        %2452 = vmatprep.subr.bf16.mxu0 %v2333
        %2453 = vmatpush1.bf16.msra.mxu0 %v2332
        %2454 = vmatprep.subr.bf16.mxu0 %v2337
        %2455 = vmatpush1.bf16.msra.mxu0 %v2336
        %2456 = vmatprep.subr.bf16.mxu0 %v2341
        %2457 = vmatpush1.bf16.msra.mxu0 %v2340
        %2458 = vmatprep.subr.bf16.mxu0 %v2345
        %2459 = vmatpush1.bf16.msra.mxu0 %v2344
        %2460 = vmatprep.subr.bf16.mxu0 %v2349
        %2461 = vmatpush1.bf16.msra.mxu0 %v2348
        %2462 = vmatprep.subr.bf16.mxu0 %v2353
        %2463 = vmatpush1.bf16.msra.mxu0 %v2352
        %2464 = vmatprep.subr.bf16.mxu0 %v2357
        %2465 = vmatpush1.bf16.msra.mxu0 %v2356
        %2466 = vmatprep.subr.bf16.mxu0 %v2361
        %2467 = vmatpush1.bf16.msra.mxu0 %v2360
        %2468 = vmatprep.subr.bf16.mxu0 %v2365
        %2469 = vmatpush1.bf16.msra.mxu0 %v2364
        %2470 = vmatprep.subr.bf16.mxu0 %v2369
        %2471 = vmatpush1.bf16.msra.mxu0 %v2368
        %2472 = vmatprep.subr.bf16.mxu0 %v2373
        %2473 = vmatpush1.bf16.msra.mxu0 %v2372
        %2474 = vmatprep.subr.bf16.mxu0 %v2377
        %2475 = vmatpush1.bf16.msra.mxu0 %v2376
        %2476 = vmatprep.mubr.bf16.mxu0 %v2121
        %2477 = vmatmul.mubr.bf16.gmra.mrb[0].mxu0 %v2114
        %v2478 = vpop.f32.mrb[0].mxu0
        %v2479 = vadd.f32 0.0, %v2478
        %v2480 = vpop.f32.mrb[0].mxu0
        %v2481 = vadd.f32 0.0, %v2480
        %v2482 = vpop.f32.mrb[0].mxu0
        %v2483 = vpop.f32.mrb[0].mxu0
        %2484 = vdwg.mxu0
        %2485 = vmatprep.subr.bf16.mxu0 %v2319
        %2486 = vmatpush1.bf16.msra.mxu0 %v2318
        %2487 = vmatprep.subr.bf16.mxu0 %v2323
        %2488 = vmatpush1.bf16.msra.mxu0 %v2322
        %2489 = vmatprep.subr.bf16.mxu0 %v2327
        %2490 = vmatpush1.bf16.msra.mxu0 %v2326
        %2491 = vmatprep.subr.bf16.mxu0 %v2331
        %2492 = vmatpush1.bf16.msra.mxu0 %v2330
        %2493 = vmatprep.subr.bf16.mxu0 %v2335
        %2494 = vmatpush1.bf16.msra.mxu0 %v2334
        %2495 = vmatprep.subr.bf16.mxu0 %v2339
        %2496 = vmatpush1.bf16.msra.mxu0 %v2338
        %2497 = vmatprep.subr.bf16.mxu0 %v2343
        %2498 = vmatpush1.bf16.msra.mxu0 %v2342
        %2499 = vmatprep.subr.bf16.mxu0 %v2347
        %2500 = vmatpush1.bf16.msra.mxu0 %v2346
        %2501 = vmatprep.subr.bf16.mxu0 %v2351
        %2502 = vmatpush1.bf16.msra.mxu0 %v2350
        %2503 = vmatprep.subr.bf16.mxu0 %v2355
        %2504 = vmatpush1.bf16.msra.mxu0 %v2354
        %2505 = vmatprep.subr.bf16.mxu0 %v2359
        %2506 = vmatpush1.bf16.msra.mxu0 %v2358
        %2507 = vmatprep.subr.bf16.mxu0 %v2363
        %2508 = vmatpush1.bf16.msra.mxu0 %v2362
        %2509 = vmatprep.subr.bf16.mxu0 %v2367
        %2510 = vmatpush1.bf16.msra.mxu0 %v2366
        %2511 = vmatprep.subr.bf16.mxu0 %v2371
        %2512 = vmatpush1.bf16.msra.mxu0 %v2370
        %2513 = vmatprep.subr.bf16.mxu0 %v2375
        %2514 = vmatpush1.bf16.msra.mxu0 %v2374
        %2515 = vmatprep.subr.bf16.mxu0 %v2379
        %2516 = vmatpush1.bf16.msra.mxu0 %v2378
        %2517 = vmatprep.mubr.bf16.mxu0 %v2121
        %2518 = vmatmul.mubr.bf16.gmra.mrb[0].mxu0 %v2114
        %v2519 = vpop.f32.mrb[0].mxu0
        %v2520 = vadd.f32 0.0, %v2519
        %v2521 = vpop.f32.mrb[0].mxu0
        %v2522 = vadd.f32 0.0, %v2521
        %v2523 = vpop.f32.mrb[0].mxu0
        %v2524 = vpop.f32.mrb[0].mxu0
        %2525 = vdwg.mxu0
        %v2590 = vunpack.c.l.b16 %v1973
        %v2591 = vunpack.c.h.b16 %v1973
        %v2592 = vunpack.c.l.b16 %v1974
        %v2593 = vunpack.c.h.b16 %v1974
        %v2594 = vunpack.c.l.b16 %v1975
        %v2595 = vunpack.c.h.b16 %v1975
        %v2596 = vunpack.c.l.b16 %v1976
        %v2597 = vunpack.c.h.b16 %v1976
        %v2598 = vunpack.c.l.b16 %v1977
        %v2599 = vunpack.c.h.b16 %v1977
        %v2600 = vunpack.c.l.b16 %v1978
        %v2601 = vunpack.c.h.b16 %v1978
        %v2602 = vunpack.c.l.b16 %v1979
        %v2603 = vunpack.c.h.b16 %v1979
        %v2604 = vunpack.c.l.b16 %v1980
        %v2605 = vunpack.c.h.b16 %v1980
        %v2606 = vunpack.c.l.b16 %v1981
        %v2607 = vunpack.c.h.b16 %v1981
        %v2608 = vunpack.c.l.b16 %v1982
        %v2609 = vunpack.c.h.b16 %v1982
        %v2610 = vunpack.c.l.b16 %v1983
        %v2611 = vunpack.c.h.b16 %v1983
        %v2612 = vunpack.c.l.b16 %v1984
        %v2613 = vunpack.c.h.b16 %v1984
        %v2614 = vunpack.c.l.b16 %v1985
        %v2615 = vunpack.c.h.b16 %v1985
        %v2616 = vunpack.c.l.b16 %v1986
        %v2617 = vunpack.c.h.b16 %v1986
        %v2618 = vunpack.c.l.b16 %v1987
        %v2619 = vunpack.c.h.b16 %v1987
        %v2620 = vunpack.c.l.b16 %v1988
        %v2621 = vunpack.c.h.b16 %v1988
        %v2622 = vunpack.c.l.b16 %v1989
        %v2623 = vunpack.c.h.b16 %v1989
        %v2624 = vunpack.c.l.b16 %v1990
        %v2625 = vunpack.c.h.b16 %v1990
        %v2626 = vunpack.c.l.b16 %v1991
        %v2627 = vunpack.c.h.b16 %v1991
        %v2628 = vunpack.c.l.b16 %v1992
        %v2629 = vunpack.c.h.b16 %v1992
        %v2630 = vunpack.c.l.b16 %v1993
        %v2631 = vunpack.c.h.b16 %v1993
        %v2632 = vunpack.c.l.b16 %v1994
        %v2633 = vunpack.c.h.b16 %v1994
        %v2634 = vunpack.c.l.b16 %v1995
        %v2635 = vunpack.c.h.b16 %v1995
        %v2636 = vunpack.c.l.b16 %v1996
        %v2637 = vunpack.c.h.b16 %v1996
        %v2638 = vunpack.c.l.b16 %v1997
        %v2639 = vunpack.c.h.b16 %v1997
        %v2640 = vunpack.c.l.b16 %v1998
        %v2641 = vunpack.c.h.b16 %v1998
        %v2642 = vunpack.c.l.b16 %v1999
        %v2643 = vunpack.c.h.b16 %v1999
        %v2644 = vunpack.c.l.b16 %v2000
        %v2645 = vunpack.c.h.b16 %v2000
        %v2646 = vunpack.c.l.b16 %v2001
        %v2647 = vunpack.c.h.b16 %v2001
        %v2648 = vunpack.c.l.b16 %v2002
        %v2649 = vunpack.c.h.b16 %v2002
        %v2650 = vunpack.c.l.b16 %v2003
        %v2651 = vunpack.c.h.b16 %v2003
        %v2652 = vunpack.c.l.b16 %v2004
        %v2653 = vunpack.c.h.b16 %v2004
        %v2654 = vunpack.c.l.b16 %v2005
        %v2655 = vunpack.c.h.b16 %v2005
        %v2656 = vunpack.c.l.b16 %v2006
        %v2657 = vunpack.c.h.b16 %v2006
        %v2658 = vunpack.c.l.b16 %v2007
        %v2659 = vunpack.c.h.b16 %v2007
        %v2660 = vunpack.c.l.b16 %v2008
        %v2661 = vunpack.c.h.b16 %v2008
        %v2662 = vunpack.c.l.b16 %v2009
        %v2663 = vunpack.c.h.b16 %v2009
        %v2664 = vunpack.c.l.b16 %v2010
        %v2665 = vunpack.c.h.b16 %v2010
        %v2666 = vunpack.c.l.b16 %v2011
        %v2667 = vunpack.c.h.b16 %v2011
        %v2668 = vunpack.c.l.b16 %v2012
        %v2669 = vunpack.c.h.b16 %v2012
        %v2670 = vunpack.c.l.b16 %v2013
        %v2671 = vunpack.c.h.b16 %v2013
        %v2672 = vunpack.c.l.b16 %v2014
        %v2673 = vunpack.c.h.b16 %v2014
        %v2674 = vunpack.c.l.b16 %v2015
        %v2675 = vunpack.c.h.b16 %v2015
        %v2676 = vunpack.c.l.b16 %v2016
        %v2677 = vunpack.c.h.b16 %v2016
        %v2678 = vunpack.c.l.b16 %v2017
        %v2679 = vunpack.c.h.b16 %v2017
        %v2680 = vunpack.c.l.b16 %v2018
        %v2681 = vunpack.c.h.b16 %v2018
        %v2682 = vunpack.c.l.b16 %v2019
        %v2683 = vunpack.c.h.b16 %v2019
        %v2684 = vunpack.c.l.b16 %v2020
        %v2685 = vunpack.c.h.b16 %v2020
        %v2686 = vunpack.c.l.b16 %v2021
        %v2687 = vunpack.c.h.b16 %v2021
        %v2688 = vunpack.c.l.b16 %v2022
        %v2689 = vunpack.c.h.b16 %v2022
        %v2690 = vunpack.c.l.b16 %v2023
        %v2691 = vunpack.c.h.b16 %v2023
        %v2692 = vunpack.c.l.b16 %v2024
        %v2693 = vunpack.c.h.b16 %v2024
        %v2694 = vunpack.c.l.b16 %v2025
        %v2695 = vunpack.c.h.b16 %v2025
        %v2696 = vunpack.c.l.b16 %v2026
        %v2697 = vunpack.c.h.b16 %v2026
        %v2698 = vunpack.c.l.b16 %v2027
        %v2699 = vunpack.c.h.b16 %v2027
        %v2700 = vunpack.c.l.b16 %v2028
        %v2701 = vunpack.c.h.b16 %v2028
        %v2702 = vunpack.c.l.b16 %v2029
        %v2703 = vunpack.c.h.b16 %v2029
        %v2704 = vunpack.c.l.b16 %v2030
        %v2705 = vunpack.c.h.b16 %v2030
        %v2706 = vunpack.c.l.b16 %v2031
        %v2707 = vunpack.c.h.b16 %v2031
        %v2708 = vunpack.c.l.b16 %v2032
        %v2709 = vunpack.c.h.b16 %v2032
        %v2710 = vunpack.c.l.b16 %v2033
        %v2711 = vunpack.c.h.b16 %v2033
        %v2712 = vunpack.c.l.b16 %v2034
        %v2713 = vunpack.c.h.b16 %v2034
        %v2714 = vunpack.c.l.b16 %v2035
        %v2715 = vunpack.c.h.b16 %v2035
        %v2716 = vunpack.c.l.b16 %v2036
        %v2717 = vunpack.c.h.b16 %v2036
        %v2718 = vpack.c.b16 %v2594, %v2590
        %v2719 = vpack.c.b16 %v2595, %v2591
        %v2720 = vpack.c.b16 %v2596, %v2592
        %v2721 = vpack.c.b16 %v2597, %v2593
        %v2722 = vpack.c.b16 %v2602, %v2598
        %v2723 = vpack.c.b16 %v2603, %v2599
        %v2724 = vpack.c.b16 %v2604, %v2600
        %v2725 = vpack.c.b16 %v2605, %v2601
        %v2726 = vpack.c.b16 %v2610, %v2606
        %v2727 = vpack.c.b16 %v2611, %v2607
        %v2728 = vpack.c.b16 %v2612, %v2608
        %v2729 = vpack.c.b16 %v2613, %v2609
        %v2730 = vpack.c.b16 %v2618, %v2614
        %v2731 = vpack.c.b16 %v2619, %v2615
        %v2732 = vpack.c.b16 %v2620, %v2616
        %v2733 = vpack.c.b16 %v2621, %v2617
        %v2734 = vpack.c.b16 %v2626, %v2622
        %v2735 = vpack.c.b16 %v2627, %v2623
        %v2736 = vpack.c.b16 %v2628, %v2624
        %v2737 = vpack.c.b16 %v2629, %v2625
        %v2738 = vpack.c.b16 %v2634, %v2630
        %v2739 = vpack.c.b16 %v2635, %v2631
        %v2740 = vpack.c.b16 %v2636, %v2632
        %v2741 = vpack.c.b16 %v2637, %v2633
        %v2742 = vpack.c.b16 %v2642, %v2638
        %v2743 = vpack.c.b16 %v2643, %v2639
        %v2744 = vpack.c.b16 %v2644, %v2640
        %v2745 = vpack.c.b16 %v2645, %v2641
        %v2746 = vpack.c.b16 %v2650, %v2646
        %v2747 = vpack.c.b16 %v2651, %v2647
        %v2748 = vpack.c.b16 %v2652, %v2648
        %v2749 = vpack.c.b16 %v2653, %v2649
        %v2750 = vpack.c.b16 %v2658, %v2654
        %v2751 = vpack.c.b16 %v2659, %v2655
        %v2752 = vpack.c.b16 %v2660, %v2656
        %v2753 = vpack.c.b16 %v2661, %v2657
        %v2754 = vpack.c.b16 %v2666, %v2662
        %v2755 = vpack.c.b16 %v2667, %v2663
        %v2756 = vpack.c.b16 %v2668, %v2664
        %v2757 = vpack.c.b16 %v2669, %v2665
        %v2758 = vpack.c.b16 %v2674, %v2670
        %v2759 = vpack.c.b16 %v2675, %v2671
        %v2760 = vpack.c.b16 %v2676, %v2672
        %v2761 = vpack.c.b16 %v2677, %v2673
        %v2762 = vpack.c.b16 %v2682, %v2678
        %v2763 = vpack.c.b16 %v2683, %v2679
        %v2764 = vpack.c.b16 %v2684, %v2680
        %v2765 = vpack.c.b16 %v2685, %v2681
        %v2766 = vpack.c.b16 %v2690, %v2686
        %v2767 = vpack.c.b16 %v2691, %v2687
        %v2768 = vpack.c.b16 %v2692, %v2688
        %v2769 = vpack.c.b16 %v2693, %v2689
        %v2770 = vpack.c.b16 %v2698, %v2694
        %v2771 = vpack.c.b16 %v2699, %v2695
        %v2772 = vpack.c.b16 %v2700, %v2696
        %v2773 = vpack.c.b16 %v2701, %v2697
        %v2774 = vpack.c.b16 %v2706, %v2702
        %v2775 = vpack.c.b16 %v2707, %v2703
        %v2776 = vpack.c.b16 %v2708, %v2704
        %v2777 = vpack.c.b16 %v2709, %v2705
        %v2778 = vpack.c.b16 %v2714, %v2710
        %v2779 = vpack.c.b16 %v2715, %v2711
        %v2780 = vpack.c.b16 %v2716, %v2712
        %v2781 = vpack.c.b16 %v2717, %v2713
        %2846 = vmatprep.subr.bf16.mxu0 %v2719
        %2847 = vmatpush1.bf16.msra.mxu0 %v2718
        %2848 = vmatprep.subr.bf16.mxu0 %v2723
        %2849 = vmatpush1.bf16.msra.mxu0 %v2722
        %2850 = vmatprep.subr.bf16.mxu0 %v2727
        %2851 = vmatpush1.bf16.msra.mxu0 %v2726
        %2852 = vmatprep.subr.bf16.mxu0 %v2731
        %2853 = vmatpush1.bf16.msra.mxu0 %v2730
        %2854 = vmatprep.subr.bf16.mxu0 %v2735
        %2855 = vmatpush1.bf16.msra.mxu0 %v2734
        %2856 = vmatprep.subr.bf16.mxu0 %v2739
        %2857 = vmatpush1.bf16.msra.mxu0 %v2738
        %2858 = vmatprep.subr.bf16.mxu0 %v2743
        %2859 = vmatpush1.bf16.msra.mxu0 %v2742
        %2860 = vmatprep.subr.bf16.mxu0 %v2747
        %2861 = vmatpush1.bf16.msra.mxu0 %v2746
        %2862 = vmatprep.subr.bf16.mxu0 %v2751
        %2863 = vmatpush1.bf16.msra.mxu0 %v2750
        %2864 = vmatprep.subr.bf16.mxu0 %v2755
        %2865 = vmatpush1.bf16.msra.mxu0 %v2754
        %2866 = vmatprep.subr.bf16.mxu0 %v2759
        %2867 = vmatpush1.bf16.msra.mxu0 %v2758
        %2868 = vmatprep.subr.bf16.mxu0 %v2763
        %2869 = vmatpush1.bf16.msra.mxu0 %v2762
        %2870 = vmatprep.subr.bf16.mxu0 %v2767
        %2871 = vmatpush1.bf16.msra.mxu0 %v2766
        %2872 = vmatprep.subr.bf16.mxu0 %v2771
        %2873 = vmatpush1.bf16.msra.mxu0 %v2770
        %2874 = vmatprep.subr.bf16.mxu0 %v2775
        %2875 = vmatpush1.bf16.msra.mxu0 %v2774
        %2876 = vmatprep.subr.bf16.mxu0 %v2779
        %2877 = vmatpush1.bf16.msra.mxu0 %v2778
        %2878 = vmatprep.mubr.bf16.mxu0 %v1972
        %2879 = vmatmul.mubr.bf16.gmra.mrb[0].mxu0 %v1971
        %v2880 = vpop.f32.mrb[0].mxu0
        %v2881 = vadd.f32 %v2479, %v2880
        %v2882 = vpop.f32.mrb[0].mxu0
        %v2883 = vadd.f32 %v2481, %v2882
        %v2884 = vpop.f32.mrb[0].mxu0
        %v2885 = vpop.f32.mrb[0].mxu0
        %2886 = vdwg.mxu0
        %2887 = vmatprep.subr.bf16.mxu0 %v2721
        %2888 = vmatpush1.bf16.msra.mxu0 %v2720
        %2889 = vmatprep.subr.bf16.mxu0 %v2725
        %2890 = vmatpush1.bf16.msra.mxu0 %v2724
        %2891 = vmatprep.subr.bf16.mxu0 %v2729
        %2892 = vmatpush1.bf16.msra.mxu0 %v2728
        %2893 = vmatprep.subr.bf16.mxu0 %v2733
        %2894 = vmatpush1.bf16.msra.mxu0 %v2732
        %2895 = vmatprep.subr.bf16.mxu0 %v2737
        %2896 = vmatpush1.bf16.msra.mxu0 %v2736
        %2897 = vmatprep.subr.bf16.mxu0 %v2741
        %2898 = vmatpush1.bf16.msra.mxu0 %v2740
        %2899 = vmatprep.subr.bf16.mxu0 %v2745
        %2900 = vmatpush1.bf16.msra.mxu0 %v2744
        %2901 = vmatprep.subr.bf16.mxu0 %v2749
        %2902 = vmatpush1.bf16.msra.mxu0 %v2748
        %2903 = vmatprep.subr.bf16.mxu0 %v2753
        %2904 = vmatpush1.bf16.msra.mxu0 %v2752
        %2905 = vmatprep.subr.bf16.mxu0 %v2757
        %2906 = vmatpush1.bf16.msra.mxu0 %v2756
        %2907 = vmatprep.subr.bf16.mxu0 %v2761
        %2908 = vmatpush1.bf16.msra.mxu0 %v2760
        %2909 = vmatprep.subr.bf16.mxu0 %v2765
        %2910 = vmatpush1.bf16.msra.mxu0 %v2764
        %2911 = vmatprep.subr.bf16.mxu0 %v2769
        %2912 = vmatpush1.bf16.msra.mxu0 %v2768
        %2913 = vmatprep.subr.bf16.mxu0 %v2773
        %2914 = vmatpush1.bf16.msra.mxu0 %v2772
        %2915 = vmatprep.subr.bf16.mxu0 %v2777
        %2916 = vmatpush1.bf16.msra.mxu0 %v2776
        %2917 = vmatprep.subr.bf16.mxu0 %v2781
        %2918 = vmatpush1.bf16.msra.mxu0 %v2780
        %2919 = vmatprep.mubr.bf16.mxu0 %v1972
        %2920 = vmatmul.mubr.bf16.gmra.mrb[0].mxu0 %v1971
        %v2921 = vpop.f32.mrb[0].mxu0
        %v2922 = vadd.f32 %v2520, %v2921
        %v2923 = vpop.f32.mrb[0].mxu0
        %v2924 = vadd.f32 %v2522, %v2923
        %v2925 = vpop.f32.mrb[0].mxu0
        %v2926 = vpop.f32.mrb[0].mxu0
        %2927 = vdwg.mxu0
        %v2928 = vld [vmem:[#allocation3] sm:$0xfc]
        %v2929 = vld [vmem:[#allocation3 + $0x8] sm:$0xfc]
        %v2930 = vld [vmem:[#allocation3 + $0x10] sm:$0x3]
        %v2931 = vld [vmem:[#allocation3 + $0x18] sm:$0x3]
        %v2932 = vpack.c.bf16 %v2930, %v2928
        %v2933 = vpack.c.bf16 %v2931, %v2929
        %s2934 = scalar_lea.vmem [#allocation9], 1024
        %v2935 = vld [vmem:[%s2934] sm:$0xff]
        %v2936 = vld [vmem:[%s2934 + $0x8] sm:$0xff]
        %v2937 = vld [vmem:[%s2934 + $0x10] sm:$0xff]
        %v2938 = vld [vmem:[%s2934 + $0x18] sm:$0xff]
        %v2939 = vld [vmem:[%s2934 + $0x20] sm:$0xff]
        %v2940 = vld [vmem:[%s2934 + $0x28] sm:$0xff]
        %v2941 = vld [vmem:[%s2934 + $0x30] sm:$0xff]
        %v2942 = vld [vmem:[%s2934 + $0x38] sm:$0xff]
        %v2943 = vld [vmem:[%s2934 + $0x40] sm:$0xff]
        %v2944 = vld [vmem:[%s2934 + $0x48] sm:$0xff]
        %v2945 = vld [vmem:[%s2934 + $0x50] sm:$0xff]
        %v2946 = vld [vmem:[%s2934 + $0x58] sm:$0xff]
        %v2947 = vld [vmem:[%s2934 + $0x60] sm:$0xff]
        %v2948 = vld [vmem:[%s2934 + $0x68] sm:$0xff]
        %v2949 = vld [vmem:[%s2934 + $0x70] sm:$0xff]
        %v2950 = vld [vmem:[%s2934 + $0x78] sm:$0xff]
        %v2951 = vld [vmem:[%s2934 + $0x80] sm:$0xff]
        %v2952 = vld [vmem:[%s2934 + $0x88] sm:$0xff]
        %v2953 = vld [vmem:[%s2934 + $0x90] sm:$0xff]
        %v2954 = vld [vmem:[%s2934 + $0x98] sm:$0xff]
        %v2955 = vld [vmem:[%s2934 + $0xa0] sm:$0xff]
        %v2956 = vld [vmem:[%s2934 + $0xa8] sm:$0xff]
        %v2957 = vld [vmem:[%s2934 + $0xb0] sm:$0xff]
        %v2958 = vld [vmem:[%s2934 + $0xb8] sm:$0xff]
        %v2959 = vld [vmem:[%s2934 + $0xc0] sm:$0xff]
        %v2960 = vld [vmem:[%s2934 + $0xc8] sm:$0xff]
        %v2961 = vld [vmem:[%s2934 + $0xd0] sm:$0xff]
        %v2962 = vld [vmem:[%s2934 + $0xd8] sm:$0xff]
        %v2963 = vld [vmem:[%s2934 + $0xe0] sm:$0xff]
        %v2964 = vld [vmem:[%s2934 + $0xe8] sm:$0xff]
        %v2965 = vld [vmem:[%s2934 + $0xf0] sm:$0xff]
        %v2966 = vld [vmem:[%s2934 + $0xf8] sm:$0xff]
        %v2967 = vld [vmem:[%s2934 + $0x100] sm:$0xff]
        %v2968 = vld [vmem:[%s2934 + $0x108] sm:$0xff]
        %v2969 = vld [vmem:[%s2934 + $0x110] sm:$0xff]
        %v2970 = vld [vmem:[%s2934 + $0x118] sm:$0xff]
        %v2971 = vld [vmem:[%s2934 + $0x120] sm:$0xff]
        %v2972 = vld [vmem:[%s2934 + $0x128] sm:$0xff]
        %v2973 = vld [vmem:[%s2934 + $0x130] sm:$0xff]
        %v2974 = vld [vmem:[%s2934 + $0x138] sm:$0xff]
        %v2975 = vld [vmem:[%s2934 + $0x140] sm:$0xff]
        %v2976 = vld [vmem:[%s2934 + $0x148] sm:$0xff]
        %v2977 = vld [vmem:[%s2934 + $0x150] sm:$0xff]
        %v2978 = vld [vmem:[%s2934 + $0x158] sm:$0xff]
        %v2979 = vld [vmem:[%s2934 + $0x160] sm:$0xff]
        %v2980 = vld [vmem:[%s2934 + $0x168] sm:$0xff]
        %v2981 = vld [vmem:[%s2934 + $0x170] sm:$0xff]
        %v2982 = vld [vmem:[%s2934 + $0x178] sm:$0xff]
        %v2983 = vld [vmem:[%s2934 + $0x180] sm:$0xff]
        %v2984 = vld [vmem:[%s2934 + $0x188] sm:$0xff]
        %v2985 = vld [vmem:[%s2934 + $0x190] sm:$0xff]
        %v2986 = vld [vmem:[%s2934 + $0x198] sm:$0xff]
        %v2987 = vld [vmem:[%s2934 + $0x1a0] sm:$0xff]
        %v2988 = vld [vmem:[%s2934 + $0x1a8] sm:$0xff]
        %v2989 = vld [vmem:[%s2934 + $0x1b0] sm:$0xff]
        %v2990 = vld [vmem:[%s2934 + $0x1b8] sm:$0xff]
        %v2991 = vld [vmem:[%s2934 + $0x1c0] sm:$0xff]
        %v2992 = vld [vmem:[%s2934 + $0x1c8] sm:$0xff]
        %v2993 = vld [vmem:[%s2934 + $0x1d0] sm:$0xff]
        %v2994 = vld [vmem:[%s2934 + $0x1d8] sm:$0xff]
        %v2995 = vld [vmem:[%s2934 + $0x1e0] sm:$0xff]
        %v2996 = vld [vmem:[%s2934 + $0x1e8] sm:$0xff]
        %v2997 = vld [vmem:[%s2934 + $0x1f0] sm:$0xff]
        %v2998 = vld [vmem:[%s2934 + $0x1f8] sm:$0xff]
        %v3001 = vrot.slane %v2932, 1
        %v3002 = vrot.slane %v2933, 1
        %v3069 = vunpack.c.l.b16 %v2935
        %v3070 = vunpack.c.h.b16 %v2935
        %v3071 = vunpack.c.l.b16 %v2936
        %v3072 = vunpack.c.h.b16 %v2936
        %v3073 = vunpack.c.l.b16 %v2937
        %v3074 = vunpack.c.h.b16 %v2937
        %v3075 = vunpack.c.l.b16 %v2938
        %v3076 = vunpack.c.h.b16 %v2938
        %v3077 = vunpack.c.l.b16 %v2939
        %v3078 = vunpack.c.h.b16 %v2939
        %v3079 = vunpack.c.l.b16 %v2940
        %v3080 = vunpack.c.h.b16 %v2940
        %v3081 = vunpack.c.l.b16 %v2941
        %v3082 = vunpack.c.h.b16 %v2941
        %v3083 = vunpack.c.l.b16 %v2942
        %v3084 = vunpack.c.h.b16 %v2942
        %v3085 = vunpack.c.l.b16 %v2943
        %v3086 = vunpack.c.h.b16 %v2943
        %v3087 = vunpack.c.l.b16 %v2944
        %v3088 = vunpack.c.h.b16 %v2944
        %v3089 = vunpack.c.l.b16 %v2945
        %v3090 = vunpack.c.h.b16 %v2945
        %v3091 = vunpack.c.l.b16 %v2946
        %v3092 = vunpack.c.h.b16 %v2946
        %v3093 = vunpack.c.l.b16 %v2947
        %v3094 = vunpack.c.h.b16 %v2947
        %v3095 = vunpack.c.l.b16 %v2948
        %v3096 = vunpack.c.h.b16 %v2948
        %v3097 = vunpack.c.l.b16 %v2949
        %v3098 = vunpack.c.h.b16 %v2949
        %v3099 = vunpack.c.l.b16 %v2950
        %v3100 = vunpack.c.h.b16 %v2950
        %v3101 = vunpack.c.l.b16 %v2951
        %v3102 = vunpack.c.h.b16 %v2951
        %v3103 = vunpack.c.l.b16 %v2952
        %v3104 = vunpack.c.h.b16 %v2952
        %v3105 = vunpack.c.l.b16 %v2953
        %v3106 = vunpack.c.h.b16 %v2953
        %v3107 = vunpack.c.l.b16 %v2954
        %v3108 = vunpack.c.h.b16 %v2954
        %v3109 = vunpack.c.l.b16 %v2955
        %v3110 = vunpack.c.h.b16 %v2955
        %v3111 = vunpack.c.l.b16 %v2956
        %v3112 = vunpack.c.h.b16 %v2956
        %v3113 = vunpack.c.l.b16 %v2957
        %v3114 = vunpack.c.h.b16 %v2957
        %v3115 = vunpack.c.l.b16 %v2958
        %v3116 = vunpack.c.h.b16 %v2958
        %v3117 = vunpack.c.l.b16 %v2959
        %v3118 = vunpack.c.h.b16 %v2959
        %v3119 = vunpack.c.l.b16 %v2960
        %v3120 = vunpack.c.h.b16 %v2960
        %v3121 = vunpack.c.l.b16 %v2961
        %v3122 = vunpack.c.h.b16 %v2961
        %v3123 = vunpack.c.l.b16 %v2962
        %v3124 = vunpack.c.h.b16 %v2962
        %v3125 = vunpack.c.l.b16 %v2963
        %v3126 = vunpack.c.h.b16 %v2963
        %v3127 = vunpack.c.l.b16 %v2964
        %v3128 = vunpack.c.h.b16 %v2964
        %v3129 = vunpack.c.l.b16 %v2965
        %v3130 = vunpack.c.h.b16 %v2965
        %v3131 = vunpack.c.l.b16 %v2966
        %v3132 = vunpack.c.h.b16 %v2966
        %v3133 = vunpack.c.l.b16 %v2967
        %v3134 = vunpack.c.h.b16 %v2967
        %v3135 = vunpack.c.l.b16 %v2968
        %v3136 = vunpack.c.h.b16 %v2968
        %v3137 = vunpack.c.l.b16 %v2969
        %v3138 = vunpack.c.h.b16 %v2969
        %v3139 = vunpack.c.l.b16 %v2970
        %v3140 = vunpack.c.h.b16 %v2970
        %v3141 = vunpack.c.l.b16 %v2971
        %v3142 = vunpack.c.h.b16 %v2971
        %v3143 = vunpack.c.l.b16 %v2972
        %v3144 = vunpack.c.h.b16 %v2972
        %v3145 = vunpack.c.l.b16 %v2973
        %v3146 = vunpack.c.h.b16 %v2973
        %v3147 = vunpack.c.l.b16 %v2974
        %v3148 = vunpack.c.h.b16 %v2974
        %v3149 = vunpack.c.l.b16 %v2975
        %v3150 = vunpack.c.h.b16 %v2975
        %v3151 = vunpack.c.l.b16 %v2976
        %v3152 = vunpack.c.h.b16 %v2976
        %v3153 = vunpack.c.l.b16 %v2977
        %v3154 = vunpack.c.h.b16 %v2977
        %v3155 = vunpack.c.l.b16 %v2978
        %v3156 = vunpack.c.h.b16 %v2978
        %v3157 = vunpack.c.l.b16 %v2979
        %v3158 = vunpack.c.h.b16 %v2979
        %v3159 = vunpack.c.l.b16 %v2980
        %v3160 = vunpack.c.h.b16 %v2980
        %v3161 = vunpack.c.l.b16 %v2981
        %v3162 = vunpack.c.h.b16 %v2981
        %v3163 = vunpack.c.l.b16 %v2982
        %v3164 = vunpack.c.h.b16 %v2982
        %v3165 = vunpack.c.l.b16 %v2983
        %v3166 = vunpack.c.h.b16 %v2983
        %v3167 = vunpack.c.l.b16 %v2984
        %v3168 = vunpack.c.h.b16 %v2984
        %v3169 = vunpack.c.l.b16 %v2985
        %v3170 = vunpack.c.h.b16 %v2985
        %v3171 = vunpack.c.l.b16 %v2986
        %v3172 = vunpack.c.h.b16 %v2986
        %v3173 = vunpack.c.l.b16 %v2987
        %v3174 = vunpack.c.h.b16 %v2987
        %v3175 = vunpack.c.l.b16 %v2988
        %v3176 = vunpack.c.h.b16 %v2988
        %v3177 = vunpack.c.l.b16 %v2989
        %v3178 = vunpack.c.h.b16 %v2989
        %v3179 = vunpack.c.l.b16 %v2990
        %v3180 = vunpack.c.h.b16 %v2990
        %v3181 = vunpack.c.l.b16 %v2991
        %v3182 = vunpack.c.h.b16 %v2991
        %v3183 = vunpack.c.l.b16 %v2992
        %v3184 = vunpack.c.h.b16 %v2992
        %v3185 = vunpack.c.l.b16 %v2993
        %v3186 = vunpack.c.h.b16 %v2993
        %v3187 = vunpack.c.l.b16 %v2994
        %v3188 = vunpack.c.h.b16 %v2994
        %v3189 = vunpack.c.l.b16 %v2995
        %v3190 = vunpack.c.h.b16 %v2995
        %v3191 = vunpack.c.l.b16 %v2996
        %v3192 = vunpack.c.h.b16 %v2996
        %v3193 = vunpack.c.l.b16 %v2997
        %v3194 = vunpack.c.h.b16 %v2997
        %v3195 = vunpack.c.l.b16 %v2998
        %v3196 = vunpack.c.h.b16 %v2998
        %v3197 = vpack.c.b16 %v3073, %v3069
        %v3198 = vpack.c.b16 %v3074, %v3070
        %v3199 = vpack.c.b16 %v3075, %v3071
        %v3200 = vpack.c.b16 %v3076, %v3072
        %v3201 = vpack.c.b16 %v3081, %v3077
        %v3202 = vpack.c.b16 %v3082, %v3078
        %v3203 = vpack.c.b16 %v3083, %v3079
        %v3204 = vpack.c.b16 %v3084, %v3080
        %v3205 = vpack.c.b16 %v3089, %v3085
        %v3206 = vpack.c.b16 %v3090, %v3086
        %v3207 = vpack.c.b16 %v3091, %v3087
        %v3208 = vpack.c.b16 %v3092, %v3088
        %v3209 = vpack.c.b16 %v3097, %v3093
        %v3210 = vpack.c.b16 %v3098, %v3094
        %v3211 = vpack.c.b16 %v3099, %v3095
        %v3212 = vpack.c.b16 %v3100, %v3096
        %v3213 = vpack.c.b16 %v3105, %v3101
        %v3214 = vpack.c.b16 %v3106, %v3102
        %v3215 = vpack.c.b16 %v3107, %v3103
        %v3216 = vpack.c.b16 %v3108, %v3104
        %v3217 = vpack.c.b16 %v3113, %v3109
        %v3218 = vpack.c.b16 %v3114, %v3110
        %v3219 = vpack.c.b16 %v3115, %v3111
        %v3220 = vpack.c.b16 %v3116, %v3112
        %v3221 = vpack.c.b16 %v3121, %v3117
        %v3222 = vpack.c.b16 %v3122, %v3118
        %v3223 = vpack.c.b16 %v3123, %v3119
        %v3224 = vpack.c.b16 %v3124, %v3120
        %v3225 = vpack.c.b16 %v3129, %v3125
        %v3226 = vpack.c.b16 %v3130, %v3126
        %v3227 = vpack.c.b16 %v3131, %v3127
        %v3228 = vpack.c.b16 %v3132, %v3128
        %v3229 = vpack.c.b16 %v3137, %v3133
        %v3230 = vpack.c.b16 %v3138, %v3134
        %v3231 = vpack.c.b16 %v3139, %v3135
        %v3232 = vpack.c.b16 %v3140, %v3136
        %v3233 = vpack.c.b16 %v3145, %v3141
        %v3234 = vpack.c.b16 %v3146, %v3142
        %v3235 = vpack.c.b16 %v3147, %v3143
        %v3236 = vpack.c.b16 %v3148, %v3144
        %v3237 = vpack.c.b16 %v3153, %v3149
        %v3238 = vpack.c.b16 %v3154, %v3150
        %v3239 = vpack.c.b16 %v3155, %v3151
        %v3240 = vpack.c.b16 %v3156, %v3152
        %v3241 = vpack.c.b16 %v3161, %v3157
        %v3242 = vpack.c.b16 %v3162, %v3158
        %v3243 = vpack.c.b16 %v3163, %v3159
        %v3244 = vpack.c.b16 %v3164, %v3160
        %v3245 = vpack.c.b16 %v3169, %v3165
        %v3246 = vpack.c.b16 %v3170, %v3166
        %v3247 = vpack.c.b16 %v3171, %v3167
        %v3248 = vpack.c.b16 %v3172, %v3168
        %v3249 = vpack.c.b16 %v3177, %v3173
        %v3250 = vpack.c.b16 %v3178, %v3174
        %v3251 = vpack.c.b16 %v3179, %v3175
        %v3252 = vpack.c.b16 %v3180, %v3176
        %v3253 = vpack.c.b16 %v3185, %v3181
        %v3254 = vpack.c.b16 %v3186, %v3182
        %v3255 = vpack.c.b16 %v3187, %v3183
        %v3256 = vpack.c.b16 %v3188, %v3184
        %v3257 = vpack.c.b16 %v3193, %v3189
        %v3258 = vpack.c.b16 %v3194, %v3190
        %v3259 = vpack.c.b16 %v3195, %v3191
        %v3260 = vpack.c.b16 %v3196, %v3192
        %3325 = vmatprep.subr.bf16.mxu0 %v3198
        %3326 = vmatpush1.bf16.msra.mxu0 %v3197
        %3327 = vmatprep.subr.bf16.mxu0 %v3202
        %3328 = vmatpush1.bf16.msra.mxu0 %v3201
        %3329 = vmatprep.subr.bf16.mxu0 %v3206
        %3330 = vmatpush1.bf16.msra.mxu0 %v3205
        %3331 = vmatprep.subr.bf16.mxu0 %v3210
        %3332 = vmatpush1.bf16.msra.mxu0 %v3209
        %3333 = vmatprep.subr.bf16.mxu0 %v3214
        %3334 = vmatpush1.bf16.msra.mxu0 %v3213
        %3335 = vmatprep.subr.bf16.mxu0 %v3218
        %3336 = vmatpush1.bf16.msra.mxu0 %v3217
        %3337 = vmatprep.subr.bf16.mxu0 %v3222
        %3338 = vmatpush1.bf16.msra.mxu0 %v3221
        %3339 = vmatprep.subr.bf16.mxu0 %v3226
        %3340 = vmatpush1.bf16.msra.mxu0 %v3225
        %3341 = vmatprep.subr.bf16.mxu0 %v3230
        %3342 = vmatpush1.bf16.msra.mxu0 %v3229
        %3343 = vmatprep.subr.bf16.mxu0 %v3234
        %3344 = vmatpush1.bf16.msra.mxu0 %v3233
        %3345 = vmatprep.subr.bf16.mxu0 %v3238
        %3346 = vmatpush1.bf16.msra.mxu0 %v3237
        %3347 = vmatprep.subr.bf16.mxu0 %v3242
        %3348 = vmatpush1.bf16.msra.mxu0 %v3241
        %3349 = vmatprep.subr.bf16.mxu0 %v3246
        %3350 = vmatpush1.bf16.msra.mxu0 %v3245
        %3351 = vmatprep.subr.bf16.mxu0 %v3250
        %3352 = vmatpush1.bf16.msra.mxu0 %v3249
        %3353 = vmatprep.subr.bf16.mxu0 %v3254
        %3354 = vmatpush1.bf16.msra.mxu0 %v3253
        %3355 = vmatprep.subr.bf16.mxu0 %v3258
        %3356 = vmatpush1.bf16.msra.mxu0 %v3257
        %3357 = vmatprep.mubr.bf16.mxu0 %v3002
        %3358 = vmatmul.mubr.bf16.gmra.mrb[0].mxu0 %v3001
        %v3359 = vpop.f32.mrb[0].mxu0
        %v3360 = vadd.f32 0.0, %v3359
        %v3361 = vpop.f32.mrb[0].mxu0
        %v3362 = vadd.f32 0.0, %v3361
        %v3363 = vpop.f32.mrb[0].mxu0
        %v3364 = vpop.f32.mrb[0].mxu0
        %3365 = vdwg.mxu0
        %3366 = vmatprep.subr.bf16.mxu0 %v3200
        %3367 = vmatpush1.bf16.msra.mxu0 %v3199
        %3368 = vmatprep.subr.bf16.mxu0 %v3204
        %3369 = vmatpush1.bf16.msra.mxu0 %v3203
        %3370 = vmatprep.subr.bf16.mxu0 %v3208
        %3371 = vmatpush1.bf16.msra.mxu0 %v3207
        %3372 = vmatprep.subr.bf16.mxu0 %v3212
        %3373 = vmatpush1.bf16.msra.mxu0 %v3211
        %3374 = vmatprep.subr.bf16.mxu0 %v3216
        %3375 = vmatpush1.bf16.msra.mxu0 %v3215
        %3376 = vmatprep.subr.bf16.mxu0 %v3220
        %3377 = vmatpush1.bf16.msra.mxu0 %v3219
        %3378 = vmatprep.subr.bf16.mxu0 %v3224
        %3379 = vmatpush1.bf16.msra.mxu0 %v3223
        %3380 = vmatprep.subr.bf16.mxu0 %v3228
        %3381 = vmatpush1.bf16.msra.mxu0 %v3227
        %3382 = vmatprep.subr.bf16.mxu0 %v3232
        %3383 = vmatpush1.bf16.msra.mxu0 %v3231
        %3384 = vmatprep.subr.bf16.mxu0 %v3236
        %3385 = vmatpush1.bf16.msra.mxu0 %v3235
        %3386 = vmatprep.subr.bf16.mxu0 %v3240
        %3387 = vmatpush1.bf16.msra.mxu0 %v3239
        %3388 = vmatprep.subr.bf16.mxu0 %v3244
        %3389 = vmatpush1.bf16.msra.mxu0 %v3243
        %3390 = vmatprep.subr.bf16.mxu0 %v3248
        %3391 = vmatpush1.bf16.msra.mxu0 %v3247
        %3392 = vmatprep.subr.bf16.mxu0 %v3252
        %3393 = vmatpush1.bf16.msra.mxu0 %v3251
        %3394 = vmatprep.subr.bf16.mxu0 %v3256
        %3395 = vmatpush1.bf16.msra.mxu0 %v3255
        %3396 = vmatprep.subr.bf16.mxu0 %v3260
        %3397 = vmatpush1.bf16.msra.mxu0 %v3259
        %3398 = vmatprep.mubr.bf16.mxu0 %v3002
        %3399 = vmatmul.mubr.bf16.gmra.mrb[0].mxu0 %v3001
        %v3400 = vpop.f32.mrb[0].mxu0
        %v3401 = vadd.f32 0.0, %v3400
        %v3402 = vpop.f32.mrb[0].mxu0
        %v3403 = vadd.f32 0.0, %v3402
        %v3404 = vpop.f32.mrb[0].mxu0
        %v3405 = vpop.f32.mrb[0].mxu0
        %3406 = vdwg.mxu0
        %v3407 = vadd.f32 %v2881, %v3360
        %v3408 = vadd.f32 %v2883, %v3362
        %v3409 = vadd.f32 %v2922, %v3401
        %v3410 = vadd.f32 %v2924, %v3403
        %v3411 = vld [vmem:[#allocation3] sm:$0xf0]
        %v3412 = vld [vmem:[#allocation3 + $0x8] sm:$0xf0]
        %v3413 = vld [vmem:[#allocation3 + $0x10] sm:$0xf]
        %v3414 = vld [vmem:[#allocation3 + $0x18] sm:$0xf]
        %v3415 = vpack.c.bf16 %v3413, %v3411
        %v3416 = vpack.c.bf16 %v3414, %v3412
        %s3417 = scalar_lea.vmem [#allocation9], 1536
        %v3418 = vld [vmem:[%s3417] sm:$0xff]
        %v3419 = vld [vmem:[%s3417 + $0x8] sm:$0xff]
        %v3420 = vld [vmem:[%s3417 + $0x10] sm:$0xff]
        %v3421 = vld [vmem:[%s3417 + $0x18] sm:$0xff]
        %v3422 = vld [vmem:[%s3417 + $0x20] sm:$0xff]
        %v3423 = vld [vmem:[%s3417 + $0x28] sm:$0xff]
        %v3424 = vld [vmem:[%s3417 + $0x30] sm:$0xff]
        %v3425 = vld [vmem:[%s3417 + $0x38] sm:$0xff]
        %v3426 = vld [vmem:[%s3417 + $0x40] sm:$0xff]
        %v3427 = vld [vmem:[%s3417 + $0x48] sm:$0xff]
        %v3428 = vld [vmem:[%s3417 + $0x50] sm:$0xff]
        %v3429 = vld [vmem:[%s3417 + $0x58] sm:$0xff]
        %v3430 = vld [vmem:[%s3417 + $0x60] sm:$0xff]
        %v3431 = vld [vmem:[%s3417 + $0x68] sm:$0xff]
        %v3432 = vld [vmem:[%s3417 + $0x70] sm:$0xff]
        %v3433 = vld [vmem:[%s3417 + $0x78] sm:$0xff]
        %v3434 = vld [vmem:[%s3417 + $0x80] sm:$0xff]
        %v3435 = vld [vmem:[%s3417 + $0x88] sm:$0xff]
        %v3436 = vld [vmem:[%s3417 + $0x90] sm:$0xff]
        %v3437 = vld [vmem:[%s3417 + $0x98] sm:$0xff]
        %v3438 = vld [vmem:[%s3417 + $0xa0] sm:$0xff]
        %v3439 = vld [vmem:[%s3417 + $0xa8] sm:$0xff]
        %v3440 = vld [vmem:[%s3417 + $0xb0] sm:$0xff]
        %v3441 = vld [vmem:[%s3417 + $0xb8] sm:$0xff]
        %v3442 = vld [vmem:[%s3417 + $0xc0] sm:$0xff]
        %v3443 = vld [vmem:[%s3417 + $0xc8] sm:$0xff]
        %v3444 = vld [vmem:[%s3417 + $0xd0] sm:$0xff]
        %v3445 = vld [vmem:[%s3417 + $0xd8] sm:$0xff]
        %v3446 = vld [vmem:[%s3417 + $0xe0] sm:$0xff]
        %v3447 = vld [vmem:[%s3417 + $0xe8] sm:$0xff]
        %v3448 = vld [vmem:[%s3417 + $0xf0] sm:$0xff]
        %v3449 = vld [vmem:[%s3417 + $0xf8] sm:$0xff]
        %v3450 = vld [vmem:[%s3417 + $0x100] sm:$0xff]
        %v3451 = vld [vmem:[%s3417 + $0x108] sm:$0xff]
        %v3452 = vld [vmem:[%s3417 + $0x110] sm:$0xff]
        %v3453 = vld [vmem:[%s3417 + $0x118] sm:$0xff]
        %v3454 = vld [vmem:[%s3417 + $0x120] sm:$0xff]
        %v3455 = vld [vmem:[%s3417 + $0x128] sm:$0xff]
        %v3456 = vld [vmem:[%s3417 + $0x130] sm:$0xff]
        %v3457 = vld [vmem:[%s3417 + $0x138] sm:$0xff]
        %v3458 = vld [vmem:[%s3417 + $0x140] sm:$0xff]
        %v3459 = vld [vmem:[%s3417 + $0x148] sm:$0xff]
        %v3460 = vld [vmem:[%s3417 + $0x150] sm:$0xff]
        %v3461 = vld [vmem:[%s3417 + $0x158] sm:$0xff]
        %v3462 = vld [vmem:[%s3417 + $0x160] sm:$0xff]
        %v3463 = vld [vmem:[%s3417 + $0x168] sm:$0xff]
        %v3464 = vld [vmem:[%s3417 + $0x170] sm:$0xff]
        %v3465 = vld [vmem:[%s3417 + $0x178] sm:$0xff]
        %v3466 = vld [vmem:[%s3417 + $0x180] sm:$0xff]
        %v3467 = vld [vmem:[%s3417 + $0x188] sm:$0xff]
        %v3468 = vld [vmem:[%s3417 + $0x190] sm:$0xff]
        %v3469 = vld [vmem:[%s3417 + $0x198] sm:$0xff]
        %v3470 = vld [vmem:[%s3417 + $0x1a0] sm:$0xff]
        %v3471 = vld [vmem:[%s3417 + $0x1a8] sm:$0xff]
        %v3472 = vld [vmem:[%s3417 + $0x1b0] sm:$0xff]
        %v3473 = vld [vmem:[%s3417 + $0x1b8] sm:$0xff]
        %v3474 = vld [vmem:[%s3417 + $0x1c0] sm:$0xff]
        %v3475 = vld [vmem:[%s3417 + $0x1c8] sm:$0xff]
        %v3476 = vld [vmem:[%s3417 + $0x1d0] sm:$0xff]
        %v3477 = vld [vmem:[%s3417 + $0x1d8] sm:$0xff]
        %v3478 = vld [vmem:[%s3417 + $0x1e0] sm:$0xff]
        %v3479 = vld [vmem:[%s3417 + $0x1e8] sm:$0xff]
        %v3480 = vld [vmem:[%s3417 + $0x1f0] sm:$0xff]
        %v3481 = vld [vmem:[%s3417 + $0x1f8] sm:$0xff]
        %v3484 = vrot.slane %v3415, 2
        %v3485 = vrot.slane %v3416, 2
        %v3552 = vunpack.c.l.b16 %v3418
        %v3553 = vunpack.c.h.b16 %v3418
        %v3554 = vunpack.c.l.b16 %v3419
        %v3555 = vunpack.c.h.b16 %v3419
        %v3556 = vunpack.c.l.b16 %v3420
        %v3557 = vunpack.c.h.b16 %v3420
        %v3558 = vunpack.c.l.b16 %v3421
        %v3559 = vunpack.c.h.b16 %v3421
        %v3560 = vunpack.c.l.b16 %v3422
        %v3561 = vunpack.c.h.b16 %v3422
        %v3562 = vunpack.c.l.b16 %v3423
        %v3563 = vunpack.c.h.b16 %v3423
        %v3564 = vunpack.c.l.b16 %v3424
        %v3565 = vunpack.c.h.b16 %v3424
        %v3566 = vunpack.c.l.b16 %v3425
        %v3567 = vunpack.c.h.b16 %v3425
        %v3568 = vunpack.c.l.b16 %v3426
        %v3569 = vunpack.c.h.b16 %v3426
        %v3570 = vunpack.c.l.b16 %v3427
        %v3571 = vunpack.c.h.b16 %v3427
        %v3572 = vunpack.c.l.b16 %v3428
        %v3573 = vunpack.c.h.b16 %v3428
        %v3574 = vunpack.c.l.b16 %v3429
        %v3575 = vunpack.c.h.b16 %v3429
        %v3576 = vunpack.c.l.b16 %v3430
        %v3577 = vunpack.c.h.b16 %v3430
        %v3578 = vunpack.c.l.b16 %v3431
        %v3579 = vunpack.c.h.b16 %v3431
        %v3580 = vunpack.c.l.b16 %v3432
        %v3581 = vunpack.c.h.b16 %v3432
        %v3582 = vunpack.c.l.b16 %v3433
        %v3583 = vunpack.c.h.b16 %v3433
        %v3584 = vunpack.c.l.b16 %v3434
        %v3585 = vunpack.c.h.b16 %v3434
        %v3586 = vunpack.c.l.b16 %v3435
        %v3587 = vunpack.c.h.b16 %v3435
        %v3588 = vunpack.c.l.b16 %v3436
        %v3589 = vunpack.c.h.b16 %v3436
        %v3590 = vunpack.c.l.b16 %v3437
        %v3591 = vunpack.c.h.b16 %v3437
        %v3592 = vunpack.c.l.b16 %v3438
        %v3593 = vunpack.c.h.b16 %v3438
        %v3594 = vunpack.c.l.b16 %v3439
        %v3595 = vunpack.c.h.b16 %v3439
        %v3596 = vunpack.c.l.b16 %v3440
        %v3597 = vunpack.c.h.b16 %v3440
        %v3598 = vunpack.c.l.b16 %v3441
        %v3599 = vunpack.c.h.b16 %v3441
        %v3600 = vunpack.c.l.b16 %v3442
        %v3601 = vunpack.c.h.b16 %v3442
        %v3602 = vunpack.c.l.b16 %v3443
        %v3603 = vunpack.c.h.b16 %v3443
        %v3604 = vunpack.c.l.b16 %v3444
        %v3605 = vunpack.c.h.b16 %v3444
        %v3606 = vunpack.c.l.b16 %v3445
        %v3607 = vunpack.c.h.b16 %v3445
        %v3608 = vunpack.c.l.b16 %v3446
        %v3609 = vunpack.c.h.b16 %v3446
        %v3610 = vunpack.c.l.b16 %v3447
        %v3611 = vunpack.c.h.b16 %v3447
        %v3612 = vunpack.c.l.b16 %v3448
        %v3613 = vunpack.c.h.b16 %v3448
        %v3614 = vunpack.c.l.b16 %v3449
        %v3615 = vunpack.c.h.b16 %v3449
        %v3616 = vunpack.c.l.b16 %v3450
        %v3617 = vunpack.c.h.b16 %v3450
        %v3618 = vunpack.c.l.b16 %v3451
        %v3619 = vunpack.c.h.b16 %v3451
        %v3620 = vunpack.c.l.b16 %v3452
        %v3621 = vunpack.c.h.b16 %v3452
        %v3622 = vunpack.c.l.b16 %v3453
        %v3623 = vunpack.c.h.b16 %v3453
        %v3624 = vunpack.c.l.b16 %v3454
        %v3625 = vunpack.c.h.b16 %v3454
        %v3626 = vunpack.c.l.b16 %v3455
        %v3627 = vunpack.c.h.b16 %v3455
        %v3628 = vunpack.c.l.b16 %v3456
        %v3629 = vunpack.c.h.b16 %v3456
        %v3630 = vunpack.c.l.b16 %v3457
        %v3631 = vunpack.c.h.b16 %v3457
        %v3632 = vunpack.c.l.b16 %v3458
        %v3633 = vunpack.c.h.b16 %v3458
        %v3634 = vunpack.c.l.b16 %v3459
        %v3635 = vunpack.c.h.b16 %v3459
        %v3636 = vunpack.c.l.b16 %v3460
        %v3637 = vunpack.c.h.b16 %v3460
        %v3638 = vunpack.c.l.b16 %v3461
        %v3639 = vunpack.c.h.b16 %v3461
        %v3640 = vunpack.c.l.b16 %v3462
        %v3641 = vunpack.c.h.b16 %v3462
        %v3642 = vunpack.c.l.b16 %v3463
        %v3643 = vunpack.c.h.b16 %v3463
        %v3644 = vunpack.c.l.b16 %v3464
        %v3645 = vunpack.c.h.b16 %v3464
        %v3646 = vunpack.c.l.b16 %v3465
        %v3647 = vunpack.c.h.b16 %v3465
        %v3648 = vunpack.c.l.b16 %v3466
        %v3649 = vunpack.c.h.b16 %v3466
        %v3650 = vunpack.c.l.b16 %v3467
        %v3651 = vunpack.c.h.b16 %v3467
        %v3652 = vunpack.c.l.b16 %v3468
        %v3653 = vunpack.c.h.b16 %v3468
        %v3654 = vunpack.c.l.b16 %v3469
        %v3655 = vunpack.c.h.b16 %v3469
        %v3656 = vunpack.c.l.b16 %v3470
        %v3657 = vunpack.c.h.b16 %v3470
        %v3658 = vunpack.c.l.b16 %v3471
        %v3659 = vunpack.c.h.b16 %v3471
        %v3660 = vunpack.c.l.b16 %v3472
        %v3661 = vunpack.c.h.b16 %v3472
        %v3662 = vunpack.c.l.b16 %v3473
        %v3663 = vunpack.c.h.b16 %v3473
        %v3664 = vunpack.c.l.b16 %v3474
        %v3665 = vunpack.c.h.b16 %v3474
        %v3666 = vunpack.c.l.b16 %v3475
        %v3667 = vunpack.c.h.b16 %v3475
        %v3668 = vunpack.c.l.b16 %v3476
        %v3669 = vunpack.c.h.b16 %v3476
        %v3670 = vunpack.c.l.b16 %v3477
        %v3671 = vunpack.c.h.b16 %v3477
        %v3672 = vunpack.c.l.b16 %v3478
        %v3673 = vunpack.c.h.b16 %v3478
        %v3674 = vunpack.c.l.b16 %v3479
        %v3675 = vunpack.c.h.b16 %v3479
        %v3676 = vunpack.c.l.b16 %v3480
        %v3677 = vunpack.c.h.b16 %v3480
        %v3678 = vunpack.c.l.b16 %v3481
        %v3679 = vunpack.c.h.b16 %v3481
        %v3680 = vpack.c.b16 %v3556, %v3552
        %v3681 = vpack.c.b16 %v3557, %v3553
        %v3682 = vpack.c.b16 %v3558, %v3554
        %v3683 = vpack.c.b16 %v3559, %v3555
        %v3684 = vpack.c.b16 %v3564, %v3560
        %v3685 = vpack.c.b16 %v3565, %v3561
        %v3686 = vpack.c.b16 %v3566, %v3562
        %v3687 = vpack.c.b16 %v3567, %v3563
        %v3688 = vpack.c.b16 %v3572, %v3568
        %v3689 = vpack.c.b16 %v3573, %v3569
        %v3690 = vpack.c.b16 %v3574, %v3570
        %v3691 = vpack.c.b16 %v3575, %v3571
        %v3692 = vpack.c.b16 %v3580, %v3576
        %v3693 = vpack.c.b16 %v3581, %v3577
        %v3694 = vpack.c.b16 %v3582, %v3578
        %v3695 = vpack.c.b16 %v3583, %v3579
        %v3696 = vpack.c.b16 %v3588, %v3584
        %v3697 = vpack.c.b16 %v3589, %v3585
        %v3698 = vpack.c.b16 %v3590, %v3586
        %v3699 = vpack.c.b16 %v3591, %v3587
        %v3700 = vpack.c.b16 %v3596, %v3592
        %v3701 = vpack.c.b16 %v3597, %v3593
        %v3702 = vpack.c.b16 %v3598, %v3594
        %v3703 = vpack.c.b16 %v3599, %v3595
        %v3704 = vpack.c.b16 %v3604, %v3600
        %v3705 = vpack.c.b16 %v3605, %v3601
        %v3706 = vpack.c.b16 %v3606, %v3602
        %v3707 = vpack.c.b16 %v3607, %v3603
        %v3708 = vpack.c.b16 %v3612, %v3608
        %v3709 = vpack.c.b16 %v3613, %v3609
        %v3710 = vpack.c.b16 %v3614, %v3610
        %v3711 = vpack.c.b16 %v3615, %v3611
        %v3712 = vpack.c.b16 %v3620, %v3616
        %v3713 = vpack.c.b16 %v3621, %v3617
        %v3714 = vpack.c.b16 %v3622, %v3618
        %v3715 = vpack.c.b16 %v3623, %v3619
        %v3716 = vpack.c.b16 %v3628, %v3624
        %v3717 = vpack.c.b16 %v3629, %v3625
        %v3718 = vpack.c.b16 %v3630, %v3626
        %v3719 = vpack.c.b16 %v3631, %v3627
        %v3720 = vpack.c.b16 %v3636, %v3632
        %v3721 = vpack.c.b16 %v3637, %v3633
        %v3722 = vpack.c.b16 %v3638, %v3634
        %v3723 = vpack.c.b16 %v3639, %v3635
        %v3724 = vpack.c.b16 %v3644, %v3640
        %v3725 = vpack.c.b16 %v3645, %v3641
        %v3726 = vpack.c.b16 %v3646, %v3642
        %v3727 = vpack.c.b16 %v3647, %v3643
        %v3728 = vpack.c.b16 %v3652, %v3648
        %v3729 = vpack.c.b16 %v3653, %v3649
        %v3730 = vpack.c.b16 %v3654, %v3650
        %v3731 = vpack.c.b16 %v3655, %v3651
        %v3732 = vpack.c.b16 %v3660, %v3656
        %v3733 = vpack.c.b16 %v3661, %v3657
        %v3734 = vpack.c.b16 %v3662, %v3658
        %v3735 = vpack.c.b16 %v3663, %v3659
        %v3736 = vpack.c.b16 %v3668, %v3664
        %v3737 = vpack.c.b16 %v3669, %v3665
        %v3738 = vpack.c.b16 %v3670, %v3666
        %v3739 = vpack.c.b16 %v3671, %v3667
        %v3740 = vpack.c.b16 %v3676, %v3672
        %v3741 = vpack.c.b16 %v3677, %v3673
        %v3742 = vpack.c.b16 %v3678, %v3674
        %v3743 = vpack.c.b16 %v3679, %v3675
        %3808 = vmatprep.subr.bf16.mxu0 %v3681
        %3809 = vmatpush1.bf16.msra.mxu0 %v3680
        %3810 = vmatprep.subr.bf16.mxu0 %v3685
        %3811 = vmatpush1.bf16.msra.mxu0 %v3684
        %3812 = vmatprep.subr.bf16.mxu0 %v3689
        %3813 = vmatpush1.bf16.msra.mxu0 %v3688
        %3814 = vmatprep.subr.bf16.mxu0 %v3693
        %3815 = vmatpush1.bf16.msra.mxu0 %v3692
        %3816 = vmatprep.subr.bf16.mxu0 %v3697
        %3817 = vmatpush1.bf16.msra.mxu0 %v3696
        %3818 = vmatprep.subr.bf16.mxu0 %v3701
        %3819 = vmatpush1.bf16.msra.mxu0 %v3700
        %3820 = vmatprep.subr.bf16.mxu0 %v3705
        %3821 = vmatpush1.bf16.msra.mxu0 %v3704
        %3822 = vmatprep.subr.bf16.mxu0 %v3709
        %3823 = vmatpush1.bf16.msra.mxu0 %v3708
        %3824 = vmatprep.subr.bf16.mxu0 %v3713
        %3825 = vmatpush1.bf16.msra.mxu0 %v3712
        %3826 = vmatprep.subr.bf16.mxu0 %v3717
        %3827 = vmatpush1.bf16.msra.mxu0 %v3716
        %3828 = vmatprep.subr.bf16.mxu0 %v3721
        %3829 = vmatpush1.bf16.msra.mxu0 %v3720
        %3830 = vmatprep.subr.bf16.mxu0 %v3725
        %3831 = vmatpush1.bf16.msra.mxu0 %v3724
        %3832 = vmatprep.subr.bf16.mxu0 %v3729
        %3833 = vmatpush1.bf16.msra.mxu0 %v3728
        %3834 = vmatprep.subr.bf16.mxu0 %v3733
        %3835 = vmatpush1.bf16.msra.mxu0 %v3732
        %3836 = vmatprep.subr.bf16.mxu0 %v3737
        %3837 = vmatpush1.bf16.msra.mxu0 %v3736
        %3838 = vmatprep.subr.bf16.mxu0 %v3741
        %3839 = vmatpush1.bf16.msra.mxu0 %v3740
        %3840 = vmatprep.mubr.bf16.mxu0 %v3485
        %3841 = vmatmul.mubr.bf16.gmra.mrb[0].mxu0 %v3484
        %v3842 = vpop.f32.mrb[0].mxu0
        %v3843 = vadd.f32 0.0, %v3842
        %v3844 = vpop.f32.mrb[0].mxu0
        %v3845 = vadd.f32 0.0, %v3844
        %v3846 = vpop.f32.mrb[0].mxu0
        %v3847 = vpop.f32.mrb[0].mxu0
        %3848 = vdwg.mxu0
        %3849 = vmatprep.subr.bf16.mxu0 %v3683
        %3850 = vmatpush1.bf16.msra.mxu0 %v3682
        %3851 = vmatprep.subr.bf16.mxu0 %v3687
        %3852 = vmatpush1.bf16.msra.mxu0 %v3686
        %3853 = vmatprep.subr.bf16.mxu0 %v3691
        %3854 = vmatpush1.bf16.msra.mxu0 %v3690
        %3855 = vmatprep.subr.bf16.mxu0 %v3695
        %3856 = vmatpush1.bf16.msra.mxu0 %v3694
        %3857 = vmatprep.subr.bf16.mxu0 %v3699
        %3858 = vmatpush1.bf16.msra.mxu0 %v3698
        %3859 = vmatprep.subr.bf16.mxu0 %v3703
        %3860 = vmatpush1.bf16.msra.mxu0 %v3702
        %3861 = vmatprep.subr.bf16.mxu0 %v3707
        %3862 = vmatpush1.bf16.msra.mxu0 %v3706
        %3863 = vmatprep.subr.bf16.mxu0 %v3711
        %3864 = vmatpush1.bf16.msra.mxu0 %v3710
        %3865 = vmatprep.subr.bf16.mxu0 %v3715
        %3866 = vmatpush1.bf16.msra.mxu0 %v3714
        %3867 = vmatprep.subr.bf16.mxu0 %v3719
        %3868 = vmatpush1.bf16.msra.mxu0 %v3718
        %3869 = vmatprep.subr.bf16.mxu0 %v3723
        %3870 = vmatpush1.bf16.msra.mxu0 %v3722
        %3871 = vmatprep.subr.bf16.mxu0 %v3727
        %3872 = vmatpush1.bf16.msra.mxu0 %v3726
        %3873 = vmatprep.subr.bf16.mxu0 %v3731
        %3874 = vmatpush1.bf16.msra.mxu0 %v3730
        %3875 = vmatprep.subr.bf16.mxu0 %v3735
        %3876 = vmatpush1.bf16.msra.mxu0 %v3734
        %3877 = vmatprep.subr.bf16.mxu0 %v3739
        %3878 = vmatpush1.bf16.msra.mxu0 %v3738
        %3879 = vmatprep.subr.bf16.mxu0 %v3743
        %3880 = vmatpush1.bf16.msra.mxu0 %v3742
        %3881 = vmatprep.mubr.bf16.mxu0 %v3485
        %3882 = vmatmul.mubr.bf16.gmra.mrb[0].mxu0 %v3484
        %v3883 = vpop.f32.mrb[0].mxu0
        %v3884 = vadd.f32 0.0, %v3883
        %v3885 = vpop.f32.mrb[0].mxu0
        %v3886 = vadd.f32 0.0, %v3885
        %v3887 = vpop.f32.mrb[0].mxu0
        %v3888 = vpop.f32.mrb[0].mxu0
        %3889 = vdwg.mxu0
        %v3890 = vadd.f32 %v3407, %v3843
        %v3891 = vadd.f32 %v3408, %v3845
        %v3892 = vadd.f32 %v3409, %v3884
        %v3893 = vadd.f32 %v3410, %v3886
        %v3894 = vld [vmem:[#allocation3] sm:$0xe0]
        %v3895 = vld [vmem:[#allocation3 + $0x8] sm:$0xe0]
        %v3896 = vld [vmem:[#allocation3 + $0x10] sm:$0x1f]
        %v3897 = vld [vmem:[#allocation3 + $0x18] sm:$0x1f]
        %v3898 = vpack.c.bf16 %v3896, %v3894
        %v3899 = vpack.c.bf16 %v3897, %v3895
        %s3900 = scalar_lea.vmem [#allocation9], 2048
        %v3901 = vld [vmem:[%s3900] sm:$0xff]
        %v3902 = vld [vmem:[%s3900 + $0x8] sm:$0xff]
        %v3903 = vld [vmem:[%s3900 + $0x10] sm:$0xff]
        %v3904 = vld [vmem:[%s3900 + $0x18] sm:$0xff]
        %v3905 = vld [vmem:[%s3900 + $0x20] sm:$0xff]
        %v3906 = vld [vmem:[%s3900 + $0x28] sm:$0xff]
        %v3907 = vld [vmem:[%s3900 + $0x30] sm:$0xff]
        %v3908 = vld [vmem:[%s3900 + $0x38] sm:$0xff]
        %v3909 = vld [vmem:[%s3900 + $0x40] sm:$0xff]
        %v3910 = vld [vmem:[%s3900 + $0x48] sm:$0xff]
        %v3911 = vld [vmem:[%s3900 + $0x50] sm:$0xff]
        %v3912 = vld [vmem:[%s3900 + $0x58] sm:$0xff]
        %v3913 = vld [vmem:[%s3900 + $0x60] sm:$0xff]
        %v3914 = vld [vmem:[%s3900 + $0x68] sm:$0xff]
        %v3915 = vld [vmem:[%s3900 + $0x70] sm:$0xff]
        %v3916 = vld [vmem:[%s3900 + $0x78] sm:$0xff]
        %v3917 = vld [vmem:[%s3900 + $0x80] sm:$0xff]
        %v3918 = vld [vmem:[%s3900 + $0x88] sm:$0xff]
        %v3919 = vld [vmem:[%s3900 + $0x90] sm:$0xff]
        %v3920 = vld [vmem:[%s3900 + $0x98] sm:$0xff]
        %v3921 = vld [vmem:[%s3900 + $0xa0] sm:$0xff]
        %v3922 = vld [vmem:[%s3900 + $0xa8] sm:$0xff]
        %v3923 = vld [vmem:[%s3900 + $0xb0] sm:$0xff]
        %v3924 = vld [vmem:[%s3900 + $0xb8] sm:$0xff]
        %v3925 = vld [vmem:[%s3900 + $0xc0] sm:$0xff]
        %v3926 = vld [vmem:[%s3900 + $0xc8] sm:$0xff]
        %v3927 = vld [vmem:[%s3900 + $0xd0] sm:$0xff]
        %v3928 = vld [vmem:[%s3900 + $0xd8] sm:$0xff]
        %v3929 = vld [vmem:[%s3900 + $0xe0] sm:$0xff]
        %v3930 = vld [vmem:[%s3900 + $0xe8] sm:$0xff]
        %v3931 = vld [vmem:[%s3900 + $0xf0] sm:$0xff]
        %v3932 = vld [vmem:[%s3900 + $0xf8] sm:$0xff]
        %v3933 = vld [vmem:[%s3900 + $0x100] sm:$0xff]
        %v3934 = vld [vmem:[%s3900 + $0x108] sm:$0xff]
        %v3935 = vld [vmem:[%s3900 + $0x110] sm:$0xff]
        %v3936 = vld [vmem:[%s3900 + $0x118] sm:$0xff]
        %v3937 = vld [vmem:[%s3900 + $0x120] sm:$0xff]
        %v3938 = vld [vmem:[%s3900 + $0x128] sm:$0xff]
        %v3939 = vld [vmem:[%s3900 + $0x130] sm:$0xff]
        %v3940 = vld [vmem:[%s3900 + $0x138] sm:$0xff]
        %v3941 = vld [vmem:[%s3900 + $0x140] sm:$0xff]
        %v3942 = vld [vmem:[%s3900 + $0x148] sm:$0xff]
        %v3943 = vld [vmem:[%s3900 + $0x150] sm:$0xff]
        %v3944 = vld [vmem:[%s3900 + $0x158] sm:$0xff]
        %v3945 = vld [vmem:[%s3900 + $0x160] sm:$0xff]
        %v3946 = vld [vmem:[%s3900 + $0x168] sm:$0xff]
        %v3947 = vld [vmem:[%s3900 + $0x170] sm:$0xff]
        %v3948 = vld [vmem:[%s3900 + $0x178] sm:$0xff]
        %v3949 = vld [vmem:[%s3900 + $0x180] sm:$0xff]
        %v3950 = vld [vmem:[%s3900 + $0x188] sm:$0xff]
        %v3951 = vld [vmem:[%s3900 + $0x190] sm:$0xff]
        %v3952 = vld [vmem:[%s3900 + $0x198] sm:$0xff]
        %v3953 = vld [vmem:[%s3900 + $0x1a0] sm:$0xff]
        %v3954 = vld [vmem:[%s3900 + $0x1a8] sm:$0xff]
        %v3955 = vld [vmem:[%s3900 + $0x1b0] sm:$0xff]
        %v3956 = vld [vmem:[%s3900 + $0x1b8] sm:$0xff]
        %v3957 = vld [vmem:[%s3900 + $0x1c0] sm:$0xff]
        %v3958 = vld [vmem:[%s3900 + $0x1c8] sm:$0xff]
        %v3959 = vld [vmem:[%s3900 + $0x1d0] sm:$0xff]
        %v3960 = vld [vmem:[%s3900 + $0x1d8] sm:$0xff]
        %v3961 = vld [vmem:[%s3900 + $0x1e0] sm:$0xff]
        %v3962 = vld [vmem:[%s3900 + $0x1e8] sm:$0xff]
        %v3963 = vld [vmem:[%s3900 + $0x1f0] sm:$0xff]
        %v3964 = vld [vmem:[%s3900 + $0x1f8] sm:$0xff]
        %v3966 = vshrl.u32 %v3898, 16
        %v3968 = vrot.slane %v3966, 2
        %v3969 = vshll.u32 %v3898, 16
        %v3971 = vrot.slane %v3969, 3
        %v3972 = vor.u32 %v3968, %v3971
        %v3974 = vshrl.u32 %v3899, 16
        %v3976 = vrot.slane %v3974, 2
        %v3977 = vshll.u32 %v3899, 16
        %v3979 = vrot.slane %v3977, 3
        %v3980 = vor.u32 %v3976, %v3979
        %v4047 = vunpack.c.l.b16 %v3901
        %v4048 = vunpack.c.h.b16 %v3901
        %v4049 = vunpack.c.l.b16 %v3902
        %v4050 = vunpack.c.h.b16 %v3902
        %v4051 = vunpack.c.l.b16 %v3903
        %v4052 = vunpack.c.h.b16 %v3903
        %v4053 = vunpack.c.l.b16 %v3904
        %v4054 = vunpack.c.h.b16 %v3904
        %v4055 = vunpack.c.l.b16 %v3905
        %v4056 = vunpack.c.h.b16 %v3905
        %v4057 = vunpack.c.l.b16 %v3906
        %v4058 = vunpack.c.h.b16 %v3906
        %v4059 = vunpack.c.l.b16 %v3907
        %v4060 = vunpack.c.h.b16 %v3907
        %v4061 = vunpack.c.l.b16 %v3908
        %v4062 = vunpack.c.h.b16 %v3908
        %v4063 = vunpack.c.l.b16 %v3909
        %v4064 = vunpack.c.h.b16 %v3909
        %v4065 = vunpack.c.l.b16 %v3910
        %v4066 = vunpack.c.h.b16 %v3910
        %v4067 = vunpack.c.l.b16 %v3911
        %v4068 = vunpack.c.h.b16 %v3911
        %v4069 = vunpack.c.l.b16 %v3912
        %v4070 = vunpack.c.h.b16 %v3912
        %v4071 = vunpack.c.l.b16 %v3913
        %v4072 = vunpack.c.h.b16 %v3913
        %v4073 = vunpack.c.l.b16 %v3914
        %v4074 = vunpack.c.h.b16 %v3914
        %v4075 = vunpack.c.l.b16 %v3915
        %v4076 = vunpack.c.h.b16 %v3915
        %v4077 = vunpack.c.l.b16 %v3916
        %v4078 = vunpack.c.h.b16 %v3916
        %v4079 = vunpack.c.l.b16 %v3917
        %v4080 = vunpack.c.h.b16 %v3917
        %v4081 = vunpack.c.l.b16 %v3918
        %v4082 = vunpack.c.h.b16 %v3918
        %v4083 = vunpack.c.l.b16 %v3919
        %v4084 = vunpack.c.h.b16 %v3919
        %v4085 = vunpack.c.l.b16 %v3920
        %v4086 = vunpack.c.h.b16 %v3920
        %v4087 = vunpack.c.l.b16 %v3921
        %v4088 = vunpack.c.h.b16 %v3921
        %v4089 = vunpack.c.l.b16 %v3922
        %v4090 = vunpack.c.h.b16 %v3922
        %v4091 = vunpack.c.l.b16 %v3923
        %v4092 = vunpack.c.h.b16 %v3923
        %v4093 = vunpack.c.l.b16 %v3924
        %v4094 = vunpack.c.h.b16 %v3924
        %v4095 = vunpack.c.l.b16 %v3925
        %v4096 = vunpack.c.h.b16 %v3925
        %v4097 = vunpack.c.l.b16 %v3926
        %v4098 = vunpack.c.h.b16 %v3926
        %v4099 = vunpack.c.l.b16 %v3927
        %v4100 = vunpack.c.h.b16 %v3927
        %v4101 = vunpack.c.l.b16 %v3928
        %v4102 = vunpack.c.h.b16 %v3928
        %v4103 = vunpack.c.l.b16 %v3929
        %v4104 = vunpack.c.h.b16 %v3929
        %v4105 = vunpack.c.l.b16 %v3930
        %v4106 = vunpack.c.h.b16 %v3930
        %v4107 = vunpack.c.l.b16 %v3931
        %v4108 = vunpack.c.h.b16 %v3931
        %v4109 = vunpack.c.l.b16 %v3932
        %v4110 = vunpack.c.h.b16 %v3932
        %v4111 = vunpack.c.l.b16 %v3933
        %v4112 = vunpack.c.h.b16 %v3933
        %v4113 = vunpack.c.l.b16 %v3934
        %v4114 = vunpack.c.h.b16 %v3934
        %v4115 = vunpack.c.l.b16 %v3935
        %v4116 = vunpack.c.h.b16 %v3935
        %v4117 = vunpack.c.l.b16 %v3936
        %v4118 = vunpack.c.h.b16 %v3936
        %v4119 = vunpack.c.l.b16 %v3937
        %v4120 = vunpack.c.h.b16 %v3937
        %v4121 = vunpack.c.l.b16 %v3938
        %v4122 = vunpack.c.h.b16 %v3938
        %v4123 = vunpack.c.l.b16 %v3939
        %v4124 = vunpack.c.h.b16 %v3939
        %v4125 = vunpack.c.l.b16 %v3940
        %v4126 = vunpack.c.h.b16 %v3940
        %v4127 = vunpack.c.l.b16 %v3941
        %v4128 = vunpack.c.h.b16 %v3941
        %v4129 = vunpack.c.l.b16 %v3942
        %v4130 = vunpack.c.h.b16 %v3942
        %v4131 = vunpack.c.l.b16 %v3943
        %v4132 = vunpack.c.h.b16 %v3943
        %v4133 = vunpack.c.l.b16 %v3944
        %v4134 = vunpack.c.h.b16 %v3944
        %v4135 = vunpack.c.l.b16 %v3945
        %v4136 = vunpack.c.h.b16 %v3945
        %v4137 = vunpack.c.l.b16 %v3946
        %v4138 = vunpack.c.h.b16 %v3946
        %v4139 = vunpack.c.l.b16 %v3947
        %v4140 = vunpack.c.h.b16 %v3947
        %v4141 = vunpack.c.l.b16 %v3948
        %v4142 = vunpack.c.h.b16 %v3948
        %v4143 = vunpack.c.l.b16 %v3949
        %v4144 = vunpack.c.h.b16 %v3949
        %v4145 = vunpack.c.l.b16 %v3950
        %v4146 = vunpack.c.h.b16 %v3950
        %v4147 = vunpack.c.l.b16 %v3951
        %v4148 = vunpack.c.h.b16 %v3951
        %v4149 = vunpack.c.l.b16 %v3952
        %v4150 = vunpack.c.h.b16 %v3952
        %v4151 = vunpack.c.l.b16 %v3953
        %v4152 = vunpack.c.h.b16 %v3953
        %v4153 = vunpack.c.l.b16 %v3954
        %v4154 = vunpack.c.h.b16 %v3954
        %v4155 = vunpack.c.l.b16 %v3955
        %v4156 = vunpack.c.h.b16 %v3955
        %v4157 = vunpack.c.l.b16 %v3956
        %v4158 = vunpack.c.h.b16 %v3956
        %v4159 = vunpack.c.l.b16 %v3957
        %v4160 = vunpack.c.h.b16 %v3957
        %v4161 = vunpack.c.l.b16 %v3958
        %v4162 = vunpack.c.h.b16 %v3958
        %v4163 = vunpack.c.l.b16 %v3959
        %v4164 = vunpack.c.h.b16 %v3959
        %v4165 = vunpack.c.l.b16 %v3960
        %v4166 = vunpack.c.h.b16 %v3960
        %v4167 = vunpack.c.l.b16 %v3961
        %v4168 = vunpack.c.h.b16 %v3961
        %v4169 = vunpack.c.l.b16 %v3962
        %v4170 = vunpack.c.h.b16 %v3962
        %v4171 = vunpack.c.l.b16 %v3963
        %v4172 = vunpack.c.h.b16 %v3963
        %v4173 = vunpack.c.l.b16 %v3964
        %v4174 = vunpack.c.h.b16 %v3964
        %v4175 = vpack.c.b16 %v4051, %v4047
        %v4176 = vpack.c.b16 %v4052, %v4048
        %v4177 = vpack.c.b16 %v4053, %v4049
        %v4178 = vpack.c.b16 %v4054, %v4050
        %v4179 = vpack.c.b16 %v4059, %v4055
        %v4180 = vpack.c.b16 %v4060, %v4056
        %v4181 = vpack.c.b16 %v4061, %v4057
        %v4182 = vpack.c.b16 %v4062, %v4058
        %v4183 = vpack.c.b16 %v4067, %v4063
        %v4184 = vpack.c.b16 %v4068, %v4064
        %v4185 = vpack.c.b16 %v4069, %v4065
        %v4186 = vpack.c.b16 %v4070, %v4066
        %v4187 = vpack.c.b16 %v4075, %v4071
        %v4188 = vpack.c.b16 %v4076, %v4072
        %v4189 = vpack.c.b16 %v4077, %v4073
        %v4190 = vpack.c.b16 %v4078, %v4074
        %v4191 = vpack.c.b16 %v4083, %v4079
        %v4192 = vpack.c.b16 %v4084, %v4080
        %v4193 = vpack.c.b16 %v4085, %v4081
        %v4194 = vpack.c.b16 %v4086, %v4082
        %v4195 = vpack.c.b16 %v4091, %v4087
        %v4196 = vpack.c.b16 %v4092, %v4088
        %v4197 = vpack.c.b16 %v4093, %v4089
        %v4198 = vpack.c.b16 %v4094, %v4090
        %v4199 = vpack.c.b16 %v4099, %v4095
        %v4200 = vpack.c.b16 %v4100, %v4096
        %v4201 = vpack.c.b16 %v4101, %v4097
        %v4202 = vpack.c.b16 %v4102, %v4098
        %v4203 = vpack.c.b16 %v4107, %v4103
        %v4204 = vpack.c.b16 %v4108, %v4104
        %v4205 = vpack.c.b16 %v4109, %v4105
        %v4206 = vpack.c.b16 %v4110, %v4106
        %v4207 = vpack.c.b16 %v4115, %v4111
        %v4208 = vpack.c.b16 %v4116, %v4112
        %v4209 = vpack.c.b16 %v4117, %v4113
        %v4210 = vpack.c.b16 %v4118, %v4114
        %v4211 = vpack.c.b16 %v4123, %v4119
        %v4212 = vpack.c.b16 %v4124, %v4120
        %v4213 = vpack.c.b16 %v4125, %v4121
        %v4214 = vpack.c.b16 %v4126, %v4122
        %v4215 = vpack.c.b16 %v4131, %v4127
        %v4216 = vpack.c.b16 %v4132, %v4128
        %v4217 = vpack.c.b16 %v4133, %v4129
        %v4218 = vpack.c.b16 %v4134, %v4130
        %v4219 = vpack.c.b16 %v4139, %v4135
        %v4220 = vpack.c.b16 %v4140, %v4136
        %v4221 = vpack.c.b16 %v4141, %v4137
        %v4222 = vpack.c.b16 %v4142, %v4138
        %v4223 = vpack.c.b16 %v4147, %v4143
        %v4224 = vpack.c.b16 %v4148, %v4144
        %v4225 = vpack.c.b16 %v4149, %v4145
        %v4226 = vpack.c.b16 %v4150, %v4146
        %v4227 = vpack.c.b16 %v4155, %v4151
        %v4228 = vpack.c.b16 %v4156, %v4152
        %v4229 = vpack.c.b16 %v4157, %v4153
        %v4230 = vpack.c.b16 %v4158, %v4154
        %v4231 = vpack.c.b16 %v4163, %v4159
        %v4232 = vpack.c.b16 %v4164, %v4160
        %v4233 = vpack.c.b16 %v4165, %v4161
        %v4234 = vpack.c.b16 %v4166, %v4162
        %v4235 = vpack.c.b16 %v4171, %v4167
        %v4236 = vpack.c.b16 %v4172, %v4168
        %v4237 = vpack.c.b16 %v4173, %v4169
        %v4238 = vpack.c.b16 %v4174, %v4170
        %4303 = vmatprep.subr.bf16.mxu0 %v4176
        %4304 = vmatpush1.bf16.msra.mxu0 %v4175
        %4305 = vmatprep.subr.bf16.mxu0 %v4180
        %4306 = vmatpush1.bf16.msra.mxu0 %v4179
        %4307 = vmatprep.subr.bf16.mxu0 %v4184
        %4308 = vmatpush1.bf16.msra.mxu0 %v4183
        %4309 = vmatprep.subr.bf16.mxu0 %v4188
        %4310 = vmatpush1.bf16.msra.mxu0 %v4187
        %4311 = vmatprep.subr.bf16.mxu0 %v4192
        %4312 = vmatpush1.bf16.msra.mxu0 %v4191
        %4313 = vmatprep.subr.bf16.mxu0 %v4196
        %4314 = vmatpush1.bf16.msra.mxu0 %v4195
        %4315 = vmatprep.subr.bf16.mxu0 %v4200
        %4316 = vmatpush1.bf16.msra.mxu0 %v4199
        %4317 = vmatprep.subr.bf16.mxu0 %v4204
        %4318 = vmatpush1.bf16.msra.mxu0 %v4203
        %4319 = vmatprep.subr.bf16.mxu0 %v4208
        %4320 = vmatpush1.bf16.msra.mxu0 %v4207
        %4321 = vmatprep.subr.bf16.mxu0 %v4212
        %4322 = vmatpush1.bf16.msra.mxu0 %v4211
        %4323 = vmatprep.subr.bf16.mxu0 %v4216
        %4324 = vmatpush1.bf16.msra.mxu0 %v4215
        %4325 = vmatprep.subr.bf16.mxu0 %v4220
        %4326 = vmatpush1.bf16.msra.mxu0 %v4219
        %4327 = vmatprep.subr.bf16.mxu0 %v4224
        %4328 = vmatpush1.bf16.msra.mxu0 %v4223
        %4329 = vmatprep.subr.bf16.mxu0 %v4228
        %4330 = vmatpush1.bf16.msra.mxu0 %v4227
        %4331 = vmatprep.subr.bf16.mxu0 %v4232
        %4332 = vmatpush1.bf16.msra.mxu0 %v4231
        %4333 = vmatprep.subr.bf16.mxu0 %v4236
        %4334 = vmatpush1.bf16.msra.mxu0 %v4235
        %4335 = vmatprep.mubr.bf16.mxu0 %v3980
        %4336 = vmatmul.mubr.bf16.gmra.mrb[0].mxu0 %v3972
        %v4337 = vpop.f32.mrb[0].mxu0
        %v4338 = vadd.f32 0.0, %v4337
        %v4339 = vpop.f32.mrb[0].mxu0
        %v4340 = vadd.f32 0.0, %v4339
        %v4341 = vpop.f32.mrb[0].mxu0
        %v4342 = vpop.f32.mrb[0].mxu0
        %4343 = vdwg.mxu0
        %4344 = vmatprep.subr.bf16.mxu0 %v4178
        %4345 = vmatpush1.bf16.msra.mxu0 %v4177
        %4346 = vmatprep.subr.bf16.mxu0 %v4182
        %4347 = vmatpush1.bf16.msra.mxu0 %v4181
        %4348 = vmatprep.subr.bf16.mxu0 %v4186
        %4349 = vmatpush1.bf16.msra.mxu0 %v4185
        %4350 = vmatprep.subr.bf16.mxu0 %v4190
        %4351 = vmatpush1.bf16.msra.mxu0 %v4189
        %4352 = vmatprep.subr.bf16.mxu0 %v4194
        %4353 = vmatpush1.bf16.msra.mxu0 %v4193
        %4354 = vmatprep.subr.bf16.mxu0 %v4198
        %4355 = vmatpush1.bf16.msra.mxu0 %v4197
        %4356 = vmatprep.subr.bf16.mxu0 %v4202
        %4357 = vmatpush1.bf16.msra.mxu0 %v4201
        %4358 = vmatprep.subr.bf16.mxu0 %v4206
        %4359 = vmatpush1.bf16.msra.mxu0 %v4205
        %4360 = vmatprep.subr.bf16.mxu0 %v4210
        %4361 = vmatpush1.bf16.msra.mxu0 %v4209
        %4362 = vmatprep.subr.bf16.mxu0 %v4214
        %4363 = vmatpush1.bf16.msra.mxu0 %v4213
        %4364 = vmatprep.subr.bf16.mxu0 %v4218
        %4365 = vmatpush1.bf16.msra.mxu0 %v4217
        %4366 = vmatprep.subr.bf16.mxu0 %v4222
        %4367 = vmatpush1.bf16.msra.mxu0 %v4221
        %4368 = vmatprep.subr.bf16.mxu0 %v4226
        %4369 = vmatpush1.bf16.msra.mxu0 %v4225
        %4370 = vmatprep.subr.bf16.mxu0 %v4230
        %4371 = vmatpush1.bf16.msra.mxu0 %v4229
        %4372 = vmatprep.subr.bf16.mxu0 %v4234
        %4373 = vmatpush1.bf16.msra.mxu0 %v4233
        %4374 = vmatprep.subr.bf16.mxu0 %v4238
        %4375 = vmatpush1.bf16.msra.mxu0 %v4237
        %4376 = vmatprep.mubr.bf16.mxu0 %v3980
        %4377 = vmatmul.mubr.bf16.gmra.mrb[0].mxu0 %v3972
        %v4378 = vpop.f32.mrb[0].mxu0
        %v4379 = vadd.f32 0.0, %v4378
        %v4380 = vpop.f32.mrb[0].mxu0
        %v4381 = vadd.f32 0.0, %v4380
        %v4382 = vpop.f32.mrb[0].mxu0
        %v4383 = vpop.f32.mrb[0].mxu0
        %4384 = vdwg.mxu0
        %v4385 = vadd.f32 %v3890, %v4338
        %v4386 = vadd.f32 %v3891, %v4340
        %v4387 = vadd.f32 %v3892, %v4379
        %v4388 = vadd.f32 %v3893, %v4381
        %v4389 = vld [vmem:[#allocation3] sm:$0xc0]
        %v4390 = vld [vmem:[#allocation3 + $0x8] sm:$0xc0]
        %v4391 = vld [vmem:[#allocation3 + $0x10] sm:$0x3f]
        %v4392 = vld [vmem:[#allocation3 + $0x18] sm:$0x3f]
        %v4393 = vpack.c.bf16 %v4391, %v4389
        %v4394 = vpack.c.bf16 %v4392, %v4390
        %s4395 = scalar_lea.vmem [#allocation9], 2560
        %v4396 = vld [vmem:[%s4395] sm:$0xff]
        %v4397 = vld [vmem:[%s4395 + $0x8] sm:$0xff]
        %v4398 = vld [vmem:[%s4395 + $0x10] sm:$0xff]
        %v4399 = vld [vmem:[%s4395 + $0x18] sm:$0xff]
        %v4400 = vld [vmem:[%s4395 + $0x20] sm:$0xff]
        %v4401 = vld [vmem:[%s4395 + $0x28] sm:$0xff]
        %v4402 = vld [vmem:[%s4395 + $0x30] sm:$0xff]
        %v4403 = vld [vmem:[%s4395 + $0x38] sm:$0xff]
        %v4404 = vld [vmem:[%s4395 + $0x40] sm:$0xff]
        %v4405 = vld [vmem:[%s4395 + $0x48] sm:$0xff]
        %v4406 = vld [vmem:[%s4395 + $0x50] sm:$0xff]
        %v4407 = vld [vmem:[%s4395 + $0x58] sm:$0xff]
        %v4408 = vld [vmem:[%s4395 + $0x60] sm:$0xff]
        %v4409 = vld [vmem:[%s4395 + $0x68] sm:$0xff]
        %v4410 = vld [vmem:[%s4395 + $0x70] sm:$0xff]
        %v4411 = vld [vmem:[%s4395 + $0x78] sm:$0xff]
        %v4412 = vld [vmem:[%s4395 + $0x80] sm:$0xff]
        %v4413 = vld [vmem:[%s4395 + $0x88] sm:$0xff]
        %v4414 = vld [vmem:[%s4395 + $0x90] sm:$0xff]
        %v4415 = vld [vmem:[%s4395 + $0x98] sm:$0xff]
        %v4416 = vld [vmem:[%s4395 + $0xa0] sm:$0xff]
        %v4417 = vld [vmem:[%s4395 + $0xa8] sm:$0xff]
        %v4418 = vld [vmem:[%s4395 + $0xb0] sm:$0xff]
        %v4419 = vld [vmem:[%s4395 + $0xb8] sm:$0xff]
        %v4420 = vld [vmem:[%s4395 + $0xc0] sm:$0xff]
        %v4421 = vld [vmem:[%s4395 + $0xc8] sm:$0xff]
        %v4422 = vld [vmem:[%s4395 + $0xd0] sm:$0xff]
        %v4423 = vld [vmem:[%s4395 + $0xd8] sm:$0xff]
        %v4424 = vld [vmem:[%s4395 + $0xe0] sm:$0xff]
        %v4425 = vld [vmem:[%s4395 + $0xe8] sm:$0xff]
        %v4426 = vld [vmem:[%s4395 + $0xf0] sm:$0xff]
        %v4427 = vld [vmem:[%s4395 + $0xf8] sm:$0xff]
        %v4428 = vld [vmem:[%s4395 + $0x100] sm:$0xff]
        %v4429 = vld [vmem:[%s4395 + $0x108] sm:$0xff]
        %v4430 = vld [vmem:[%s4395 + $0x110] sm:$0xff]
        %v4431 = vld [vmem:[%s4395 + $0x118] sm:$0xff]
        %v4432 = vld [vmem:[%s4395 + $0x120] sm:$0xff]
        %v4433 = vld [vmem:[%s4395 + $0x128] sm:$0xff]
        %v4434 = vld [vmem:[%s4395 + $0x130] sm:$0xff]
        %v4435 = vld [vmem:[%s4395 + $0x138] sm:$0xff]
        %v4436 = vld [vmem:[%s4395 + $0x140] sm:$0xff]
        %v4437 = vld [vmem:[%s4395 + $0x148] sm:$0xff]
        %v4438 = vld [vmem:[%s4395 + $0x150] sm:$0xff]
        %v4439 = vld [vmem:[%s4395 + $0x158] sm:$0xff]
        %v4440 = vld [vmem:[%s4395 + $0x160] sm:$0xff]
        %v4441 = vld [vmem:[%s4395 + $0x168] sm:$0xff]
        %v4442 = vld [vmem:[%s4395 + $0x170] sm:$0xff]
        %v4443 = vld [vmem:[%s4395 + $0x178] sm:$0xff]
        %v4444 = vld [vmem:[%s4395 + $0x180] sm:$0xff]
        %v4445 = vld [vmem:[%s4395 + $0x188] sm:$0xff]
        %v4446 = vld [vmem:[%s4395 + $0x190] sm:$0xff]
        %v4447 = vld [vmem:[%s4395 + $0x198] sm:$0xff]
        %v4448 = vld [vmem:[%s4395 + $0x1a0] sm:$0xff]
        %v4449 = vld [vmem:[%s4395 + $0x1a8] sm:$0xff]
        %v4450 = vld [vmem:[%s4395 + $0x1b0] sm:$0xff]
        %v4451 = vld [vmem:[%s4395 + $0x1b8] sm:$0xff]
        %v4452 = vld [vmem:[%s4395 + $0x1c0] sm:$0xff]
        %v4453 = vld [vmem:[%s4395 + $0x1c8] sm:$0xff]
        %v4454 = vld [vmem:[%s4395 + $0x1d0] sm:$0xff]
        %v4455 = vld [vmem:[%s4395 + $0x1d8] sm:$0xff]
        %v4456 = vld [vmem:[%s4395 + $0x1e0] sm:$0xff]
        %v4457 = vld [vmem:[%s4395 + $0x1e8] sm:$0xff]
        %v4458 = vld [vmem:[%s4395 + $0x1f0] sm:$0xff]
        %v4459 = vld [vmem:[%s4395 + $0x1f8] sm:$0xff]
        %v4462 = vrot.slane %v4393, 3
        %v4463 = vrot.slane %v4394, 3
        %v4530 = vunpack.c.l.b16 %v4396
        %v4531 = vunpack.c.h.b16 %v4396
        %v4532 = vunpack.c.l.b16 %v4397
        %v4533 = vunpack.c.h.b16 %v4397
        %v4534 = vunpack.c.l.b16 %v4398
        %v4535 = vunpack.c.h.b16 %v4398
        %v4536 = vunpack.c.l.b16 %v4399
        %v4537 = vunpack.c.h.b16 %v4399
        %v4538 = vunpack.c.l.b16 %v4400
        %v4539 = vunpack.c.h.b16 %v4400
        %v4540 = vunpack.c.l.b16 %v4401
        %v4541 = vunpack.c.h.b16 %v4401
        %v4542 = vunpack.c.l.b16 %v4402
        %v4543 = vunpack.c.h.b16 %v4402
        %v4544 = vunpack.c.l.b16 %v4403
        %v4545 = vunpack.c.h.b16 %v4403
        %v4546 = vunpack.c.l.b16 %v4404
        %v4547 = vunpack.c.h.b16 %v4404
        %v4548 = vunpack.c.l.b16 %v4405
        %v4549 = vunpack.c.h.b16 %v4405
        %v4550 = vunpack.c.l.b16 %v4406
        %v4551 = vunpack.c.h.b16 %v4406
        %v4552 = vunpack.c.l.b16 %v4407
        %v4553 = vunpack.c.h.b16 %v4407
        %v4554 = vunpack.c.l.b16 %v4408
        %v4555 = vunpack.c.h.b16 %v4408
        %v4556 = vunpack.c.l.b16 %v4409
        %v4557 = vunpack.c.h.b16 %v4409
        %v4558 = vunpack.c.l.b16 %v4410
        %v4559 = vunpack.c.h.b16 %v4410
        %v4560 = vunpack.c.l.b16 %v4411
        %v4561 = vunpack.c.h.b16 %v4411
        %v4562 = vunpack.c.l.b16 %v4412
        %v4563 = vunpack.c.h.b16 %v4412
        %v4564 = vunpack.c.l.b16 %v4413
        %v4565 = vunpack.c.h.b16 %v4413
        %v4566 = vunpack.c.l.b16 %v4414
        %v4567 = vunpack.c.h.b16 %v4414
        %v4568 = vunpack.c.l.b16 %v4415
        %v4569 = vunpack.c.h.b16 %v4415
        %v4570 = vunpack.c.l.b16 %v4416
        %v4571 = vunpack.c.h.b16 %v4416
        %v4572 = vunpack.c.l.b16 %v4417
        %v4573 = vunpack.c.h.b16 %v4417
        %v4574 = vunpack.c.l.b16 %v4418
        %v4575 = vunpack.c.h.b16 %v4418
        %v4576 = vunpack.c.l.b16 %v4419
        %v4577 = vunpack.c.h.b16 %v4419
        %v4578 = vunpack.c.l.b16 %v4420
        %v4579 = vunpack.c.h.b16 %v4420
        %v4580 = vunpack.c.l.b16 %v4421
        %v4581 = vunpack.c.h.b16 %v4421
        %v4582 = vunpack.c.l.b16 %v4422
        %v4583 = vunpack.c.h.b16 %v4422
        %v4584 = vunpack.c.l.b16 %v4423
        %v4585 = vunpack.c.h.b16 %v4423
        %v4586 = vunpack.c.l.b16 %v4424
        %v4587 = vunpack.c.h.b16 %v4424
        %v4588 = vunpack.c.l.b16 %v4425
        %v4589 = vunpack.c.h.b16 %v4425
        %v4590 = vunpack.c.l.b16 %v4426
        %v4591 = vunpack.c.h.b16 %v4426
        %v4592 = vunpack.c.l.b16 %v4427
        %v4593 = vunpack.c.h.b16 %v4427
        %v4594 = vunpack.c.l.b16 %v4428
        %v4595 = vunpack.c.h.b16 %v4428
        %v4596 = vunpack.c.l.b16 %v4429
        %v4597 = vunpack.c.h.b16 %v4429
        %v4598 = vunpack.c.l.b16 %v4430
        %v4599 = vunpack.c.h.b16 %v4430
        %v4600 = vunpack.c.l.b16 %v4431
        %v4601 = vunpack.c.h.b16 %v4431
        %v4602 = vunpack.c.l.b16 %v4432
        %v4603 = vunpack.c.h.b16 %v4432
        %v4604 = vunpack.c.l.b16 %v4433
        %v4605 = vunpack.c.h.b16 %v4433
        %v4606 = vunpack.c.l.b16 %v4434
        %v4607 = vunpack.c.h.b16 %v4434
        %v4608 = vunpack.c.l.b16 %v4435
        %v4609 = vunpack.c.h.b16 %v4435
        %v4610 = vunpack.c.l.b16 %v4436
        %v4611 = vunpack.c.h.b16 %v4436
        %v4612 = vunpack.c.l.b16 %v4437
        %v4613 = vunpack.c.h.b16 %v4437
        %v4614 = vunpack.c.l.b16 %v4438
        %v4615 = vunpack.c.h.b16 %v4438
        %v4616 = vunpack.c.l.b16 %v4439
        %v4617 = vunpack.c.h.b16 %v4439
        %v4618 = vunpack.c.l.b16 %v4440
        %v4619 = vunpack.c.h.b16 %v4440
        %v4620 = vunpack.c.l.b16 %v4441
        %v4621 = vunpack.c.h.b16 %v4441
        %v4622 = vunpack.c.l.b16 %v4442
        %v4623 = vunpack.c.h.b16 %v4442
        %v4624 = vunpack.c.l.b16 %v4443
        %v4625 = vunpack.c.h.b16 %v4443
        %v4626 = vunpack.c.l.b16 %v4444
        %v4627 = vunpack.c.h.b16 %v4444
        %v4628 = vunpack.c.l.b16 %v4445
        %v4629 = vunpack.c.h.b16 %v4445
        %v4630 = vunpack.c.l.b16 %v4446
        %v4631 = vunpack.c.h.b16 %v4446
        %v4632 = vunpack.c.l.b16 %v4447
        %v4633 = vunpack.c.h.b16 %v4447
        %v4634 = vunpack.c.l.b16 %v4448
        %v4635 = vunpack.c.h.b16 %v4448
        %v4636 = vunpack.c.l.b16 %v4449
        %v4637 = vunpack.c.h.b16 %v4449
        %v4638 = vunpack.c.l.b16 %v4450
        %v4639 = vunpack.c.h.b16 %v4450
        %v4640 = vunpack.c.l.b16 %v4451
        %v4641 = vunpack.c.h.b16 %v4451
        %v4642 = vunpack.c.l.b16 %v4452
        %v4643 = vunpack.c.h.b16 %v4452
        %v4644 = vunpack.c.l.b16 %v4453
        %v4645 = vunpack.c.h.b16 %v4453
        %v4646 = vunpack.c.l.b16 %v4454
        %v4647 = vunpack.c.h.b16 %v4454
        %v4648 = vunpack.c.l.b16 %v4455
        %v4649 = vunpack.c.h.b16 %v4455
        %v4650 = vunpack.c.l.b16 %v4456
        %v4651 = vunpack.c.h.b16 %v4456
        %v4652 = vunpack.c.l.b16 %v4457
        %v4653 = vunpack.c.h.b16 %v4457
        %v4654 = vunpack.c.l.b16 %v4458
        %v4655 = vunpack.c.h.b16 %v4458
        %v4656 = vunpack.c.l.b16 %v4459
        %v4657 = vunpack.c.h.b16 %v4459
        %v4658 = vpack.c.b16 %v4534, %v4530
        %v4659 = vpack.c.b16 %v4535, %v4531
        %v4660 = vpack.c.b16 %v4536, %v4532
        %v4661 = vpack.c.b16 %v4537, %v4533
        %v4662 = vpack.c.b16 %v4542, %v4538
        %v4663 = vpack.c.b16 %v4543, %v4539
        %v4664 = vpack.c.b16 %v4544, %v4540
        %v4665 = vpack.c.b16 %v4545, %v4541
        %v4666 = vpack.c.b16 %v4550, %v4546
        %v4667 = vpack.c.b16 %v4551, %v4547
        %v4668 = vpack.c.b16 %v4552, %v4548
        %v4669 = vpack.c.b16 %v4553, %v4549
        %v4670 = vpack.c.b16 %v4558, %v4554
        %v4671 = vpack.c.b16 %v4559, %v4555
        %v4672 = vpack.c.b16 %v4560, %v4556
        %v4673 = vpack.c.b16 %v4561, %v4557
        %v4674 = vpack.c.b16 %v4566, %v4562
        %v4675 = vpack.c.b16 %v4567, %v4563
        %v4676 = vpack.c.b16 %v4568, %v4564
        %v4677 = vpack.c.b16 %v4569, %v4565
        %v4678 = vpack.c.b16 %v4574, %v4570
        %v4679 = vpack.c.b16 %v4575, %v4571
        %v4680 = vpack.c.b16 %v4576, %v4572
        %v4681 = vpack.c.b16 %v4577, %v4573
        %v4682 = vpack.c.b16 %v4582, %v4578
        %v4683 = vpack.c.b16 %v4583, %v4579
        %v4684 = vpack.c.b16 %v4584, %v4580
        %v4685 = vpack.c.b16 %v4585, %v4581
        %v4686 = vpack.c.b16 %v4590, %v4586
        %v4687 = vpack.c.b16 %v4591, %v4587
        %v4688 = vpack.c.b16 %v4592, %v4588
        %v4689 = vpack.c.b16 %v4593, %v4589
        %v4690 = vpack.c.b16 %v4598, %v4594
        %v4691 = vpack.c.b16 %v4599, %v4595
        %v4692 = vpack.c.b16 %v4600, %v4596
        %v4693 = vpack.c.b16 %v4601, %v4597
        %v4694 = vpack.c.b16 %v4606, %v4602
        %v4695 = vpack.c.b16 %v4607, %v4603
        %v4696 = vpack.c.b16 %v4608, %v4604
        %v4697 = vpack.c.b16 %v4609, %v4605
        %v4698 = vpack.c.b16 %v4614, %v4610
        %v4699 = vpack.c.b16 %v4615, %v4611
        %v4700 = vpack.c.b16 %v4616, %v4612
        %v4701 = vpack.c.b16 %v4617, %v4613
        %v4702 = vpack.c.b16 %v4622, %v4618
        %v4703 = vpack.c.b16 %v4623, %v4619
        %v4704 = vpack.c.b16 %v4624, %v4620
        %v4705 = vpack.c.b16 %v4625, %v4621
        %v4706 = vpack.c.b16 %v4630, %v4626
        %v4707 = vpack.c.b16 %v4631, %v4627
        %v4708 = vpack.c.b16 %v4632, %v4628
        %v4709 = vpack.c.b16 %v4633, %v4629
        %v4710 = vpack.c.b16 %v4638, %v4634
        %v4711 = vpack.c.b16 %v4639, %v4635
        %v4712 = vpack.c.b16 %v4640, %v4636
        %v4713 = vpack.c.b16 %v4641, %v4637
        %v4714 = vpack.c.b16 %v4646, %v4642
        %v4715 = vpack.c.b16 %v4647, %v4643
        %v4716 = vpack.c.b16 %v4648, %v4644
        %v4717 = vpack.c.b16 %v4649, %v4645
        %v4718 = vpack.c.b16 %v4654, %v4650
        %v4719 = vpack.c.b16 %v4655, %v4651
        %v4720 = vpack.c.b16 %v4656, %v4652
        %v4721 = vpack.c.b16 %v4657, %v4653
        %4786 = vmatprep.subr.bf16.mxu0 %v4659
        %4787 = vmatpush1.bf16.msra.mxu0 %v4658
        %4788 = vmatprep.subr.bf16.mxu0 %v4663
        %4789 = vmatpush1.bf16.msra.mxu0 %v4662
        %4790 = vmatprep.subr.bf16.mxu0 %v4667
        %4791 = vmatpush1.bf16.msra.mxu0 %v4666
        %4792 = vmatprep.subr.bf16.mxu0 %v4671
        %4793 = vmatpush1.bf16.msra.mxu0 %v4670
        %4794 = vmatprep.subr.bf16.mxu0 %v4675
        %4795 = vmatpush1.bf16.msra.mxu0 %v4674
        %4796 = vmatprep.subr.bf16.mxu0 %v4679
        %4797 = vmatpush1.bf16.msra.mxu0 %v4678
        %4798 = vmatprep.subr.bf16.mxu0 %v4683
        %4799 = vmatpush1.bf16.msra.mxu0 %v4682
        %4800 = vmatprep.subr.bf16.mxu0 %v4687
        %4801 = vmatpush1.bf16.msra.mxu0 %v4686
        %4802 = vmatprep.subr.bf16.mxu0 %v4691
        %4803 = vmatpush1.bf16.msra.mxu0 %v4690
        %4804 = vmatprep.subr.bf16.mxu0 %v4695
        %4805 = vmatpush1.bf16.msra.mxu0 %v4694
        %4806 = vmatprep.subr.bf16.mxu0 %v4699
        %4807 = vmatpush1.bf16.msra.mxu0 %v4698
        %4808 = vmatprep.subr.bf16.mxu0 %v4703
        %4809 = vmatpush1.bf16.msra.mxu0 %v4702
        %4810 = vmatprep.subr.bf16.mxu0 %v4707
        %4811 = vmatpush1.bf16.msra.mxu0 %v4706
        %4812 = vmatprep.subr.bf16.mxu0 %v4711
        %4813 = vmatpush1.bf16.msra.mxu0 %v4710
        %4814 = vmatprep.subr.bf16.mxu0 %v4715
        %4815 = vmatpush1.bf16.msra.mxu0 %v4714
        %4816 = vmatprep.subr.bf16.mxu0 %v4719
        %4817 = vmatpush1.bf16.msra.mxu0 %v4718
        %4818 = vmatprep.mubr.bf16.mxu0 %v4463
        %4819 = vmatmul.mubr.bf16.gmra.mrb[0].mxu0 %v4462
        %v4820 = vpop.f32.mrb[0].mxu0
        %v4821 = vadd.f32 0.0, %v4820
        %v4822 = vpop.f32.mrb[0].mxu0
        %v4823 = vadd.f32 0.0, %v4822
        %v4824 = vpop.f32.mrb[0].mxu0
        %v4825 = vpop.f32.mrb[0].mxu0
        %4826 = vdwg.mxu0
        %4827 = vmatprep.subr.bf16.mxu0 %v4661
        %4828 = vmatpush1.bf16.msra.mxu0 %v4660
        %4829 = vmatprep.subr.bf16.mxu0 %v4665
        %4830 = vmatpush1.bf16.msra.mxu0 %v4664
        %4831 = vmatprep.subr.bf16.mxu0 %v4669
        %4832 = vmatpush1.bf16.msra.mxu0 %v4668
        %4833 = vmatprep.subr.bf16.mxu0 %v4673
        %4834 = vmatpush1.bf16.msra.mxu0 %v4672
        %4835 = vmatprep.subr.bf16.mxu0 %v4677
        %4836 = vmatpush1.bf16.msra.mxu0 %v4676
        %4837 = vmatprep.subr.bf16.mxu0 %v4681
        %4838 = vmatpush1.bf16.msra.mxu0 %v4680
        %4839 = vmatprep.subr.bf16.mxu0 %v4685
        %4840 = vmatpush1.bf16.msra.mxu0 %v4684
        %4841 = vmatprep.subr.bf16.mxu0 %v4689
        %4842 = vmatpush1.bf16.msra.mxu0 %v4688
        %4843 = vmatprep.subr.bf16.mxu0 %v4693
        %4844 = vmatpush1.bf16.msra.mxu0 %v4692
        %4845 = vmatprep.subr.bf16.mxu0 %v4697
        %4846 = vmatpush1.bf16.msra.mxu0 %v4696
        %4847 = vmatprep.subr.bf16.mxu0 %v4701
        %4848 = vmatpush1.bf16.msra.mxu0 %v4700
        %4849 = vmatprep.subr.bf16.mxu0 %v4705
        %4850 = vmatpush1.bf16.msra.mxu0 %v4704
        %4851 = vmatprep.subr.bf16.mxu0 %v4709
        %4852 = vmatpush1.bf16.msra.mxu0 %v4708
        %4853 = vmatprep.subr.bf16.mxu0 %v4713
        %4854 = vmatpush1.bf16.msra.mxu0 %v4712
        %4855 = vmatprep.subr.bf16.mxu0 %v4717
        %4856 = vmatpush1.bf16.msra.mxu0 %v4716
        %4857 = vmatprep.subr.bf16.mxu0 %v4721
        %4858 = vmatpush1.bf16.msra.mxu0 %v4720
        %4859 = vmatprep.mubr.bf16.mxu0 %v4463
        %4860 = vmatmul.mubr.bf16.gmra.mrb[0].mxu0 %v4462
        %v4861 = vpop.f32.mrb[0].mxu0
        %v4862 = vadd.f32 0.0, %v4861
        %v4863 = vpop.f32.mrb[0].mxu0
        %v4864 = vadd.f32 0.0, %v4863
        %v4865 = vpop.f32.mrb[0].mxu0
        %v4866 = vpop.f32.mrb[0].mxu0
        %4867 = vdwg.mxu0
        %v4868 = vadd.f32 %v4385, %v4821
        %v4869 = vadd.f32 %v4386, %v4823
        %v4870 = vadd.f32 %v4387, %v4862
        %v4871 = vadd.f32 %v4388, %v4864
        %v4872 = vld [vmem:[#allocation3 + $0x10] sm:$0xff]
        %v4873 = vld [vmem:[#allocation3 + $0x18] sm:$0xff]
        %v4874 = vpack.c.bf16 %v4872, %v4872
        %v4875 = vpack.c.bf16 %v4873, %v4873
        %s4876 = scalar_lea.vmem [#allocation9], 3072
        %v4877 = vld [vmem:[%s4876] sm:$0xff]
        %v4878 = vld [vmem:[%s4876 + $0x8] sm:$0xff]
        %v4879 = vld [vmem:[%s4876 + $0x10] sm:$0xff]
        %v4880 = vld [vmem:[%s4876 + $0x18] sm:$0xff]
        %v4881 = vld [vmem:[%s4876 + $0x20] sm:$0xff]
        %v4882 = vld [vmem:[%s4876 + $0x28] sm:$0xff]
        %v4883 = vld [vmem:[%s4876 + $0x30] sm:$0xff]
        %v4884 = vld [vmem:[%s4876 + $0x38] sm:$0xff]
        %v4885 = vld [vmem:[%s4876 + $0x40] sm:$0xff]
        %v4886 = vld [vmem:[%s4876 + $0x48] sm:$0xff]
        %v4887 = vld [vmem:[%s4876 + $0x50] sm:$0xff]
        %v4888 = vld [vmem:[%s4876 + $0x58] sm:$0xff]
        %v4889 = vld [vmem:[%s4876 + $0x60] sm:$0xff]
        %v4890 = vld [vmem:[%s4876 + $0x68] sm:$0xff]
        %v4891 = vld [vmem:[%s4876 + $0x70] sm:$0xff]
        %v4892 = vld [vmem:[%s4876 + $0x78] sm:$0xff]
        %v4893 = vld [vmem:[%s4876 + $0x80] sm:$0xff]
        %v4894 = vld [vmem:[%s4876 + $0x88] sm:$0xff]
        %v4895 = vld [vmem:[%s4876 + $0x90] sm:$0xff]
        %v4896 = vld [vmem:[%s4876 + $0x98] sm:$0xff]
        %v4897 = vld [vmem:[%s4876 + $0xa0] sm:$0xff]
        %v4898 = vld [vmem:[%s4876 + $0xa8] sm:$0xff]
        %v4899 = vld [vmem:[%s4876 + $0xb0] sm:$0xff]
        %v4900 = vld [vmem:[%s4876 + $0xb8] sm:$0xff]
        %v4901 = vld [vmem:[%s4876 + $0xc0] sm:$0xff]
        %v4902 = vld [vmem:[%s4876 + $0xc8] sm:$0xff]
        %v4903 = vld [vmem:[%s4876 + $0xd0] sm:$0xff]
        %v4904 = vld [vmem:[%s4876 + $0xd8] sm:$0xff]
        %v4905 = vld [vmem:[%s4876 + $0xe0] sm:$0xff]
        %v4906 = vld [vmem:[%s4876 + $0xe8] sm:$0xff]
        %v4907 = vld [vmem:[%s4876 + $0xf0] sm:$0xff]
        %v4908 = vld [vmem:[%s4876 + $0xf8] sm:$0xff]
        %v4909 = vld [vmem:[%s4876 + $0x100] sm:$0xff]
        %v4910 = vld [vmem:[%s4876 + $0x108] sm:$0xff]
        %v4911 = vld [vmem:[%s4876 + $0x110] sm:$0xff]
        %v4912 = vld [vmem:[%s4876 + $0x118] sm:$0xff]
        %v4913 = vld [vmem:[%s4876 + $0x120] sm:$0xff]
        %v4914 = vld [vmem:[%s4876 + $0x128] sm:$0xff]
        %v4915 = vld [vmem:[%s4876 + $0x130] sm:$0xff]
        %v4916 = vld [vmem:[%s4876 + $0x138] sm:$0xff]
        %v4917 = vld [vmem:[%s4876 + $0x140] sm:$0xff]
        %v4918 = vld [vmem:[%s4876 + $0x148] sm:$0xff]
        %v4919 = vld [vmem:[%s4876 + $0x150] sm:$0xff]
        %v4920 = vld [vmem:[%s4876 + $0x158] sm:$0xff]
        %v4921 = vld [vmem:[%s4876 + $0x160] sm:$0xff]
        %v4922 = vld [vmem:[%s4876 + $0x168] sm:$0xff]
        %v4923 = vld [vmem:[%s4876 + $0x170] sm:$0xff]
        %v4924 = vld [vmem:[%s4876 + $0x178] sm:$0xff]
        %v4925 = vld [vmem:[%s4876 + $0x180] sm:$0xff]
        %v4926 = vld [vmem:[%s4876 + $0x188] sm:$0xff]
        %v4927 = vld [vmem:[%s4876 + $0x190] sm:$0xff]
        %v4928 = vld [vmem:[%s4876 + $0x198] sm:$0xff]
        %v4929 = vld [vmem:[%s4876 + $0x1a0] sm:$0xff]
        %v4930 = vld [vmem:[%s4876 + $0x1a8] sm:$0xff]
        %v4931 = vld [vmem:[%s4876 + $0x1b0] sm:$0xff]
        %v4932 = vld [vmem:[%s4876 + $0x1b8] sm:$0xff]
        %v4933 = vld [vmem:[%s4876 + $0x1c0] sm:$0xff]
        %v4934 = vld [vmem:[%s4876 + $0x1c8] sm:$0xff]
        %v4935 = vld [vmem:[%s4876 + $0x1d0] sm:$0xff]
        %v4936 = vld [vmem:[%s4876 + $0x1d8] sm:$0xff]
        %v4937 = vld [vmem:[%s4876 + $0x1e0] sm:$0xff]
        %v4938 = vld [vmem:[%s4876 + $0x1e8] sm:$0xff]
        %v4939 = vld [vmem:[%s4876 + $0x1f0] sm:$0xff]
        %v4940 = vld [vmem:[%s4876 + $0x1f8] sm:$0xff]
        %v5005 = vunpack.c.l.b16 %v4877
        %v5006 = vunpack.c.h.b16 %v4877
        %v5007 = vunpack.c.l.b16 %v4878
        %v5008 = vunpack.c.h.b16 %v4878
        %v5009 = vunpack.c.l.b16 %v4879
        %v5010 = vunpack.c.h.b16 %v4879
        %v5011 = vunpack.c.l.b16 %v4880
        %v5012 = vunpack.c.h.b16 %v4880
        %v5013 = vunpack.c.l.b16 %v4881
        %v5014 = vunpack.c.h.b16 %v4881
        %v5015 = vunpack.c.l.b16 %v4882
        %v5016 = vunpack.c.h.b16 %v4882
        %v5017 = vunpack.c.l.b16 %v4883
        %v5018 = vunpack.c.h.b16 %v4883
        %v5019 = vunpack.c.l.b16 %v4884
        %v5020 = vunpack.c.h.b16 %v4884
        %v5021 = vunpack.c.l.b16 %v4885
        %v5022 = vunpack.c.h.b16 %v4885
        %v5023 = vunpack.c.l.b16 %v4886
        %v5024 = vunpack.c.h.b16 %v4886
        %v5025 = vunpack.c.l.b16 %v4887
        %v5026 = vunpack.c.h.b16 %v4887
        %v5027 = vunpack.c.l.b16 %v4888
        %v5028 = vunpack.c.h.b16 %v4888
        %v5029 = vunpack.c.l.b16 %v4889
        %v5030 = vunpack.c.h.b16 %v4889
        %v5031 = vunpack.c.l.b16 %v4890
        %v5032 = vunpack.c.h.b16 %v4890
        %v5033 = vunpack.c.l.b16 %v4891
        %v5034 = vunpack.c.h.b16 %v4891
        %v5035 = vunpack.c.l.b16 %v4892
        %v5036 = vunpack.c.h.b16 %v4892
        %v5037 = vunpack.c.l.b16 %v4893
        %v5038 = vunpack.c.h.b16 %v4893
        %v5039 = vunpack.c.l.b16 %v4894
        %v5040 = vunpack.c.h.b16 %v4894
        %v5041 = vunpack.c.l.b16 %v4895
        %v5042 = vunpack.c.h.b16 %v4895
        %v5043 = vunpack.c.l.b16 %v4896
        %v5044 = vunpack.c.h.b16 %v4896
        %v5045 = vunpack.c.l.b16 %v4897
        %v5046 = vunpack.c.h.b16 %v4897
        %v5047 = vunpack.c.l.b16 %v4898
        %v5048 = vunpack.c.h.b16 %v4898
        %v5049 = vunpack.c.l.b16 %v4899
        %v5050 = vunpack.c.h.b16 %v4899
        %v5051 = vunpack.c.l.b16 %v4900
        %v5052 = vunpack.c.h.b16 %v4900
        %v5053 = vunpack.c.l.b16 %v4901
        %v5054 = vunpack.c.h.b16 %v4901
        %v5055 = vunpack.c.l.b16 %v4902
        %v5056 = vunpack.c.h.b16 %v4902
        %v5057 = vunpack.c.l.b16 %v4903
        %v5058 = vunpack.c.h.b16 %v4903
        %v5059 = vunpack.c.l.b16 %v4904
        %v5060 = vunpack.c.h.b16 %v4904
        %v5061 = vunpack.c.l.b16 %v4905
        %v5062 = vunpack.c.h.b16 %v4905
        %v5063 = vunpack.c.l.b16 %v4906
        %v5064 = vunpack.c.h.b16 %v4906
        %v5065 = vunpack.c.l.b16 %v4907
        %v5066 = vunpack.c.h.b16 %v4907
        %v5067 = vunpack.c.l.b16 %v4908
        %v5068 = vunpack.c.h.b16 %v4908
        %v5069 = vunpack.c.l.b16 %v4909
        %v5070 = vunpack.c.h.b16 %v4909
        %v5071 = vunpack.c.l.b16 %v4910
        %v5072 = vunpack.c.h.b16 %v4910
        %v5073 = vunpack.c.l.b16 %v4911
        %v5074 = vunpack.c.h.b16 %v4911
        %v5075 = vunpack.c.l.b16 %v4912
        %v5076 = vunpack.c.h.b16 %v4912
        %v5077 = vunpack.c.l.b16 %v4913
        %v5078 = vunpack.c.h.b16 %v4913
        %v5079 = vunpack.c.l.b16 %v4914
        %v5080 = vunpack.c.h.b16 %v4914
        %v5081 = vunpack.c.l.b16 %v4915
        %v5082 = vunpack.c.h.b16 %v4915
        %v5083 = vunpack.c.l.b16 %v4916
        %v5084 = vunpack.c.h.b16 %v4916
        %v5085 = vunpack.c.l.b16 %v4917
        %v5086 = vunpack.c.h.b16 %v4917
        %v5087 = vunpack.c.l.b16 %v4918
        %v5088 = vunpack.c.h.b16 %v4918
        %v5089 = vunpack.c.l.b16 %v4919
        %v5090 = vunpack.c.h.b16 %v4919
        %v5091 = vunpack.c.l.b16 %v4920
        %v5092 = vunpack.c.h.b16 %v4920
        %v5093 = vunpack.c.l.b16 %v4921
        %v5094 = vunpack.c.h.b16 %v4921
        %v5095 = vunpack.c.l.b16 %v4922
        %v5096 = vunpack.c.h.b16 %v4922
        %v5097 = vunpack.c.l.b16 %v4923
        %v5098 = vunpack.c.h.b16 %v4923
        %v5099 = vunpack.c.l.b16 %v4924
        %v5100 = vunpack.c.h.b16 %v4924
        %v5101 = vunpack.c.l.b16 %v4925
        %v5102 = vunpack.c.h.b16 %v4925
        %v5103 = vunpack.c.l.b16 %v4926
        %v5104 = vunpack.c.h.b16 %v4926
        %v5105 = vunpack.c.l.b16 %v4927
        %v5106 = vunpack.c.h.b16 %v4927
        %v5107 = vunpack.c.l.b16 %v4928
        %v5108 = vunpack.c.h.b16 %v4928
        %v5109 = vunpack.c.l.b16 %v4929
        %v5110 = vunpack.c.h.b16 %v4929
        %v5111 = vunpack.c.l.b16 %v4930
        %v5112 = vunpack.c.h.b16 %v4930
        %v5113 = vunpack.c.l.b16 %v4931
        %v5114 = vunpack.c.h.b16 %v4931
        %v5115 = vunpack.c.l.b16 %v4932
        %v5116 = vunpack.c.h.b16 %v4932
        %v5117 = vunpack.c.l.b16 %v4933
        %v5118 = vunpack.c.h.b16 %v4933
        %v5119 = vunpack.c.l.b16 %v4934
        %v5120 = vunpack.c.h.b16 %v4934
        %v5121 = vunpack.c.l.b16 %v4935
        %v5122 = vunpack.c.h.b16 %v4935
        %v5123 = vunpack.c.l.b16 %v4936
        %v5124 = vunpack.c.h.b16 %v4936
        %v5125 = vunpack.c.l.b16 %v4937
        %v5126 = vunpack.c.h.b16 %v4937
        %v5127 = vunpack.c.l.b16 %v4938
        %v5128 = vunpack.c.h.b16 %v4938
        %v5129 = vunpack.c.l.b16 %v4939
        %v5130 = vunpack.c.h.b16 %v4939
        %v5131 = vunpack.c.l.b16 %v4940
        %v5132 = vunpack.c.h.b16 %v4940
        %v5133 = vpack.c.b16 %v5009, %v5005
        %v5134 = vpack.c.b16 %v5010, %v5006
        %v5135 = vpack.c.b16 %v5011, %v5007
        %v5136 = vpack.c.b16 %v5012, %v5008
        %v5137 = vpack.c.b16 %v5017, %v5013
        %v5138 = vpack.c.b16 %v5018, %v5014
        %v5139 = vpack.c.b16 %v5019, %v5015
        %v5140 = vpack.c.b16 %v5020, %v5016
        %v5141 = vpack.c.b16 %v5025, %v5021
        %v5142 = vpack.c.b16 %v5026, %v5022
        %v5143 = vpack.c.b16 %v5027, %v5023
        %v5144 = vpack.c.b16 %v5028, %v5024
        %v5145 = vpack.c.b16 %v5033, %v5029
        %v5146 = vpack.c.b16 %v5034, %v5030
        %v5147 = vpack.c.b16 %v5035, %v5031
        %v5148 = vpack.c.b16 %v5036, %v5032
        %v5149 = vpack.c.b16 %v5041, %v5037
        %v5150 = vpack.c.b16 %v5042, %v5038
        %v5151 = vpack.c.b16 %v5043, %v5039
        %v5152 = vpack.c.b16 %v5044, %v5040
        %v5153 = vpack.c.b16 %v5049, %v5045
        %v5154 = vpack.c.b16 %v5050, %v5046
        %v5155 = vpack.c.b16 %v5051, %v5047
        %v5156 = vpack.c.b16 %v5052, %v5048
        %v5157 = vpack.c.b16 %v5057, %v5053
        %v5158 = vpack.c.b16 %v5058, %v5054
        %v5159 = vpack.c.b16 %v5059, %v5055
        %v5160 = vpack.c.b16 %v5060, %v5056
        %v5161 = vpack.c.b16 %v5065, %v5061
        %v5162 = vpack.c.b16 %v5066, %v5062
        %v5163 = vpack.c.b16 %v5067, %v5063
        %v5164 = vpack.c.b16 %v5068, %v5064
        %v5165 = vpack.c.b16 %v5073, %v5069
        %v5166 = vpack.c.b16 %v5074, %v5070
        %v5167 = vpack.c.b16 %v5075, %v5071
        %v5168 = vpack.c.b16 %v5076, %v5072
        %v5169 = vpack.c.b16 %v5081, %v5077
        %v5170 = vpack.c.b16 %v5082, %v5078
        %v5171 = vpack.c.b16 %v5083, %v5079
        %v5172 = vpack.c.b16 %v5084, %v5080
        %v5173 = vpack.c.b16 %v5089, %v5085
        %v5174 = vpack.c.b16 %v5090, %v5086
        %v5175 = vpack.c.b16 %v5091, %v5087
        %v5176 = vpack.c.b16 %v5092, %v5088
        %v5177 = vpack.c.b16 %v5097, %v5093
        %v5178 = vpack.c.b16 %v5098, %v5094
        %v5179 = vpack.c.b16 %v5099, %v5095
        %v5180 = vpack.c.b16 %v5100, %v5096
        %v5181 = vpack.c.b16 %v5105, %v5101
        %v5182 = vpack.c.b16 %v5106, %v5102
        %v5183 = vpack.c.b16 %v5107, %v5103
        %v5184 = vpack.c.b16 %v5108, %v5104
        %v5185 = vpack.c.b16 %v5113, %v5109
        %v5186 = vpack.c.b16 %v5114, %v5110
        %v5187 = vpack.c.b16 %v5115, %v5111
        %v5188 = vpack.c.b16 %v5116, %v5112
        %v5189 = vpack.c.b16 %v5121, %v5117
        %v5190 = vpack.c.b16 %v5122, %v5118
        %v5191 = vpack.c.b16 %v5123, %v5119
        %v5192 = vpack.c.b16 %v5124, %v5120
        %v5193 = vpack.c.b16 %v5129, %v5125
        %v5194 = vpack.c.b16 %v5130, %v5126
        %v5195 = vpack.c.b16 %v5131, %v5127
        %v5196 = vpack.c.b16 %v5132, %v5128
        %5261 = vmatprep.subr.bf16.mxu0 %v5134
        %5262 = vmatpush1.bf16.msra.mxu0 %v5133
        %5263 = vmatprep.subr.bf16.mxu0 %v5138
        %5264 = vmatpush1.bf16.msra.mxu0 %v5137
        %5265 = vmatprep.subr.bf16.mxu0 %v5142
        %5266 = vmatpush1.bf16.msra.mxu0 %v5141
        %5267 = vmatprep.subr.bf16.mxu0 %v5146
        %5268 = vmatpush1.bf16.msra.mxu0 %v5145
        %5269 = vmatprep.subr.bf16.mxu0 %v5150
        %5270 = vmatpush1.bf16.msra.mxu0 %v5149
        %5271 = vmatprep.subr.bf16.mxu0 %v5154
        %5272 = vmatpush1.bf16.msra.mxu0 %v5153
        %5273 = vmatprep.subr.bf16.mxu0 %v5158
        %5274 = vmatpush1.bf16.msra.mxu0 %v5157
        %5275 = vmatprep.subr.bf16.mxu0 %v5162
        %5276 = vmatpush1.bf16.msra.mxu0 %v5161
        %5277 = vmatprep.subr.bf16.mxu0 %v5166
        %5278 = vmatpush1.bf16.msra.mxu0 %v5165
        %5279 = vmatprep.subr.bf16.mxu0 %v5170
        %5280 = vmatpush1.bf16.msra.mxu0 %v5169
        %5281 = vmatprep.subr.bf16.mxu0 %v5174
        %5282 = vmatpush1.bf16.msra.mxu0 %v5173
        %5283 = vmatprep.subr.bf16.mxu0 %v5178
        %5284 = vmatpush1.bf16.msra.mxu0 %v5177
        %5285 = vmatprep.subr.bf16.mxu0 %v5182
        %5286 = vmatpush1.bf16.msra.mxu0 %v5181
        %5287 = vmatprep.subr.bf16.mxu0 %v5186
        %5288 = vmatpush1.bf16.msra.mxu0 %v5185
        %5289 = vmatprep.subr.bf16.mxu0 %v5190
        %5290 = vmatpush1.bf16.msra.mxu0 %v5189
        %5291 = vmatprep.subr.bf16.mxu0 %v5194
        %5292 = vmatpush1.bf16.msra.mxu0 %v5193
        %5293 = vmatprep.mubr.bf16.mxu0 %v4875
        %5294 = vmatmul.mubr.bf16.gmra.mrb[0].mxu0 %v4874
        %v5295 = vpop.f32.mrb[0].mxu0
        %v5296 = vadd.f32 0.0, %v5295
        %v5297 = vpop.f32.mrb[0].mxu0
        %v5298 = vadd.f32 0.0, %v5297
        %v5299 = vpop.f32.mrb[0].mxu0
        %v5300 = vpop.f32.mrb[0].mxu0
        %5301 = vdwg.mxu0
        %5302 = vmatprep.subr.bf16.mxu0 %v5136
        %5303 = vmatpush1.bf16.msra.mxu0 %v5135
        %5304 = vmatprep.subr.bf16.mxu0 %v5140
        %5305 = vmatpush1.bf16.msra.mxu0 %v5139
        %5306 = vmatprep.subr.bf16.mxu0 %v5144
        %5307 = vmatpush1.bf16.msra.mxu0 %v5143
        %5308 = vmatprep.subr.bf16.mxu0 %v5148
        %5309 = vmatpush1.bf16.msra.mxu0 %v5147
        %5310 = vmatprep.subr.bf16.mxu0 %v5152
        %5311 = vmatpush1.bf16.msra.mxu0 %v5151
        %5312 = vmatprep.subr.bf16.mxu0 %v5156
        %5313 = vmatpush1.bf16.msra.mxu0 %v5155
        %5314 = vmatprep.subr.bf16.mxu0 %v5160
        %5315 = vmatpush1.bf16.msra.mxu0 %v5159
        %5316 = vmatprep.subr.bf16.mxu0 %v5164
        %5317 = vmatpush1.bf16.msra.mxu0 %v5163
        %5318 = vmatprep.subr.bf16.mxu0 %v5168
        %5319 = vmatpush1.bf16.msra.mxu0 %v5167
        %5320 = vmatprep.subr.bf16.mxu0 %v5172
        %5321 = vmatpush1.bf16.msra.mxu0 %v5171
        %5322 = vmatprep.subr.bf16.mxu0 %v5176
        %5323 = vmatpush1.bf16.msra.mxu0 %v5175
        %5324 = vmatprep.subr.bf16.mxu0 %v5180
        %5325 = vmatpush1.bf16.msra.mxu0 %v5179
        %5326 = vmatprep.subr.bf16.mxu0 %v5184
        %5327 = vmatpush1.bf16.msra.mxu0 %v5183
        %5328 = vmatprep.subr.bf16.mxu0 %v5188
        %5329 = vmatpush1.bf16.msra.mxu0 %v5187
        %5330 = vmatprep.subr.bf16.mxu0 %v5192
        %5331 = vmatpush1.bf16.msra.mxu0 %v5191
        %5332 = vmatprep.subr.bf16.mxu0 %v5196
        %5333 = vmatpush1.bf16.msra.mxu0 %v5195
        %5334 = vmatprep.mubr.bf16.mxu0 %v4875
        %5335 = vmatmul.mubr.bf16.gmra.mrb[0].mxu0 %v4874
        %v5336 = vpop.f32.mrb[0].mxu0
        %v5337 = vadd.f32 0.0, %v5336
        %v5338 = vpop.f32.mrb[0].mxu0
        %v5339 = vadd.f32 0.0, %v5338
        %v5340 = vpop.f32.mrb[0].mxu0
        %v5341 = vpop.f32.mrb[0].mxu0
        %5342 = vdwg.mxu0
        %v5343 = vadd.f32 %v4868, %v5296
        %v5344 = vadd.f32 %v4869, %v5298
        %v5345 = vadd.f32 %v4870, %v5337
        %v5346 = vadd.f32 %v4871, %v5339
        %v5347 = vld [vmem:[#allocation3 + $0x10] sm:$0xfe]
        %v5348 = vld [vmem:[#allocation3 + $0x18] sm:$0xfe]
        %v5349 = vld [vmem:[#allocation3 + $0x20] sm:$0x1]
        %v5350 = vld [vmem:[#allocation3 + $0x28] sm:$0x1]
        %v5351 = vpack.c.bf16 %v5349, %v5347
        %v5352 = vpack.c.bf16 %v5350, %v5348
        %s5353 = scalar_lea.vmem [#allocation9], 3584
        %v5354 = vld [vmem:[%s5353] sm:$0xff]
        %v5355 = vld [vmem:[%s5353 + $0x8] sm:$0xff]
        %v5356 = vld [vmem:[%s5353 + $0x10] sm:$0xff]
        %v5357 = vld [vmem:[%s5353 + $0x18] sm:$0xff]
        %v5358 = vld [vmem:[%s5353 + $0x20] sm:$0xff]
        %v5359 = vld [vmem:[%s5353 + $0x28] sm:$0xff]
        %v5360 = vld [vmem:[%s5353 + $0x30] sm:$0xff]
        %v5361 = vld [vmem:[%s5353 + $0x38] sm:$0xff]
        %v5362 = vld [vmem:[%s5353 + $0x40] sm:$0xff]
        %v5363 = vld [vmem:[%s5353 + $0x48] sm:$0xff]
        %v5364 = vld [vmem:[%s5353 + $0x50] sm:$0xff]
        %v5365 = vld [vmem:[%s5353 + $0x58] sm:$0xff]
        %v5366 = vld [vmem:[%s5353 + $0x60] sm:$0xff]
        %v5367 = vld [vmem:[%s5353 + $0x68] sm:$0xff]
        %v5368 = vld [vmem:[%s5353 + $0x70] sm:$0xff]
        %v5369 = vld [vmem:[%s5353 + $0x78] sm:$0xff]
        %v5370 = vld [vmem:[%s5353 + $0x80] sm:$0xff]
        %v5371 = vld [vmem:[%s5353 + $0x88] sm:$0xff]
        %v5372 = vld [vmem:[%s5353 + $0x90] sm:$0xff]
        %v5373 = vld [vmem:[%s5353 + $0x98] sm:$0xff]
        %v5374 = vld [vmem:[%s5353 + $0xa0] sm:$0xff]
        %v5375 = vld [vmem:[%s5353 + $0xa8] sm:$0xff]
        %v5376 = vld [vmem:[%s5353 + $0xb0] sm:$0xff]
        %v5377 = vld [vmem:[%s5353 + $0xb8] sm:$0xff]
        %v5378 = vld [vmem:[%s5353 + $0xc0] sm:$0xff]
        %v5379 = vld [vmem:[%s5353 + $0xc8] sm:$0xff]
        %v5380 = vld [vmem:[%s5353 + $0xd0] sm:$0xff]
        %v5381 = vld [vmem:[%s5353 + $0xd8] sm:$0xff]
        %v5382 = vld [vmem:[%s5353 + $0xe0] sm:$0xff]
        %v5383 = vld [vmem:[%s5353 + $0xe8] sm:$0xff]
        %v5384 = vld [vmem:[%s5353 + $0xf0] sm:$0xff]
        %v5385 = vld [vmem:[%s5353 + $0xf8] sm:$0xff]
        %v5386 = vld [vmem:[%s5353 + $0x100] sm:$0xff]
        %v5387 = vld [vmem:[%s5353 + $0x108] sm:$0xff]
        %v5388 = vld [vmem:[%s5353 + $0x110] sm:$0xff]
        %v5389 = vld [vmem:[%s5353 + $0x118] sm:$0xff]
        %v5390 = vld [vmem:[%s5353 + $0x120] sm:$0xff]
        %v5391 = vld [vmem:[%s5353 + $0x128] sm:$0xff]
        %v5392 = vld [vmem:[%s5353 + $0x130] sm:$0xff]
        %v5393 = vld [vmem:[%s5353 + $0x138] sm:$0xff]
        %v5394 = vld [vmem:[%s5353 + $0x140] sm:$0xff]
        %v5395 = vld [vmem:[%s5353 + $0x148] sm:$0xff]
        %v5396 = vld [vmem:[%s5353 + $0x150] sm:$0xff]
        %v5397 = vld [vmem:[%s5353 + $0x158] sm:$0xff]
        %v5398 = vld [vmem:[%s5353 + $0x160] sm:$0xff]
        %v5399 = vld [vmem:[%s5353 + $0x168] sm:$0xff]
        %v5400 = vld [vmem:[%s5353 + $0x170] sm:$0xff]
        %v5401 = vld [vmem:[%s5353 + $0x178] sm:$0xff]
        %v5402 = vld [vmem:[%s5353 + $0x180] sm:$0xff]
        %v5403 = vld [vmem:[%s5353 + $0x188] sm:$0xff]
        %v5404 = vld [vmem:[%s5353 + $0x190] sm:$0xff]
        %v5405 = vld [vmem:[%s5353 + $0x198] sm:$0xff]
        %v5406 = vld [vmem:[%s5353 + $0x1a0] sm:$0xff]
        %v5407 = vld [vmem:[%s5353 + $0x1a8] sm:$0xff]
        %v5408 = vld [vmem:[%s5353 + $0x1b0] sm:$0xff]
        %v5409 = vld [vmem:[%s5353 + $0x1b8] sm:$0xff]
        %v5410 = vld [vmem:[%s5353 + $0x1c0] sm:$0xff]
        %v5411 = vld [vmem:[%s5353 + $0x1c8] sm:$0xff]
        %v5412 = vld [vmem:[%s5353 + $0x1d0] sm:$0xff]
        %v5413 = vld [vmem:[%s5353 + $0x1d8] sm:$0xff]
        %v5414 = vld [vmem:[%s5353 + $0x1e0] sm:$0xff]
        %v5415 = vld [vmem:[%s5353 + $0x1e8] sm:$0xff]
        %v5416 = vld [vmem:[%s5353 + $0x1f0] sm:$0xff]
        %v5417 = vld [vmem:[%s5353 + $0x1f8] sm:$0xff]
        %v5419 = vshrl.u32 %v5351, 16
        %v5421 = vshll.u32 %v5351, 16
        %v5423 = vrot.slane %v5421, 1
        %v5424 = vor.u32 %v5419, %v5423
        %v5426 = vshrl.u32 %v5352, 16
        %v5428 = vshll.u32 %v5352, 16
        %v5430 = vrot.slane %v5428, 1
        %v5431 = vor.u32 %v5426, %v5430
        %v5498 = vunpack.c.l.b16 %v5354
        %v5499 = vunpack.c.h.b16 %v5354
        %v5500 = vunpack.c.l.b16 %v5355
        %v5501 = vunpack.c.h.b16 %v5355
        %v5502 = vunpack.c.l.b16 %v5356
        %v5503 = vunpack.c.h.b16 %v5356
        %v5504 = vunpack.c.l.b16 %v5357
        %v5505 = vunpack.c.h.b16 %v5357
        %v5506 = vunpack.c.l.b16 %v5358
        %v5507 = vunpack.c.h.b16 %v5358
        %v5508 = vunpack.c.l.b16 %v5359
        %v5509 = vunpack.c.h.b16 %v5359
        %v5510 = vunpack.c.l.b16 %v5360
        %v5511 = vunpack.c.h.b16 %v5360
        %v5512 = vunpack.c.l.b16 %v5361
        %v5513 = vunpack.c.h.b16 %v5361
        %v5514 = vunpack.c.l.b16 %v5362
        %v5515 = vunpack.c.h.b16 %v5362
        %v5516 = vunpack.c.l.b16 %v5363
        %v5517 = vunpack.c.h.b16 %v5363
        %v5518 = vunpack.c.l.b16 %v5364
        %v5519 = vunpack.c.h.b16 %v5364
        %v5520 = vunpack.c.l.b16 %v5365
        %v5521 = vunpack.c.h.b16 %v5365
        %v5522 = vunpack.c.l.b16 %v5366
        %v5523 = vunpack.c.h.b16 %v5366
        %v5524 = vunpack.c.l.b16 %v5367
        %v5525 = vunpack.c.h.b16 %v5367
        %v5526 = vunpack.c.l.b16 %v5368
        %v5527 = vunpack.c.h.b16 %v5368
        %v5528 = vunpack.c.l.b16 %v5369
        %v5529 = vunpack.c.h.b16 %v5369
        %v5530 = vunpack.c.l.b16 %v5370
        %v5531 = vunpack.c.h.b16 %v5370
        %v5532 = vunpack.c.l.b16 %v5371
        %v5533 = vunpack.c.h.b16 %v5371
        %v5534 = vunpack.c.l.b16 %v5372
        %v5535 = vunpack.c.h.b16 %v5372
        %v5536 = vunpack.c.l.b16 %v5373
        %v5537 = vunpack.c.h.b16 %v5373
        %v5538 = vunpack.c.l.b16 %v5374
        %v5539 = vunpack.c.h.b16 %v5374
        %v5540 = vunpack.c.l.b16 %v5375
        %v5541 = vunpack.c.h.b16 %v5375
        %v5542 = vunpack.c.l.b16 %v5376
        %v5543 = vunpack.c.h.b16 %v5376
        %v5544 = vunpack.c.l.b16 %v5377
        %v5545 = vunpack.c.h.b16 %v5377
        %v5546 = vunpack.c.l.b16 %v5378
        %v5547 = vunpack.c.h.b16 %v5378
        %v5548 = vunpack.c.l.b16 %v5379
        %v5549 = vunpack.c.h.b16 %v5379
        %v5550 = vunpack.c.l.b16 %v5380
        %v5551 = vunpack.c.h.b16 %v5380
        %v5552 = vunpack.c.l.b16 %v5381
        %v5553 = vunpack.c.h.b16 %v5381
        %v5554 = vunpack.c.l.b16 %v5382
        %v5555 = vunpack.c.h.b16 %v5382
        %v5556 = vunpack.c.l.b16 %v5383
        %v5557 = vunpack.c.h.b16 %v5383
        %v5558 = vunpack.c.l.b16 %v5384
        %v5559 = vunpack.c.h.b16 %v5384
        %v5560 = vunpack.c.l.b16 %v5385
        %v5561 = vunpack.c.h.b16 %v5385
        %v5562 = vunpack.c.l.b16 %v5386
        %v5563 = vunpack.c.h.b16 %v5386
        %v5564 = vunpack.c.l.b16 %v5387
        %v5565 = vunpack.c.h.b16 %v5387
        %v5566 = vunpack.c.l.b16 %v5388
        %v5567 = vunpack.c.h.b16 %v5388
        %v5568 = vunpack.c.l.b16 %v5389
        %v5569 = vunpack.c.h.b16 %v5389
        %v5570 = vunpack.c.l.b16 %v5390
        %v5571 = vunpack.c.h.b16 %v5390
        %v5572 = vunpack.c.l.b16 %v5391
        %v5573 = vunpack.c.h.b16 %v5391
        %v5574 = vunpack.c.l.b16 %v5392
        %v5575 = vunpack.c.h.b16 %v5392
        %v5576 = vunpack.c.l.b16 %v5393
        %v5577 = vunpack.c.h.b16 %v5393
        %v5578 = vunpack.c.l.b16 %v5394
        %v5579 = vunpack.c.h.b16 %v5394
        %v5580 = vunpack.c.l.b16 %v5395
        %v5581 = vunpack.c.h.b16 %v5395
        %v5582 = vunpack.c.l.b16 %v5396
        %v5583 = vunpack.c.h.b16 %v5396
        %v5584 = vunpack.c.l.b16 %v5397
        %v5585 = vunpack.c.h.b16 %v5397
        %v5586 = vunpack.c.l.b16 %v5398
        %v5587 = vunpack.c.h.b16 %v5398
        %v5588 = vunpack.c.l.b16 %v5399
        %v5589 = vunpack.c.h.b16 %v5399
        %v5590 = vunpack.c.l.b16 %v5400
        %v5591 = vunpack.c.h.b16 %v5400
        %v5592 = vunpack.c.l.b16 %v5401
        %v5593 = vunpack.c.h.b16 %v5401
        %v5594 = vunpack.c.l.b16 %v5402
        %v5595 = vunpack.c.h.b16 %v5402
        %v5596 = vunpack.c.l.b16 %v5403
        %v5597 = vunpack.c.h.b16 %v5403
        %v5598 = vunpack.c.l.b16 %v5404
        %v5599 = vunpack.c.h.b16 %v5404
        %v5600 = vunpack.c.l.b16 %v5405
        %v5601 = vunpack.c.h.b16 %v5405
        %v5602 = vunpack.c.l.b16 %v5406
        %v5603 = vunpack.c.h.b16 %v5406
        %v5604 = vunpack.c.l.b16 %v5407
        %v5605 = vunpack.c.h.b16 %v5407
        %v5606 = vunpack.c.l.b16 %v5408
        %v5607 = vunpack.c.h.b16 %v5408
        %v5608 = vunpack.c.l.b16 %v5409
        %v5609 = vunpack.c.h.b16 %v5409
        %v5610 = vunpack.c.l.b16 %v5410
        %v5611 = vunpack.c.h.b16 %v5410
        %v5612 = vunpack.c.l.b16 %v5411
        %v5613 = vunpack.c.h.b16 %v5411
        %v5614 = vunpack.c.l.b16 %v5412
        %v5615 = vunpack.c.h.b16 %v5412
        %v5616 = vunpack.c.l.b16 %v5413
        %v5617 = vunpack.c.h.b16 %v5413
        %v5618 = vunpack.c.l.b16 %v5414
        %v5619 = vunpack.c.h.b16 %v5414
        %v5620 = vunpack.c.l.b16 %v5415
        %v5621 = vunpack.c.h.b16 %v5415
        %v5622 = vunpack.c.l.b16 %v5416
        %v5623 = vunpack.c.h.b16 %v5416
        %v5624 = vunpack.c.l.b16 %v5417
        %v5625 = vunpack.c.h.b16 %v5417
        %v5626 = vpack.c.b16 %v5502, %v5498
        %v5627 = vpack.c.b16 %v5503, %v5499
        %v5628 = vpack.c.b16 %v5504, %v5500
        %v5629 = vpack.c.b16 %v5505, %v5501
        %v5630 = vpack.c.b16 %v5510, %v5506
        %v5631 = vpack.c.b16 %v5511, %v5507
        %v5632 = vpack.c.b16 %v5512, %v5508
        %v5633 = vpack.c.b16 %v5513, %v5509
        %v5634 = vpack.c.b16 %v5518, %v5514
        %v5635 = vpack.c.b16 %v5519, %v5515
        %v5636 = vpack.c.b16 %v5520, %v5516
        %v5637 = vpack.c.b16 %v5521, %v5517
        %v5638 = vpack.c.b16 %v5526, %v5522
        %v5639 = vpack.c.b16 %v5527, %v5523
        %v5640 = vpack.c.b16 %v5528, %v5524
        %v5641 = vpack.c.b16 %v5529, %v5525
        %v5642 = vpack.c.b16 %v5534, %v5530
        %v5643 = vpack.c.b16 %v5535, %v5531
        %v5644 = vpack.c.b16 %v5536, %v5532
        %v5645 = vpack.c.b16 %v5537, %v5533
        %v5646 = vpack.c.b16 %v5542, %v5538
        %v5647 = vpack.c.b16 %v5543, %v5539
        %v5648 = vpack.c.b16 %v5544, %v5540
        %v5649 = vpack.c.b16 %v5545, %v5541
        %v5650 = vpack.c.b16 %v5550, %v5546
        %v5651 = vpack.c.b16 %v5551, %v5547
        %v5652 = vpack.c.b16 %v5552, %v5548
        %v5653 = vpack.c.b16 %v5553, %v5549
        %v5654 = vpack.c.b16 %v5558, %v5554
        %v5655 = vpack.c.b16 %v5559, %v5555
        %v5656 = vpack.c.b16 %v5560, %v5556
        %v5657 = vpack.c.b16 %v5561, %v5557
        %v5658 = vpack.c.b16 %v5566, %v5562
        %v5659 = vpack.c.b16 %v5567, %v5563
        %v5660 = vpack.c.b16 %v5568, %v5564
        %v5661 = vpack.c.b16 %v5569, %v5565
        %v5662 = vpack.c.b16 %v5574, %v5570
        %v5663 = vpack.c.b16 %v5575, %v5571
        %v5664 = vpack.c.b16 %v5576, %v5572
        %v5665 = vpack.c.b16 %v5577, %v5573
        %v5666 = vpack.c.b16 %v5582, %v5578
        %v5667 = vpack.c.b16 %v5583, %v5579
        %v5668 = vpack.c.b16 %v5584, %v5580
        %v5669 = vpack.c.b16 %v5585, %v5581
        %v5670 = vpack.c.b16 %v5590, %v5586
        %v5671 = vpack.c.b16 %v5591, %v5587
        %v5672 = vpack.c.b16 %v5592, %v5588
        %v5673 = vpack.c.b16 %v5593, %v5589
        %v5674 = vpack.c.b16 %v5598, %v5594
        %v5675 = vpack.c.b16 %v5599, %v5595
        %v5676 = vpack.c.b16 %v5600, %v5596
        %v5677 = vpack.c.b16 %v5601, %v5597
        %v5678 = vpack.c.b16 %v5606, %v5602
        %v5679 = vpack.c.b16 %v5607, %v5603
        %v5680 = vpack.c.b16 %v5608, %v5604
        %v5681 = vpack.c.b16 %v5609, %v5605
        %v5682 = vpack.c.b16 %v5614, %v5610
        %v5683 = vpack.c.b16 %v5615, %v5611
        %v5684 = vpack.c.b16 %v5616, %v5612
        %v5685 = vpack.c.b16 %v5617, %v5613
        %v5686 = vpack.c.b16 %v5622, %v5618
        %v5687 = vpack.c.b16 %v5623, %v5619
        %v5688 = vpack.c.b16 %v5624, %v5620
        %v5689 = vpack.c.b16 %v5625, %v5621
        %5754 = vmatprep.subr.bf16.mxu0 %v5627
        %5755 = vmatpush1.bf16.msra.mxu0 %v5626
        %5756 = vmatprep.subr.bf16.mxu0 %v5631
        %5757 = vmatpush1.bf16.msra.mxu0 %v5630
        %5758 = vmatprep.subr.bf16.mxu0 %v5635
        %5759 = vmatpush1.bf16.msra.mxu0 %v5634
        %5760 = vmatprep.subr.bf16.mxu0 %v5639
        %5761 = vmatpush1.bf16.msra.mxu0 %v5638
        %5762 = vmatprep.subr.bf16.mxu0 %v5643
        %5763 = vmatpush1.bf16.msra.mxu0 %v5642
        %5764 = vmatprep.subr.bf16.mxu0 %v5647
        %5765 = vmatpush1.bf16.msra.mxu0 %v5646
        %5766 = vmatprep.subr.bf16.mxu0 %v5651
        %5767 = vmatpush1.bf16.msra.mxu0 %v5650
        %5768 = vmatprep.subr.bf16.mxu0 %v5655
        %5769 = vmatpush1.bf16.msra.mxu0 %v5654
        %5770 = vmatprep.subr.bf16.mxu0 %v5659
        %5771 = vmatpush1.bf16.msra.mxu0 %v5658
        %5772 = vmatprep.subr.bf16.mxu0 %v5663
        %5773 = vmatpush1.bf16.msra.mxu0 %v5662
        %5774 = vmatprep.subr.bf16.mxu0 %v5667
        %5775 = vmatpush1.bf16.msra.mxu0 %v5666
        %5776 = vmatprep.subr.bf16.mxu0 %v5671
        %5777 = vmatpush1.bf16.msra.mxu0 %v5670
        %5778 = vmatprep.subr.bf16.mxu0 %v5675
        %5779 = vmatpush1.bf16.msra.mxu0 %v5674
        %5780 = vmatprep.subr.bf16.mxu0 %v5679
        %5781 = vmatpush1.bf16.msra.mxu0 %v5678
        %5782 = vmatprep.subr.bf16.mxu0 %v5683
        %5783 = vmatpush1.bf16.msra.mxu0 %v5682
        %5784 = vmatprep.subr.bf16.mxu0 %v5687
        %5785 = vmatpush1.bf16.msra.mxu0 %v5686
        %5786 = vmatprep.mubr.bf16.mxu0 %v5431
        %5787 = vmatmul.mubr.bf16.gmra.mrb[0].mxu0 %v5424
        %v5788 = vpop.f32.mrb[0].mxu0
        %v5789 = vadd.f32 0.0, %v5788
        %v5790 = vpop.f32.mrb[0].mxu0
        %v5791 = vadd.f32 0.0, %v5790
        %v5792 = vpop.f32.mrb[0].mxu0
        %v5793 = vpop.f32.mrb[0].mxu0
        %5794 = vdwg.mxu0
        %5795 = vmatprep.subr.bf16.mxu0 %v5629
        %5796 = vmatpush1.bf16.msra.mxu0 %v5628
        %5797 = vmatprep.subr.bf16.mxu0 %v5633
        %5798 = vmatpush1.bf16.msra.mxu0 %v5632
        %5799 = vmatprep.subr.bf16.mxu0 %v5637
        %5800 = vmatpush1.bf16.msra.mxu0 %v5636
        %5801 = vmatprep.subr.bf16.mxu0 %v5641
        %5802 = vmatpush1.bf16.msra.mxu0 %v5640
        %5803 = vmatprep.subr.bf16.mxu0 %v5645
        %5804 = vmatpush1.bf16.msra.mxu0 %v5644
        %5805 = vmatprep.subr.bf16.mxu0 %v5649
        %5806 = vmatpush1.bf16.msra.mxu0 %v5648
        %5807 = vmatprep.subr.bf16.mxu0 %v5653
        %5808 = vmatpush1.bf16.msra.mxu0 %v5652
        %5809 = vmatprep.subr.bf16.mxu0 %v5657
        %5810 = vmatpush1.bf16.msra.mxu0 %v5656
        %5811 = vmatprep.subr.bf16.mxu0 %v5661
        %5812 = vmatpush1.bf16.msra.mxu0 %v5660
        %5813 = vmatprep.subr.bf16.mxu0 %v5665
        %5814 = vmatpush1.bf16.msra.mxu0 %v5664
        %5815 = vmatprep.subr.bf16.mxu0 %v5669
        %5816 = vmatpush1.bf16.msra.mxu0 %v5668
        %5817 = vmatprep.subr.bf16.mxu0 %v5673
        %5818 = vmatpush1.bf16.msra.mxu0 %v5672
        %5819 = vmatprep.subr.bf16.mxu0 %v5677
        %5820 = vmatpush1.bf16.msra.mxu0 %v5676
        %5821 = vmatprep.subr.bf16.mxu0 %v5681
        %5822 = vmatpush1.bf16.msra.mxu0 %v5680
        %5823 = vmatprep.subr.bf16.mxu0 %v5685
        %5824 = vmatpush1.bf16.msra.mxu0 %v5684
        %5825 = vmatprep.subr.bf16.mxu0 %v5689
        %5826 = vmatpush1.bf16.msra.mxu0 %v5688
        %5827 = vmatprep.mubr.bf16.mxu0 %v5431
        %5828 = vmatmul.mubr.bf16.gmra.mrb[0].mxu0 %v5424
        %v5829 = vpop.f32.mrb[0].mxu0
        %v5830 = vadd.f32 0.0, %v5829
        %v5831 = vpop.f32.mrb[0].mxu0
        %v5832 = vadd.f32 0.0, %v5831
        %v5833 = vpop.f32.mrb[0].mxu0
        %v5834 = vpop.f32.mrb[0].mxu0
        %5835 = vdwg.mxu0
        %v5836 = vadd.f32 %v5343, %v5789
        %v5837 = vadd.f32 %v5344, %v5791
        %v5838 = vadd.f32 %v5345, %v5830
        %v5839 = vadd.f32 %v5346, %v5832
        %v5840 = vld [vmem:[#allocation3 + $0x10] sm:$0xfc]
        %v5841 = vld [vmem:[#allocation3 + $0x18] sm:$0xfc]
        %v5842 = vld [vmem:[#allocation3 + $0x20] sm:$0x3]
        %v5843 = vld [vmem:[#allocation3 + $0x28] sm:$0x3]
        %v5844 = vpack.c.bf16 %v5842, %v5840
        %v5845 = vpack.c.bf16 %v5843, %v5841
        %s5846 = scalar_lea.vmem [#allocation9], 4096
        %v5847 = vld [vmem:[%s5846] sm:$0xff]
        %v5848 = vld [vmem:[%s5846 + $0x8] sm:$0xff]
        %v5849 = vld [vmem:[%s5846 + $0x10] sm:$0xff]
        %v5850 = vld [vmem:[%s5846 + $0x18] sm:$0xff]
        %v5851 = vld [vmem:[%s5846 + $0x20] sm:$0xff]
        %v5852 = vld [vmem:[%s5846 + $0x28] sm:$0xff]
        %v5853 = vld [vmem:[%s5846 + $0x30] sm:$0xff]
        %v5854 = vld [vmem:[%s5846 + $0x38] sm:$0xff]
        %v5855 = vld [vmem:[%s5846 + $0x40] sm:$0xff]
        %v5856 = vld [vmem:[%s5846 + $0x48] sm:$0xff]
        %v5857 = vld [vmem:[%s5846 + $0x50] sm:$0xff]
        %v5858 = vld [vmem:[%s5846 + $0x58] sm:$0xff]
        %v5859 = vld [vmem:[%s5846 + $0x60] sm:$0xff]
        %v5860 = vld [vmem:[%s5846 + $0x68] sm:$0xff]
        %v5861 = vld [vmem:[%s5846 + $0x70] sm:$0xff]
        %v5862 = vld [vmem:[%s5846 + $0x78] sm:$0xff]
        %v5863 = vld [vmem:[%s5846 + $0x80] sm:$0xff]
        %v5864 = vld [vmem:[%s5846 + $0x88] sm:$0xff]
        %v5865 = vld [vmem:[%s5846 + $0x90] sm:$0xff]
        %v5866 = vld [vmem:[%s5846 + $0x98] sm:$0xff]
        %v5867 = vld [vmem:[%s5846 + $0xa0] sm:$0xff]
        %v5868 = vld [vmem:[%s5846 + $0xa8] sm:$0xff]
        %v5869 = vld [vmem:[%s5846 + $0xb0] sm:$0xff]
        %v5870 = vld [vmem:[%s5846 + $0xb8] sm:$0xff]
        %v5871 = vld [vmem:[%s5846 + $0xc0] sm:$0xff]
        %v5872 = vld [vmem:[%s5846 + $0xc8] sm:$0xff]
        %v5873 = vld [vmem:[%s5846 + $0xd0] sm:$0xff]
        %v5874 = vld [vmem:[%s5846 + $0xd8] sm:$0xff]
        %v5875 = vld [vmem:[%s5846 + $0xe0] sm:$0xff]
        %v5876 = vld [vmem:[%s5846 + $0xe8] sm:$0xff]
        %v5877 = vld [vmem:[%s5846 + $0xf0] sm:$0xff]
        %v5878 = vld [vmem:[%s5846 + $0xf8] sm:$0xff]
        %v5879 = vld [vmem:[%s5846 + $0x100] sm:$0xff]
        %v5880 = vld [vmem:[%s5846 + $0x108] sm:$0xff]
        %v5881 = vld [vmem:[%s5846 + $0x110] sm:$0xff]
        %v5882 = vld [vmem:[%s5846 + $0x118] sm:$0xff]
        %v5883 = vld [vmem:[%s5846 + $0x120] sm:$0xff]
        %v5884 = vld [vmem:[%s5846 + $0x128] sm:$0xff]
        %v5885 = vld [vmem:[%s5846 + $0x130] sm:$0xff]
        %v5886 = vld [vmem:[%s5846 + $0x138] sm:$0xff]
        %v5887 = vld [vmem:[%s5846 + $0x140] sm:$0xff]
        %v5888 = vld [vmem:[%s5846 + $0x148] sm:$0xff]
        %v5889 = vld [vmem:[%s5846 + $0x150] sm:$0xff]
        %v5890 = vld [vmem:[%s5846 + $0x158] sm:$0xff]
        %v5891 = vld [vmem:[%s5846 + $0x160] sm:$0xff]
        %v5892 = vld [vmem:[%s5846 + $0x168] sm:$0xff]
        %v5893 = vld [vmem:[%s5846 + $0x170] sm:$0xff]
        %v5894 = vld [vmem:[%s5846 + $0x178] sm:$0xff]
        %v5895 = vld [vmem:[%s5846 + $0x180] sm:$0xff]
        %v5896 = vld [vmem:[%s5846 + $0x188] sm:$0xff]
        %v5897 = vld [vmem:[%s5846 + $0x190] sm:$0xff]
        %v5898 = vld [vmem:[%s5846 + $0x198] sm:$0xff]
        %v5899 = vld [vmem:[%s5846 + $0x1a0] sm:$0xff]
        %v5900 = vld [vmem:[%s5846 + $0x1a8] sm:$0xff]
        %v5901 = vld [vmem:[%s5846 + $0x1b0] sm:$0xff]
        %v5902 = vld [vmem:[%s5846 + $0x1b8] sm:$0xff]
        %v5903 = vld [vmem:[%s5846 + $0x1c0] sm:$0xff]
        %v5904 = vld [vmem:[%s5846 + $0x1c8] sm:$0xff]
        %v5905 = vld [vmem:[%s5846 + $0x1d0] sm:$0xff]
        %v5906 = vld [vmem:[%s5846 + $0x1d8] sm:$0xff]
        %v5907 = vld [vmem:[%s5846 + $0x1e0] sm:$0xff]
        %v5908 = vld [vmem:[%s5846 + $0x1e8] sm:$0xff]
        %v5909 = vld [vmem:[%s5846 + $0x1f0] sm:$0xff]
        %v5910 = vld [vmem:[%s5846 + $0x1f8] sm:$0xff]
        %v5913 = vrot.slane %v5844, 1
        %v5914 = vrot.slane %v5845, 1
        %v5981 = vunpack.c.l.b16 %v5847
        %v5982 = vunpack.c.h.b16 %v5847
        %v5983 = vunpack.c.l.b16 %v5848
        %v5984 = vunpack.c.h.b16 %v5848
        %v5985 = vunpack.c.l.b16 %v5849
        %v5986 = vunpack.c.h.b16 %v5849
        %v5987 = vunpack.c.l.b16 %v5850
        %v5988 = vunpack.c.h.b16 %v5850
        %v5989 = vunpack.c.l.b16 %v5851
        %v5990 = vunpack.c.h.b16 %v5851
        %v5991 = vunpack.c.l.b16 %v5852
        %v5992 = vunpack.c.h.b16 %v5852
        %v5993 = vunpack.c.l.b16 %v5853
        %v5994 = vunpack.c.h.b16 %v5853
        %v5995 = vunpack.c.l.b16 %v5854
        %v5996 = vunpack.c.h.b16 %v5854
        %v5997 = vunpack.c.l.b16 %v5855
        %v5998 = vunpack.c.h.b16 %v5855
        %v5999 = vunpack.c.l.b16 %v5856
        %v6000 = vunpack.c.h.b16 %v5856
        %v6001 = vunpack.c.l.b16 %v5857
        %v6002 = vunpack.c.h.b16 %v5857
        %v6003 = vunpack.c.l.b16 %v5858
        %v6004 = vunpack.c.h.b16 %v5858
        %v6005 = vunpack.c.l.b16 %v5859
        %v6006 = vunpack.c.h.b16 %v5859
        %v6007 = vunpack.c.l.b16 %v5860
        %v6008 = vunpack.c.h.b16 %v5860
        %v6009 = vunpack.c.l.b16 %v5861
        %v6010 = vunpack.c.h.b16 %v5861
        %v6011 = vunpack.c.l.b16 %v5862
        %v6012 = vunpack.c.h.b16 %v5862
        %v6013 = vunpack.c.l.b16 %v5863
        %v6014 = vunpack.c.h.b16 %v5863
        %v6015 = vunpack.c.l.b16 %v5864
        %v6016 = vunpack.c.h.b16 %v5864
        %v6017 = vunpack.c.l.b16 %v5865
        %v6018 = vunpack.c.h.b16 %v5865
        %v6019 = vunpack.c.l.b16 %v5866
        %v6020 = vunpack.c.h.b16 %v5866
        %v6021 = vunpack.c.l.b16 %v5867
        %v6022 = vunpack.c.h.b16 %v5867
        %v6023 = vunpack.c.l.b16 %v5868
        %v6024 = vunpack.c.h.b16 %v5868
        %v6025 = vunpack.c.l.b16 %v5869
        %v6026 = vunpack.c.h.b16 %v5869
        %v6027 = vunpack.c.l.b16 %v5870
        %v6028 = vunpack.c.h.b16 %v5870
        %v6029 = vunpack.c.l.b16 %v5871
        %v6030 = vunpack.c.h.b16 %v5871
        %v6031 = vunpack.c.l.b16 %v5872
        %v6032 = vunpack.c.h.b16 %v5872
        %v6033 = vunpack.c.l.b16 %v5873
        %v6034 = vunpack.c.h.b16 %v5873
        %v6035 = vunpack.c.l.b16 %v5874
        %v6036 = vunpack.c.h.b16 %v5874
        %v6037 = vunpack.c.l.b16 %v5875
        %v6038 = vunpack.c.h.b16 %v5875
        %v6039 = vunpack.c.l.b16 %v5876
        %v6040 = vunpack.c.h.b16 %v5876
        %v6041 = vunpack.c.l.b16 %v5877
        %v6042 = vunpack.c.h.b16 %v5877
        %v6043 = vunpack.c.l.b16 %v5878
        %v6044 = vunpack.c.h.b16 %v5878
        %v6045 = vunpack.c.l.b16 %v5879
        %v6046 = vunpack.c.h.b16 %v5879
        %v6047 = vunpack.c.l.b16 %v5880
        %v6048 = vunpack.c.h.b16 %v5880
        %v6049 = vunpack.c.l.b16 %v5881
        %v6050 = vunpack.c.h.b16 %v5881
        %v6051 = vunpack.c.l.b16 %v5882
        %v6052 = vunpack.c.h.b16 %v5882
        %v6053 = vunpack.c.l.b16 %v5883
        %v6054 = vunpack.c.h.b16 %v5883
        %v6055 = vunpack.c.l.b16 %v5884
        %v6056 = vunpack.c.h.b16 %v5884
        %v6057 = vunpack.c.l.b16 %v5885
        %v6058 = vunpack.c.h.b16 %v5885
        %v6059 = vunpack.c.l.b16 %v5886
        %v6060 = vunpack.c.h.b16 %v5886
        %v6061 = vunpack.c.l.b16 %v5887
        %v6062 = vunpack.c.h.b16 %v5887
        %v6063 = vunpack.c.l.b16 %v5888
        %v6064 = vunpack.c.h.b16 %v5888
        %v6065 = vunpack.c.l.b16 %v5889
        %v6066 = vunpack.c.h.b16 %v5889
        %v6067 = vunpack.c.l.b16 %v5890
        %v6068 = vunpack.c.h.b16 %v5890
        %v6069 = vunpack.c.l.b16 %v5891
        %v6070 = vunpack.c.h.b16 %v5891
        %v6071 = vunpack.c.l.b16 %v5892
        %v6072 = vunpack.c.h.b16 %v5892
        %v6073 = vunpack.c.l.b16 %v5893
        %v6074 = vunpack.c.h.b16 %v5893
        %v6075 = vunpack.c.l.b16 %v5894
        %v6076 = vunpack.c.h.b16 %v5894
        %v6077 = vunpack.c.l.b16 %v5895
        %v6078 = vunpack.c.h.b16 %v5895
        %v6079 = vunpack.c.l.b16 %v5896
        %v6080 = vunpack.c.h.b16 %v5896
        %v6081 = vunpack.c.l.b16 %v5897
        %v6082 = vunpack.c.h.b16 %v5897
        %v6083 = vunpack.c.l.b16 %v5898
        %v6084 = vunpack.c.h.b16 %v5898
        %v6085 = vunpack.c.l.b16 %v5899
        %v6086 = vunpack.c.h.b16 %v5899
        %v6087 = vunpack.c.l.b16 %v5900
        %v6088 = vunpack.c.h.b16 %v5900
        %v6089 = vunpack.c.l.b16 %v5901
        %v6090 = vunpack.c.h.b16 %v5901
        %v6091 = vunpack.c.l.b16 %v5902
        %v6092 = vunpack.c.h.b16 %v5902
        %v6093 = vunpack.c.l.b16 %v5903
        %v6094 = vunpack.c.h.b16 %v5903
        %v6095 = vunpack.c.l.b16 %v5904
        %v6096 = vunpack.c.h.b16 %v5904
        %v6097 = vunpack.c.l.b16 %v5905
        %v6098 = vunpack.c.h.b16 %v5905
        %v6099 = vunpack.c.l.b16 %v5906
        %v6100 = vunpack.c.h.b16 %v5906
        %v6101 = vunpack.c.l.b16 %v5907
        %v6102 = vunpack.c.h.b16 %v5907
        %v6103 = vunpack.c.l.b16 %v5908
        %v6104 = vunpack.c.h.b16 %v5908
        %v6105 = vunpack.c.l.b16 %v5909
        %v6106 = vunpack.c.h.b16 %v5909
        %v6107 = vunpack.c.l.b16 %v5910
        %v6108 = vunpack.c.h.b16 %v5910
        %v6109 = vpack.c.b16 %v5985, %v5981
        %v6110 = vpack.c.b16 %v5986, %v5982
        %v6111 = vpack.c.b16 %v5987, %v5983
        %v6112 = vpack.c.b16 %v5988, %v5984
        %v6113 = vpack.c.b16 %v5993, %v5989
        %v6114 = vpack.c.b16 %v5994, %v5990
        %v6115 = vpack.c.b16 %v5995, %v5991
        %v6116 = vpack.c.b16 %v5996, %v5992
        %v6117 = vpack.c.b16 %v6001, %v5997
        %v6118 = vpack.c.b16 %v6002, %v5998
        %v6119 = vpack.c.b16 %v6003, %v5999
        %v6120 = vpack.c.b16 %v6004, %v6000
        %v6121 = vpack.c.b16 %v6009, %v6005
        %v6122 = vpack.c.b16 %v6010, %v6006
        %v6123 = vpack.c.b16 %v6011, %v6007
        %v6124 = vpack.c.b16 %v6012, %v6008
        %v6125 = vpack.c.b16 %v6017, %v6013
        %v6126 = vpack.c.b16 %v6018, %v6014
        %v6127 = vpack.c.b16 %v6019, %v6015
        %v6128 = vpack.c.b16 %v6020, %v6016
        %v6129 = vpack.c.b16 %v6025, %v6021
        %v6130 = vpack.c.b16 %v6026, %v6022
        %v6131 = vpack.c.b16 %v6027, %v6023
        %v6132 = vpack.c.b16 %v6028, %v6024
        %v6133 = vpack.c.b16 %v6033, %v6029
        %v6134 = vpack.c.b16 %v6034, %v6030
        %v6135 = vpack.c.b16 %v6035, %v6031
        %v6136 = vpack.c.b16 %v6036, %v6032
        %v6137 = vpack.c.b16 %v6041, %v6037
        %v6138 = vpack.c.b16 %v6042, %v6038
        %v6139 = vpack.c.b16 %v6043, %v6039
        %v6140 = vpack.c.b16 %v6044, %v6040
        %v6141 = vpack.c.b16 %v6049, %v6045
        %v6142 = vpack.c.b16 %v6050, %v6046
        %v6143 = vpack.c.b16 %v6051, %v6047
        %v6144 = vpack.c.b16 %v6052, %v6048
        %v6145 = vpack.c.b16 %v6057, %v6053
        %v6146 = vpack.c.b16 %v6058, %v6054
        %v6147 = vpack.c.b16 %v6059, %v6055
        %v6148 = vpack.c.b16 %v6060, %v6056
        %v6149 = vpack.c.b16 %v6065, %v6061
        %v6150 = vpack.c.b16 %v6066, %v6062
        %v6151 = vpack.c.b16 %v6067, %v6063
        %v6152 = vpack.c.b16 %v6068, %v6064
        %v6153 = vpack.c.b16 %v6073, %v6069
        %v6154 = vpack.c.b16 %v6074, %v6070
        %v6155 = vpack.c.b16 %v6075, %v6071
        %v6156 = vpack.c.b16 %v6076, %v6072
        %v6157 = vpack.c.b16 %v6081, %v6077
        %v6158 = vpack.c.b16 %v6082, %v6078
        %v6159 = vpack.c.b16 %v6083, %v6079
        %v6160 = vpack.c.b16 %v6084, %v6080
        %v6161 = vpack.c.b16 %v6089, %v6085
        %v6162 = vpack.c.b16 %v6090, %v6086
        %v6163 = vpack.c.b16 %v6091, %v6087
        %v6164 = vpack.c.b16 %v6092, %v6088
        %v6165 = vpack.c.b16 %v6097, %v6093
        %v6166 = vpack.c.b16 %v6098, %v6094
        %v6167 = vpack.c.b16 %v6099, %v6095
        %v6168 = vpack.c.b16 %v6100, %v6096
        %v6169 = vpack.c.b16 %v6105, %v6101
        %v6170 = vpack.c.b16 %v6106, %v6102
        %v6171 = vpack.c.b16 %v6107, %v6103
        %v6172 = vpack.c.b16 %v6108, %v6104
        %6237 = vmatprep.subr.bf16.mxu0 %v6110
        %6238 = vmatpush1.bf16.msra.mxu0 %v6109
        %6239 = vmatprep.subr.bf16.mxu0 %v6114
        %6240 = vmatpush1.bf16.msra.mxu0 %v6113
        %6241 = vmatprep.subr.bf16.mxu0 %v6118
        %6242 = vmatpush1.bf16.msra.mxu0 %v6117
        %6243 = vmatprep.subr.bf16.mxu0 %v6122
        %6244 = vmatpush1.bf16.msra.mxu0 %v6121
        %6245 = vmatprep.subr.bf16.mxu0 %v6126
        %6246 = vmatpush1.bf16.msra.mxu0 %v6125
        %6247 = vmatprep.subr.bf16.mxu0 %v6130
        %6248 = vmatpush1.bf16.msra.mxu0 %v6129
        %6249 = vmatprep.subr.bf16.mxu0 %v6134
        %6250 = vmatpush1.bf16.msra.mxu0 %v6133
        %6251 = vmatprep.subr.bf16.mxu0 %v6138
        %6252 = vmatpush1.bf16.msra.mxu0 %v6137
        %6253 = vmatprep.subr.bf16.mxu0 %v6142
        %6254 = vmatpush1.bf16.msra.mxu0 %v6141
        %6255 = vmatprep.subr.bf16.mxu0 %v6146
        %6256 = vmatpush1.bf16.msra.mxu0 %v6145
        %6257 = vmatprep.subr.bf16.mxu0 %v6150
        %6258 = vmatpush1.bf16.msra.mxu0 %v6149
        %6259 = vmatprep.subr.bf16.mxu0 %v6154
        %6260 = vmatpush1.bf16.msra.mxu0 %v6153
        %6261 = vmatprep.subr.bf16.mxu0 %v6158
        %6262 = vmatpush1.bf16.msra.mxu0 %v6157
        %6263 = vmatprep.subr.bf16.mxu0 %v6162
        %6264 = vmatpush1.bf16.msra.mxu0 %v6161
        %6265 = vmatprep.subr.bf16.mxu0 %v6166
        %6266 = vmatpush1.bf16.msra.mxu0 %v6165
        %6267 = vmatprep.subr.bf16.mxu0 %v6170
        %6268 = vmatpush1.bf16.msra.mxu0 %v6169
        %6269 = vmatprep.mubr.bf16.mxu0 %v5914
        %6270 = vmatmul.mubr.bf16.gmra.mrb[0].mxu0 %v5913
        %v6271 = vpop.f32.mrb[0].mxu0
        %v6272 = vadd.f32 0.0, %v6271
        %v6273 = vpop.f32.mrb[0].mxu0
        %v6274 = vadd.f32 0.0, %v6273
        %v6275 = vpop.f32.mrb[0].mxu0
        %v6276 = vpop.f32.mrb[0].mxu0
        %6277 = vdwg.mxu0
        %6278 = vmatprep.subr.bf16.mxu0 %v6112
        %6279 = vmatpush1.bf16.msra.mxu0 %v6111
        %6280 = vmatprep.subr.bf16.mxu0 %v6116
        %6281 = vmatpush1.bf16.msra.mxu0 %v6115
        %6282 = vmatprep.subr.bf16.mxu0 %v6120
        %6283 = vmatpush1.bf16.msra.mxu0 %v6119
        %6284 = vmatprep.subr.bf16.mxu0 %v6124
        %6285 = vmatpush1.bf16.msra.mxu0 %v6123
        %6286 = vmatprep.subr.bf16.mxu0 %v6128
        %6287 = vmatpush1.bf16.msra.mxu0 %v6127
        %6288 = vmatprep.subr.bf16.mxu0 %v6132
        %6289 = vmatpush1.bf16.msra.mxu0 %v6131
        %6290 = vmatprep.subr.bf16.mxu0 %v6136
        %6291 = vmatpush1.bf16.msra.mxu0 %v6135
        %6292 = vmatprep.subr.bf16.mxu0 %v6140
        %6293 = vmatpush1.bf16.msra.mxu0 %v6139
        %6294 = vmatprep.subr.bf16.mxu0 %v6144
        %6295 = vmatpush1.bf16.msra.mxu0 %v6143
        %6296 = vmatprep.subr.bf16.mxu0 %v6148
        %6297 = vmatpush1.bf16.msra.mxu0 %v6147
        %6298 = vmatprep.subr.bf16.mxu0 %v6152
        %6299 = vmatpush1.bf16.msra.mxu0 %v6151
        %6300 = vmatprep.subr.bf16.mxu0 %v6156
        %6301 = vmatpush1.bf16.msra.mxu0 %v6155
        %6302 = vmatprep.subr.bf16.mxu0 %v6160
        %6303 = vmatpush1.bf16.msra.mxu0 %v6159
        %6304 = vmatprep.subr.bf16.mxu0 %v6164
        %6305 = vmatpush1.bf16.msra.mxu0 %v6163
        %6306 = vmatprep.subr.bf16.mxu0 %v6168
        %6307 = vmatpush1.bf16.msra.mxu0 %v6167
        %6308 = vmatprep.subr.bf16.mxu0 %v6172
        %6309 = vmatpush1.bf16.msra.mxu0 %v6171
        %6310 = vmatprep.mubr.bf16.mxu0 %v5914
        %6311 = vmatmul.mubr.bf16.gmra.mrb[0].mxu0 %v5913
        %v6312 = vpop.f32.mrb[0].mxu0
        %v6313 = vadd.f32 0.0, %v6312
        %v6314 = vpop.f32.mrb[0].mxu0
        %v6315 = vadd.f32 0.0, %v6314
        %v6316 = vpop.f32.mrb[0].mxu0
        %v6317 = vpop.f32.mrb[0].mxu0
        %6318 = vdwg.mxu0
        %v6319 = vadd.f32 %v5836, %v6272
        %v6320 = vadd.f32 %v5837, %v6274
        %v6321 = vadd.f32 %v5838, %v6313
        %v6322 = vadd.f32 %v5839, %v6315
        %v6323 = vmax.f32 %v6319, 0.0
        %v6324 = vmax.f32 %v6320, 0.0
        %v6325 = vmax.f32 %v6321, 0.0
        %v6326 = vmax.f32 %v6322, 0.0
        %v6331 = vrot.slane %v6323, 4
        %v6332 = vrot.slane %v6324, 4
        %v6333 = vrot.slane %v6325, 4
        %v6334 = vrot.slane %v6326, 4
        %v6339 = vmax.f32 %v6323, %v6331
        %v6340 = vmax.f32 %v6324, %v6332
        %v6341 = vmax.f32 %v6325, %v6333
        %v6342 = vmax.f32 %v6326, %v6334
        %v6347 = vrot.slane %v6339, 1
        %v6348 = vrot.slane %v6340, 1
        %v6349 = vrot.slane %v6341, 1
        %v6350 = vrot.slane %v6342, 1
        %v6355 = vmax.f32 %v6339, %v6347
        %v6356 = vmax.f32 %v6340, %v6348
        %v6357 = vmax.f32 %v6341, %v6349
        %v6358 = vmax.f32 %v6342, %v6350
        %v6359 = vpack.c.bf16 %v6355, %v6355
        %v6360 = vpack.c.bf16 %v6356, %v6356
        %v6361 = vpack.c.bf16 %v6357, %v6357
        %v6362 = vpack.c.bf16 %v6358, %v6358
        %v6363 = vld [vmem:[%s4] sm:$0xf]
        %v6364 = vld [vmem:[%s4 + $0x4] sm:$0xf]
        %v6365 = vld [vmem:[%s4 + $0x8] sm:$0xf]
        %v6366 = vld [vmem:[%s4 + $0xc] sm:$0xf]
        %v6367 = vld [vmem:[%s4 + $0x10] sm:$0xf]
        %v6368 = vld [vmem:[%s4 + $0x14] sm:$0xf]
        %v6369 = vld [vmem:[%s4 + $0x18] sm:$0xf]
        %v6370 = vld [vmem:[%s4 + $0x1c] sm:$0xf]
        %v6371 = vld [vmem:[%s4 + $0x20] sm:$0xf]
        %v6372 = vld [vmem:[%s4 + $0x24] sm:$0xf]
        %v6373 = vld [vmem:[%s4 + $0x28] sm:$0xf]
        %v6374 = vld [vmem:[%s4 + $0x2c] sm:$0xf]
        %v6375 = vld [vmem:[%s4 + $0x30] sm:$0xf]
        %v6376 = vld [vmem:[%s4 + $0x34] sm:$0xf]
        %v6377 = vld [vmem:[%s4 + $0x38] sm:$0xf]
        %v6378 = vld [vmem:[%s4 + $0x3c] sm:$0xf]
        %v6379 = vld [vmem:[%s4 + $0x40] sm:$0xf]
        %v6380 = vld [vmem:[%s4 + $0x44] sm:$0xf]
        %v6381 = vld [vmem:[%s4 + $0x48] sm:$0xf]
        %v6382 = vld [vmem:[%s4 + $0x4c] sm:$0xf]
        %v6383 = vld [vmem:[%s4 + $0x50] sm:$0xf]
        %v6384 = vld [vmem:[%s4 + $0x54] sm:$0xf]
        %v6385 = vld [vmem:[%s4 + $0x58] sm:$0xf]
        %v6386 = vld [vmem:[%s4 + $0x5c] sm:$0xf]
        %v6387 = vld [vmem:[%s4 + $0x60] sm:$0xf]
        %v6388 = vld [vmem:[%s4 + $0x64] sm:$0xf]
        %v6389 = vld [vmem:[%s4 + $0x68] sm:$0xf]
        %v6390 = vld [vmem:[%s4 + $0x6c] sm:$0xf]
        %v6391 = vld [vmem:[%s4 + $0x70] sm:$0xf]
        %v6392 = vld [vmem:[%s4 + $0x74] sm:$0xf]
        %v6393 = vld [vmem:[%s4 + $0x78] sm:$0xf]
        %v6394 = vld [vmem:[%s4 + $0x7c] sm:$0xf]
        %v6395 = vld [vmem:[%s4 + $0x80] sm:$0xf]
        %v6396 = vld [vmem:[%s4 + $0x84] sm:$0xf]
        %v6397 = vld [vmem:[%s4 + $0x88] sm:$0xf]
        %v6398 = vld [vmem:[%s4 + $0x8c] sm:$0xf]
        %v6399 = vld [vmem:[%s4 + $0x90] sm:$0xf]
        %v6400 = vld [vmem:[%s4 + $0x94] sm:$0xf]
        %v6401 = vld [vmem:[%s4 + $0x98] sm:$0xf]
        %v6402 = vld [vmem:[%s4 + $0x9c] sm:$0xf]
        %v6403 = vld [vmem:[%s4 + $0xa0] sm:$0xf]
        %v6404 = vld [vmem:[%s4 + $0xa4] sm:$0xf]
        %v6405 = vld [vmem:[%s4 + $0xa8] sm:$0xf]
        %v6406 = vld [vmem:[%s4 + $0xac] sm:$0xf]
        %v6407 = vld [vmem:[%s4 + $0xb0] sm:$0xf]
        %v6408 = vld [vmem:[%s4 + $0xb4] sm:$0xf]
        %v6409 = vld [vmem:[%s4 + $0xb8] sm:$0xf]
        %v6410 = vld [vmem:[%s4 + $0xbc] sm:$0xf]
        %v6411 = vld [vmem:[%s4 + $0xc0] sm:$0xf]
        %v6412 = vld [vmem:[%s4 + $0xc4] sm:$0xf]
        %v6413 = vld [vmem:[%s4 + $0xc8] sm:$0xf]
        %v6414 = vld [vmem:[%s4 + $0xcc] sm:$0xf]
        %v6415 = vld [vmem:[%s4 + $0xd0] sm:$0xf]
        %v6416 = vld [vmem:[%s4 + $0xd4] sm:$0xf]
        %v6417 = vld [vmem:[%s4 + $0xd8] sm:$0xf]
        %v6418 = vld [vmem:[%s4 + $0xdc] sm:$0xf]
        %v6419 = vld [vmem:[%s4 + $0xe0] sm:$0xf]
        %v6420 = vld [vmem:[%s4 + $0xe4] sm:$0xf]
        %v6421 = vld [vmem:[%s4 + $0xe8] sm:$0xf]
        %v6422 = vld [vmem:[%s4 + $0xec] sm:$0xf]
        %v6423 = vld [vmem:[%s4 + $0xf0] sm:$0xf]
        %v6424 = vld [vmem:[%s4 + $0xf4] sm:$0xf]
        %v6425 = vld [vmem:[%s4 + $0xf8] sm:$0xf]
        %v6426 = vld [vmem:[%s4 + $0xfc] sm:$0xf]
        %v6491 = vunpack.c.l.b16 %v6363
        %v6492 = vunpack.c.l.b16 %v6364
        %v6493 = vunpack.c.l.b16 %v6365
        %v6494 = vunpack.c.l.b16 %v6366
        %v6495 = vunpack.c.l.b16 %v6367
        %v6496 = vunpack.c.l.b16 %v6368
        %v6497 = vunpack.c.l.b16 %v6369
        %v6498 = vunpack.c.l.b16 %v6370
        %v6499 = vunpack.c.l.b16 %v6371
        %v6500 = vunpack.c.l.b16 %v6372
        %v6501 = vunpack.c.l.b16 %v6373
        %v6502 = vunpack.c.l.b16 %v6374
        %v6503 = vunpack.c.l.b16 %v6375
        %v6504 = vunpack.c.l.b16 %v6376
        %v6505 = vunpack.c.l.b16 %v6377
        %v6506 = vunpack.c.l.b16 %v6378
        %v6507 = vunpack.c.l.b16 %v6379
        %v6508 = vunpack.c.l.b16 %v6380
        %v6509 = vunpack.c.l.b16 %v6381
        %v6510 = vunpack.c.l.b16 %v6382
        %v6511 = vunpack.c.l.b16 %v6383
        %v6512 = vunpack.c.l.b16 %v6384
        %v6513 = vunpack.c.l.b16 %v6385
        %v6514 = vunpack.c.l.b16 %v6386
        %v6515 = vunpack.c.l.b16 %v6387
        %v6516 = vunpack.c.l.b16 %v6388
        %v6517 = vunpack.c.l.b16 %v6389
        %v6518 = vunpack.c.l.b16 %v6390
        %v6519 = vunpack.c.l.b16 %v6391
        %v6520 = vunpack.c.l.b16 %v6392
        %v6521 = vunpack.c.l.b16 %v6393
        %v6522 = vunpack.c.l.b16 %v6394
        %v6523 = vunpack.c.l.b16 %v6395
        %v6524 = vunpack.c.l.b16 %v6396
        %v6525 = vunpack.c.l.b16 %v6397
        %v6526 = vunpack.c.l.b16 %v6398
        %v6527 = vunpack.c.l.b16 %v6399
        %v6528 = vunpack.c.l.b16 %v6400
        %v6529 = vunpack.c.l.b16 %v6401
        %v6530 = vunpack.c.l.b16 %v6402
        %v6531 = vunpack.c.l.b16 %v6403
        %v6532 = vunpack.c.l.b16 %v6404
        %v6533 = vunpack.c.l.b16 %v6405
        %v6534 = vunpack.c.l.b16 %v6406
        %v6535 = vunpack.c.l.b16 %v6407
        %v6536 = vunpack.c.l.b16 %v6408
        %v6537 = vunpack.c.l.b16 %v6409
        %v6538 = vunpack.c.l.b16 %v6410
        %v6539 = vunpack.c.l.b16 %v6411
        %v6540 = vunpack.c.l.b16 %v6412
        %v6541 = vunpack.c.l.b16 %v6413
        %v6542 = vunpack.c.l.b16 %v6414
        %v6543 = vunpack.c.l.b16 %v6415
        %v6544 = vunpack.c.l.b16 %v6416
        %v6545 = vunpack.c.l.b16 %v6417
        %v6546 = vunpack.c.l.b16 %v6418
        %v6547 = vunpack.c.l.b16 %v6419
        %v6548 = vunpack.c.l.b16 %v6420
        %v6549 = vunpack.c.l.b16 %v6421
        %v6550 = vunpack.c.l.b16 %v6422
        %v6551 = vunpack.c.l.b16 %v6423
        %v6552 = vunpack.c.l.b16 %v6424
        %v6553 = vunpack.c.l.b16 %v6425
        %v6554 = vunpack.c.l.b16 %v6426
        %v6555 = vpack.c.b16 %v6492, %v6491
        %v6556 = vpack.c.b16 %v6494, %v6493
        %v6557 = vpack.c.b16 %v6496, %v6495
        %v6558 = vpack.c.b16 %v6498, %v6497
        %v6559 = vpack.c.b16 %v6500, %v6499
        %v6560 = vpack.c.b16 %v6502, %v6501
        %v6561 = vpack.c.b16 %v6504, %v6503
        %v6562 = vpack.c.b16 %v6506, %v6505
        %v6563 = vpack.c.b16 %v6508, %v6507
        %v6564 = vpack.c.b16 %v6510, %v6509
        %v6565 = vpack.c.b16 %v6512, %v6511
        %v6566 = vpack.c.b16 %v6514, %v6513
        %v6567 = vpack.c.b16 %v6516, %v6515
        %v6568 = vpack.c.b16 %v6518, %v6517
        %v6569 = vpack.c.b16 %v6520, %v6519
        %v6570 = vpack.c.b16 %v6522, %v6521
        %v6571 = vpack.c.b16 %v6524, %v6523
        %v6572 = vpack.c.b16 %v6526, %v6525
        %v6573 = vpack.c.b16 %v6528, %v6527
        %v6574 = vpack.c.b16 %v6530, %v6529
        %v6575 = vpack.c.b16 %v6532, %v6531
        %v6576 = vpack.c.b16 %v6534, %v6533
        %v6577 = vpack.c.b16 %v6536, %v6535
        %v6578 = vpack.c.b16 %v6538, %v6537
        %v6579 = vpack.c.b16 %v6540, %v6539
        %v6580 = vpack.c.b16 %v6542, %v6541
        %v6581 = vpack.c.b16 %v6544, %v6543
        %v6582 = vpack.c.b16 %v6546, %v6545
        %v6583 = vpack.c.b16 %v6548, %v6547
        %v6584 = vpack.c.b16 %v6550, %v6549
        %v6585 = vpack.c.b16 %v6552, %v6551
        %v6586 = vpack.c.b16 %v6554, %v6553
        %6619 = vmatprep.subr.bf16.mxu0 0
        %6620 = vmatpush1.bf16.msra.mxu0 %v6555
        %6621 = vmatprep.subr.bf16.mxu0 0
        %6622 = vmatpush1.bf16.msra.mxu0 %v6556
        %6623 = vmatprep.subr.bf16.mxu0 0
        %6624 = vmatpush1.bf16.msra.mxu0 %v6557
        %6625 = vmatprep.subr.bf16.mxu0 0
        %6626 = vmatpush1.bf16.msra.mxu0 %v6558
        %6627 = vmatprep.subr.bf16.mxu0 0
        %6628 = vmatpush1.bf16.msra.mxu0 %v6559
        %6629 = vmatprep.subr.bf16.mxu0 0
        %6630 = vmatpush1.bf16.msra.mxu0 %v6560
        %6631 = vmatprep.subr.bf16.mxu0 0
        %6632 = vmatpush1.bf16.msra.mxu0 %v6561
        %6633 = vmatprep.subr.bf16.mxu0 0
        %6634 = vmatpush1.bf16.msra.mxu0 %v6562
        %6635 = vmatprep.subr.bf16.mxu0 0
        %6636 = vmatpush1.bf16.msra.mxu0 %v6563
        %6637 = vmatprep.subr.bf16.mxu0 0
        %6638 = vmatpush1.bf16.msra.mxu0 %v6564
        %6639 = vmatprep.subr.bf16.mxu0 0
        %6640 = vmatpush1.bf16.msra.mxu0 %v6565
        %6641 = vmatprep.subr.bf16.mxu0 0
        %6642 = vmatpush1.bf16.msra.mxu0 %v6566
        %6643 = vmatprep.subr.bf16.mxu0 0
        %6644 = vmatpush1.bf16.msra.mxu0 %v6567
        %6645 = vmatprep.subr.bf16.mxu0 0
        %6646 = vmatpush1.bf16.msra.mxu0 %v6568
        %6647 = vmatprep.subr.bf16.mxu0 0
        %6648 = vmatpush1.bf16.msra.mxu0 %v6569
        %6649 = vmatprep.subr.bf16.mxu0 0
        %6650 = vmatpush1.bf16.msra.mxu0 %v6570
        %6651 = vmatprep.mubr.bf16.mxu0 %v6360
        %6652 = vmatmul.mubr.bf16.gmra.mrb[0].mxu0 %v6359
        %v6653 = vpop.f32.mrb[0].mxu0
        %v6654 = vadd.f32 0.0, %v6653
        %v6655 = vpop.f32.mrb[0].mxu0
        %v6656 = vpop.f32.mrb[0].mxu0
        %v6657 = vpop.f32.mrb[0].mxu0
        %6658 = vdwg.mxu0
        %6659 = vmatprep.subr.bf16.mxu0 0
        %6660 = vmatpush1.bf16.msra.mxu0 %v6571
        %6661 = vmatprep.subr.bf16.mxu0 0
        %6662 = vmatpush1.bf16.msra.mxu0 %v6572
        %6663 = vmatprep.subr.bf16.mxu0 0
        %6664 = vmatpush1.bf16.msra.mxu0 %v6573
        %6665 = vmatprep.subr.bf16.mxu0 0
        %6666 = vmatpush1.bf16.msra.mxu0 %v6574
        %6667 = vmatprep.subr.bf16.mxu0 0
        %6668 = vmatpush1.bf16.msra.mxu0 %v6575
        %6669 = vmatprep.subr.bf16.mxu0 0
        %6670 = vmatpush1.bf16.msra.mxu0 %v6576
        %6671 = vmatprep.subr.bf16.mxu0 0
        %6672 = vmatpush1.bf16.msra.mxu0 %v6577
        %6673 = vmatprep.subr.bf16.mxu0 0
        %6674 = vmatpush1.bf16.msra.mxu0 %v6578
        %6675 = vmatprep.subr.bf16.mxu0 0
        %6676 = vmatpush1.bf16.msra.mxu0 %v6579
        %6677 = vmatprep.subr.bf16.mxu0 0
        %6678 = vmatpush1.bf16.msra.mxu0 %v6580
        %6679 = vmatprep.subr.bf16.mxu0 0
        %6680 = vmatpush1.bf16.msra.mxu0 %v6581
        %6681 = vmatprep.subr.bf16.mxu0 0
        %6682 = vmatpush1.bf16.msra.mxu0 %v6582
        %6683 = vmatprep.subr.bf16.mxu0 0
        %6684 = vmatpush1.bf16.msra.mxu0 %v6583
        %6685 = vmatprep.subr.bf16.mxu0 0
        %6686 = vmatpush1.bf16.msra.mxu0 %v6584
        %6687 = vmatprep.subr.bf16.mxu0 0
        %6688 = vmatpush1.bf16.msra.mxu0 %v6585
        %6689 = vmatprep.subr.bf16.mxu0 0
        %6690 = vmatpush1.bf16.msra.mxu0 %v6586
        %6691 = vmatprep.mubr.bf16.mxu0 %v6362
        %6692 = vmatmul.mubr.bf16.gmra.mrb[0].mxu0 %v6361
        %v6693 = vpop.f32.mrb[0].mxu0
        %v6694 = vadd.f32 %v6654, %v6693
        %v6695 = vpop.f32.mrb[0].mxu0
        %v6696 = vpop.f32.mrb[0].mxu0
        %v6697 = vpop.f32.mrb[0].mxu0
        %6698 = vdwg.mxu0
        %vm6699 = vcmask 73728
        %6700 = vst.msk [vmem:[%s260] sm:$0x1] %vm6699, %v6694
        %s6701 = sand.u32 %s139, 1
        %s6702 = scalar_lea.sflag [#allocation6], %s6701
        %s6703 = sand.u32 %s139, 1
        %s6704 = scalar_lea.vmem [#allocation10], %s6703
        // Predicated region
        $region53: #{vgg_forward.1} parent=39 // pred_check
          %p6705 = pneg %p149
        $region54: #{vgg_forward.1} parent=39 // pred_check_branch
          %6707 = sbr.rel (%p6705) target = $region56
        $region55: #{vgg_forward.1} parent=39 // pred_region
          %s6709 = ssub.s32 16, 16
          %6710 = vsyncadd %s6702, %s6709
          %s6711 = smul.addr %s21, 16
          %s6712 = scalar_lea.hbm %s5, %s6711
          %s6714 = sshll.u32 %s6704, 4
          %s6715 = int_to_ptr.vmem [resolvable:$true] %s6714
          %6717 = dma.vmem_to_hbm [thread:$0]  %s6715, 16, %s6712, %s6702
        $region56: #{vgg_forward.1} parent=39 // pred_fallthru
          _
      $region40: #{vgg_forward.1} parent=5 // pred_fallthru
        _
      %p6718 = scmp.le.s32.totalorder 2, %s16
      // Predicated region
      $region57: #{vgg_forward.1} parent=5 // pred_check
        %p6719 = pneg %p6718
      $region58: #{vgg_forward.1} parent=5 // pred_check_branch
        %6721 = sbr.rel (%p6719) target = $region60
      $region59: #{vgg_forward.1} parent=5 // pred_region
        %s6722 = ssub.s32 %s16, 2
        // Predicated region
        $region61: #{vgg_forward.1} parent=59 // pred_check
          %p6723 = pneg %p155
        $region62: #{vgg_forward.1} parent=59 // pred_check_branch
          %6725 = sbr.rel (%p6723) target = $region64
        $region63: #{vgg_forward.1} parent=59 // pred_region
          %s6726 = sand.u32 %s140, 1
          %s6727 = scalar_lea.sflag [#allocation6], %s6726
          %s6728 = sand.u32 %s140, 1
          %s6729 = scalar_lea.vmem [#allocation10], %s6728
          %6730 = dma.done %s6727, 16
        $region64: #{vgg_forward.1} parent=59 // pred_fallthru
          _
      $region60: #{vgg_forward.1} parent=5 // pred_fallthru
        _
    $region6: #{vgg_forward.1} parent=1 // loop_footer
      %s20 = sadd.s32 1, %s16
    $region7: #{vgg_forward.1} parent=1 // loop_footer_branch
      %15 = sbr.rel target = $region3
    $region8: #{vgg_forward.1} parent=1 // loop_exit
      _
    %6731 = vsyncpa [#allocation5], 1
    %s6732 = scalar_lea.sflag [#allocation5], 1
    %6733 = vsyncpa %s6732, 1
    %6734 = vsyncpa [#allocation8], 1
    %6735 = vsyncpa [#allocation6], 1
    %s6736 = scalar_lea.sflag [#allocation6], 1
    %6737 = vsyncpa %s6736, 1

</llo_original>
